<compile_context>
chip_gen: v6e
topology: v6e:2x2x1
jax: 0.10.0
libtpu: 0.0.40
codegen_flags: <defaults>
</compile_context>

<pallas_src>
import jax
import jax.numpy as jnp
from jax.experimental import pallas as pl
from jax.experimental.pallas import tpu as pltpu

IN_FEATURES = 28 * 28  # 784


def _vae_elbo_kernel(x_ref, u_ref,
                     w1_ref, b1_ref,
                     wmv_ref, bmv_ref,
                     wd1_ref, bd1_ref,
                     wd2_ref, bd2_ref,
                     out_ref):
    z_dim = u_ref.shape[-1]
    x = x_ref[...]                                                 # [TB, 784] f32

    # ---- Encoder: Linear -> tanh (bf16 matmul inputs, f32 accumulate) ----
    h = jnp.tanh(
        jnp.dot(x.astype(jnp.bfloat16), w1_ref[...],
                preferred_element_type=jnp.float32) + b1_ref[...])        # [TB, H]

    # Fused mu / logvar heads: one [H, 2Z] matmul, then static lane slices.
    mv = (jnp.dot(h.astype(jnp.bfloat16), wmv_ref[...],
                  preferred_element_type=jnp.float32) + bmv_ref[...])      # [TB, 2Z]
    mean = mv[:, :z_dim]                                           # [TB, Z]
    logvar = mv[:, z_dim:]                                         # [TB, Z]

    std = jnp.exp(0.5 * logvar)        # == sqrt(exp(logvar)), single EUP op
    var = std * std                    # reused in KL (no extra exp / sqrt)

    # ---- Reparameterization (uniform noise; matches torch.rand_like in ref) ----
    z = mean + u_ref[...] * std                                    # [TB, Z]

    # ---- Decoder: Linear -> tanh -> Linear (Bernoulli logits) ----
    hd = jnp.tanh(
        jnp.dot(z.astype(jnp.bfloat16), wd1_ref[...],
                preferred_element_type=jnp.float32) + bd1_ref[...])        # [TB, H]
    logits = (jnp.dot(hd.astype(jnp.bfloat16), wd2_ref[...],
                      preferred_element_type=jnp.float32) + bd2_ref[...])  # [TB, 784]

    # ---- BCE(sigmoid(logits), x) in stable logits form ----
    # bce = max(l,0) - l*x + log1p(exp(-|l|))
    # TODO(synk): torch's BCELoss clamps log at -100; the logits form differs
    # only in pathological saturation.
    bce = (jnp.maximum(logits, 0.0) - logits * x
           + jnp.log1p(jnp.exp(-jnp.abs(logits))))                 # [TB, 784]
    recon = jnp.sum(bce, axis=-1)                                  # [TB]

    # ---- KL regularization, summed over z ----
    kl = 0.5 * jnp.sum(var + mean * mean - logvar - 1.0, axis=-1)  # [TB]

    # Lane-dense store: one (1, TB) row per grid step (unmasked vst).
    out_ref[...] = (recon + kl)[None, :]


def vae_negative_elbo(x, u, params, *, batch_tile=128):
    """Scalar average negative ELBO for the batch.

    x: [B, 784] float32 in [0, 1]
    u: [B, Z]   float32 uniform noise (stand-in for torch.rand_like)
    params: dict from init_params (matmul weights bf16, biases f32)
    """
    B, F = x.shape
    Z = u.shape[1]
    H = params["w1"].shape[1]
    assert F == IN_FEATURES
    assert B % batch_tile == 0
    num_tiles = B // batch_tile

    per_example = pl.pallas_call(
        _vae_elbo_kernel,
        out_shape=jax.ShapeDtypeStruct((1, B), jnp.float32),
        grid_spec=pltpu.PrefetchScalarGridSpec(
            num_scalar_prefetch=0,
            grid=(num_tiles,),
            in_specs=[
                pl.BlockSpec((batch_tile, F), lambda i: (i, 0)),    # x
                pl.BlockSpec((batch_tile, Z), lambda i: (i, 0)),    # u
                pl.BlockSpec((F, H), lambda i: (0, 0)),             # w1 (bf16)
                pl.BlockSpec((1, H), lambda i: (0, 0)),             # b1
                pl.BlockSpec((H, 2 * Z), lambda i: (0, 0)),         # [wmu | wvar]
                pl.BlockSpec((1, 2 * Z), lambda i: (0, 0)),         # [bmu | bvar]
                pl.BlockSpec((Z, H), lambda i: (0, 0)),             # wd1
                pl.BlockSpec((1, H), lambda i: (0, 0)),             # bd1
                pl.BlockSpec((H, F), lambda i: (0, 0)),             # wd2
                pl.BlockSpec((1, F), lambda i: (0, 0)),             # bd2
            ],
            out_specs=pl.BlockSpec((1, batch_tile), lambda i: (0, i)),
        ),
        compiler_params=pltpu.CompilerParams(
            dimension_semantics=("parallel",)),
    )(
        x, u,
        params["w1"], params["b1"],
        params["wmv"], params["bmv"],
        params["wd1"], params["bd1"],
        params["wd2"], params["bd2"],
    )
    # recon.mean() + kl.mean() == (recon + kl).mean()
    return jnp.mean(per_example)


def init_params(key, hidden_dim, z_dim):
    """Deterministic synthetic init (small normal weights in bf16, zero f32 biases)."""
    ks = jax.random.split(key, 4)
    scale = 0.05

    def w(k, shape):
        return (scale * jax.random.normal(k, shape, jnp.float32)).astype(jnp.bfloat16)

    return {
        "w1":  w(ks[0], (IN_FEATURES, hidden_dim)),
        "b1":  jnp.zeros((1, hidden_dim), jnp.float32),
        "wmv": w(ks[1], (hidden_dim, 2 * z_dim)),      # fused [wmu | wvar]
        "bmv": jnp.zeros((1, 2 * z_dim), jnp.float32),  # fused [bmu | bvar]
        "wd1": w(ks[2], (z_dim, hidden_dim)),
        "bd1": jnp.zeros((1, hidden_dim), jnp.float32),
        "wd2": w(ks[3], (hidden_dim, IN_FEATURES)),
        "bd2": jnp.zeros((1, IN_FEATURES), jnp.float32),
    }


if __name__ == "__main__":
    # Fixed 784 input features per the module; reduced hidden / z dims and a
    # modest batch that still exercises the grid (2 tiles of 128 rows).
    B, H, Z = 256, 256, 32
    TB = 128

    key = jax.random.PRNGKey(0)
    k_x, k_u, k_p = jax.random.split(key, 3)

    x = jax.random.uniform(k_x, (B, IN_FEATURES), jnp.float32)  # pixels in [0, 1]
    u = jax.random.uniform(k_u, (B, Z), jnp.float32)            # torch.rand_like noise
    params = init_params(k_p, H, Z)

    neg_elbo = vae_negative_elbo(x, u, params, batch_tile=TB)
    neg_elbo = jax.block_until_ready(neg_elbo)

    assert neg_elbo.shape == ()
    assert jnp.isfinite(neg_elbo)
    print("KERNEL_OK")
</pallas_src>

<mosaic_0001>
module attributes {stable_mosaic.version = 11 : i64} {
  func.func @_vae_elbo_kernel(%arg0: i32, %arg1: memref<128x784xf32, #tpu.memory_space<vmem>>, %arg2: memref<128x32xf32, #tpu.memory_space<vmem>>, %arg3: memref<784x256xbf16, #tpu.memory_space<vmem>>, %arg4: memref<1x256xf32, #tpu.memory_space<vmem>>, %arg5: memref<256x64xbf16, #tpu.memory_space<vmem>>, %arg6: memref<1x64xf32, #tpu.memory_space<vmem>>, %arg7: memref<32x256xbf16, #tpu.memory_space<vmem>>, %arg8: memref<1x256xf32, #tpu.memory_space<vmem>>, %arg9: memref<256x784xbf16, #tpu.memory_space<vmem>>, %arg10: memref<1x784xf32, #tpu.memory_space<vmem>>, %arg11: memref<1x128xf32, #tpu.memory_space<vmem>>) attributes {dimension_semantics = [#tpu.dimension_semantics<parallel>], iteration_bounds = array<i64: 2>, scalar_prefetch = 0 : i64, scratch_operands = 0 : i64, tpu.core_type = #tpu.core_type<tc>, window_params = [{transform_indices = @transform_0, window_bounds = array<i64: 128, 784>}, {transform_indices = @transform_1, window_bounds = array<i64: 128, 32>}, {pipeline_mode = #tpu.pipeline_mode<synchronous>, transform_indices = @transform_2, window_bounds = array<i64: 784, 256>}, {pipeline_mode = #tpu.pipeline_mode<synchronous>, transform_indices = @transform_3, window_bounds = array<i64: 1, 256>}, {pipeline_mode = #tpu.pipeline_mode<synchronous>, transform_indices = @transform_4, window_bounds = array<i64: 256, 64>}, {pipeline_mode = #tpu.pipeline_mode<synchronous>, transform_indices = @transform_5, window_bounds = array<i64: 1, 64>}, {pipeline_mode = #tpu.pipeline_mode<synchronous>, transform_indices = @transform_6, window_bounds = array<i64: 32, 256>}, {pipeline_mode = #tpu.pipeline_mode<synchronous>, transform_indices = @transform_7, window_bounds = array<i64: 1, 256>}, {pipeline_mode = #tpu.pipeline_mode<synchronous>, transform_indices = @transform_8, window_bounds = array<i64: 256, 784>}, {pipeline_mode = #tpu.pipeline_mode<synchronous>, transform_indices = @transform_9, window_bounds = array<i64: 1, 784>}, {transform_indices = @transform_10, window_bounds = array<i64: 1, 128>}]} {
    %c0 = arith.constant 0 : index
    %c0_0 = arith.constant 0 : index
    %0 = vector.load %arg1[%c0, %c0_0] : memref<128x784xf32, #tpu.memory_space<vmem>>, vector<128x784xf32>
    %1 = arith.truncf %0 : vector<128x784xf32> to vector<128x784xbf16>
    %c0_1 = arith.constant 0 : index
    %c0_2 = arith.constant 0 : index
    %2 = vector.load %arg3[%c0_1, %c0_2] : memref<784x256xbf16, #tpu.memory_space<vmem>>, vector<784x256xbf16>
    %cst = arith.constant dense<0.000000e+00> : vector<128x256xf32>
    %3 = tpu.matmul %1, %2, %cst {dimension_numbers = #tpu.dot_dimension_numbers<[1], [0], [0], [1], [0, 0, 1, 1], [], []>} : vector<128x784xbf16>, vector<784x256xbf16>, vector<128x256xf32> -> vector<128x256xf32>
    %c0_3 = arith.constant 0 : index
    %c0_4 = arith.constant 0 : index
    %4 = vector.load %arg4[%c0_3, %c0_4] : memref<1x256xf32, #tpu.memory_space<vmem>>, vector<1x256xf32>
    %5 = vector.broadcast %4 : vector<1x256xf32> to vector<128x256xf32>
    %6 = arith.addf %3, %5 : vector<128x256xf32>
    %7 = math.tanh %6 : vector<128x256xf32>
    %8 = arith.truncf %7 : vector<128x256xf32> to vector<128x256xbf16>
    %c0_5 = arith.constant 0 : index
    %c0_6 = arith.constant 0 : index
    %9 = vector.load %arg5[%c0_5, %c0_6] : memref<256x64xbf16, #tpu.memory_space<vmem>>, vector<256x64xbf16>
    %cst_7 = arith.constant dense<0.000000e+00> : vector<128x64xf32>
    %10 = tpu.matmul %8, %9, %cst_7 {dimension_numbers = #tpu.dot_dimension_numbers<[1], [0], [0], [1], [0, 0, 1, 1], [], []>} : vector<128x256xbf16>, vector<256x64xbf16>, vector<128x64xf32> -> vector<128x64xf32>
    %c0_8 = arith.constant 0 : index
    %c0_9 = arith.constant 0 : index
    %11 = vector.load %arg6[%c0_8, %c0_9] : memref<1x64xf32, #tpu.memory_space<vmem>>, vector<1x64xf32>
    %12 = vector.broadcast %11 : vector<1x64xf32> to vector<128x64xf32>
    %13 = arith.addf %10, %12 : vector<128x64xf32>
    %14 = vector.extract_strided_slice %13 {offsets = [0, 0], sizes = [128, 32], strides = [1, 1]} : vector<128x64xf32> to vector<128x32xf32>
    %15 = vector.extract_strided_slice %13 {offsets = [0, 32], sizes = [128, 32], strides = [1, 1]} : vector<128x64xf32> to vector<128x32xf32>
    %cst_10 = arith.constant 5.000000e-01 : f32
    %16 = vector.broadcast %cst_10 : f32 to vector<128x32xf32>
    %17 = arith.mulf %16, %15 : vector<128x32xf32>
    %18 = math.exp %17 : vector<128x32xf32>
    %19 = arith.mulf %18, %18 : vector<128x32xf32>
    %c0_11 = arith.constant 0 : index
    %c0_12 = arith.constant 0 : index
    %20 = vector.load %arg2[%c0_11, %c0_12] : memref<128x32xf32, #tpu.memory_space<vmem>>, vector<128x32xf32>
    %21 = arith.mulf %20, %18 : vector<128x32xf32>
    %22 = arith.addf %14, %21 : vector<128x32xf32>
    %23 = arith.truncf %22 : vector<128x32xf32> to vector<128x32xbf16>
    %c0_13 = arith.constant 0 : index
    %c0_14 = arith.constant 0 : index
    %24 = vector.load %arg7[%c0_13, %c0_14] : memref<32x256xbf16, #tpu.memory_space<vmem>>, vector<32x256xbf16>
    %cst_15 = arith.constant dense<0.000000e+00> : vector<128x256xf32>
    %25 = tpu.matmul %23, %24, %cst_15 {dimension_numbers = #tpu.dot_dimension_numbers<[1], [0], [0], [1], [0, 0, 1, 1], [], []>} : vector<128x32xbf16>, vector<32x256xbf16>, vector<128x256xf32> -> vector<128x256xf32>
    %c0_16 = arith.constant 0 : index
    %c0_17 = arith.constant 0 : index
    %26 = vector.load %arg8[%c0_16, %c0_17] : memref<1x256xf32, #tpu.memory_space<vmem>>, vector<1x256xf32>
    %27 = vector.broadcast %26 : vector<1x256xf32> to vector<128x256xf32>
    %28 = arith.addf %25, %27 : vector<128x256xf32>
    %29 = math.tanh %28 : vector<128x256xf32>
    %30 = arith.truncf %29 : vector<128x256xf32> to vector<128x256xbf16>
    %c0_18 = arith.constant 0 : index
    %c0_19 = arith.constant 0 : index
    %31 = vector.load %arg9[%c0_18, %c0_19] : memref<256x784xbf16, #tpu.memory_space<vmem>>, vector<256x784xbf16>
    %cst_20 = arith.constant dense<0.000000e+00> : vector<128x784xf32>
    %32 = tpu.matmul %30, %31, %cst_20 {dimension_numbers = #tpu.dot_dimension_numbers<[1], [0], [0], [1], [0, 0, 1, 1], [], []>} : vector<128x256xbf16>, vector<256x784xbf16>, vector<128x784xf32> -> vector<128x784xf32>
    %c0_21 = arith.constant 0 : index
    %c0_22 = arith.constant 0 : index
    %33 = vector.load %arg10[%c0_21, %c0_22] : memref<1x784xf32, #tpu.memory_space<vmem>>, vector<1x784xf32>
    %34 = vector.broadcast %33 : vector<1x784xf32> to vector<128x784xf32>
    %35 = arith.addf %32, %34 : vector<128x784xf32>
    %cst_23 = arith.constant 0.000000e+00 : f32
    %36 = vector.broadcast %cst_23 : f32 to vector<128x784xf32>
    %37 = arith.maximumf %35, %36 : vector<128x784xf32>
    %38 = arith.mulf %35, %0 : vector<128x784xf32>
    %39 = arith.subf %37, %38 : vector<128x784xf32>
    %40 = math.absf %35 : vector<128x784xf32>
    %cst_24 = arith.constant 0.000000e+00 : f32
    %41 = vector.broadcast %cst_24 : f32 to vector<128x784xf32>
    %42 = arith.subf %41, %40 : vector<128x784xf32>
    %43 = math.exp %42 : vector<128x784xf32>
    %44 = math.log1p %43 : vector<128x784xf32>
    %45 = arith.addf %39, %44 : vector<128x784xf32>
    %cst_25 = arith.constant dense<0.000000e+00> : vector<128xf32>
    %46 = vector.multi_reduction <add>, %45, %cst_25 [1] : vector<128x784xf32> to vector<128xf32>
    %47 = arith.mulf %14, %14 : vector<128x32xf32>
    %48 = arith.addf %19, %47 : vector<128x32xf32>
    %49 = arith.subf %48, %15 : vector<128x32xf32>
    %cst_26 = arith.constant 1.000000e+00 : f32
    %50 = vector.broadcast %cst_26 : f32 to vector<128x32xf32>
    %51 = arith.subf %49, %50 : vector<128x32xf32>
    %cst_27 = arith.constant dense<0.000000e+00> : vector<128xf32>
    %52 = vector.multi_reduction <add>, %51, %cst_27 [1] : vector<128x32xf32> to vector<128xf32>
    %cst_28 = arith.constant 5.000000e-01 : f32
    %53 = vector.broadcast %cst_28 : f32 to vector<128xf32>
    %54 = arith.mulf %53, %52 : vector<128xf32>
    %55 = arith.addf %46, %54 : vector<128xf32>
    %56 = vector.shape_cast %55 : vector<128xf32> to vector<1x128xf32>
    %c0_29 = arith.constant 0 : index
    %c0_30 = arith.constant 0 : index
    %57 = vector.load %arg11[%c0_29, %c0_30] : memref<1x128xf32, #tpu.memory_space<vmem>>, vector<1x128xf32>
    tpu.vector_store %arg11[%c0_29, %c0_30], %56 {strides = array<i32>} : memref<1x128xf32, #tpu.memory_space<vmem>>, vector<1x128xf32>,
    return
  }
  func.func @transform_0(%arg0: i32) -> (i32, i32) {
    %c0_i32 = arith.constant 0 : i32
    %c0_i32_0 = arith.constant 0 : i32
    return %arg0, %c0_i32 : i32, i32
  }
  func.func @transform_1(%arg0: i32) -> (i32, i32) {
    %c0_i32 = arith.constant 0 : i32
    %c0_i32_0 = arith.constant 0 : i32
    return %arg0, %c0_i32 : i32, i32
  }
  func.func @transform_2(%arg0: i32) -> (i32, i32) {
    %c0_i32 = arith.constant 0 : i32
    %c0_i32_0 = arith.constant 0 : i32
    %c0_i32_1 = arith.constant 0 : i32
    return %c0_i32, %c0_i32_0 : i32, i32
  }
  func.func @transform_3(%arg0: i32) -> (i32, i32) {
    %c0_i32 = arith.constant 0 : i32
    %c0_i32_0 = arith.constant 0 : i32
    %c0_i32_1 = arith.constant 0 : i32
    return %c0_i32, %c0_i32_0 : i32, i32
  }
  func.func @transform_4(%arg0: i32) -> (i32, i32) {
    %c0_i32 = arith.constant 0 : i32
    %c0_i32_0 = arith.constant 0 : i32
    %c0_i32_1 = arith.constant 0 : i32
    return %c0_i32, %c0_i32_0 : i32, i32
  }
  func.func @transform_5(%arg0: i32) -> (i32, i32) {
    %c0_i32 = arith.constant 0 : i32
    %c0_i32_0 = arith.constant 0 : i32
    %c0_i32_1 = arith.constant 0 : i32
    return %c0_i32, %c0_i32_0 : i32, i32
  }
  func.func @transform_6(%arg0: i32) -> (i32, i32) {
    %c0_i32 = arith.constant 0 : i32
    %c0_i32_0 = arith.constant 0 : i32
    %c0_i32_1 = arith.constant 0 : i32
    return %c0_i32, %c0_i32_0 : i32, i32
  }
  func.func @transform_7(%arg0: i32) -> (i32, i32) {
    %c0_i32 = arith.constant 0 : i32
    %c0_i32_0 = arith.constant 0 : i32
    %c0_i32_1 = arith.constant 0 : i32
    return %c0_i32, %c0_i32_0 : i32, i32
  }
  func.func @transform_8(%arg0: i32) -> (i32, i32) {
    %c0_i32 = arith.constant 0 : i32
    %c0_i32_0 = arith.constant 0 : i32
    %c0_i32_1 = arith.constant 0 : i32
    return %c0_i32, %c0_i32_0 : i32, i32
  }
  func.func @transform_9(%arg0: i32) -> (i32, i32) {
    %c0_i32 = arith.constant 0 : i32
    %c0_i32_0 = arith.constant 0 : i32
    %c0_i32_1 = arith.constant 0 : i32
    return %c0_i32, %c0_i32_0 : i32, i32
  }
  func.func @transform_10(%arg0: i32) -> (i32, i32) {
    %c0_i32 = arith.constant 0 : i32
    %c0_i32_0 = arith.constant 0 : i32
    return %c0_i32, %arg0 : i32, i32
  }
}

</mosaic_0001>

<llo_original>
// kernel: tpu_custom_call.1
$region0: #{tpu_custom_call.1}
  #allocation0 [shape = 'u32[]', space=smem, size = 0x4, offset = 0x4, fixed_abs, tag = 'smem constant byte address 0x4 - core index']
  #allocation1 [shape = 'u32[144,128]{1,0:T(1,128)}', space=vmem, size = 0x12000, scoped, tag = 'internal scratch']
  %s0 = inlined_call_operand.vmem [shape: f32[256,784], index: 0, kind: input, shape index: {}]
  %s1 = inlined_call_operand.vmem [shape: f32[256,32], index: 1, kind: input, shape index: {}]
  %s2 = inlined_call_operand.vmem [shape: bf16[784,256], index: 2, kind: input, shape index: {}]
  %s3 = inlined_call_operand.vmem [shape: f32[1,256], index: 3, kind: input, shape index: {}]
  %s4 = inlined_call_operand.vmem [shape: bf16[256,64], index: 4, kind: input, shape index: {}]
  %s5 = inlined_call_operand.vmem [shape: f32[1,64], index: 5, kind: input, shape index: {}]
  %s6 = inlined_call_operand.vmem [shape: bf16[32,256], index: 6, kind: input, shape index: {}]
  %s7 = inlined_call_operand.vmem [shape: f32[1,256], index: 7, kind: input, shape index: {}]
  %s8 = inlined_call_operand.vmem [shape: bf16[256,784], index: 8, kind: input, shape index: {}]
  %s9 = inlined_call_operand.vmem [shape: f32[1,784], index: 9, kind: input, shape index: {}]
  %s10 = inlined_call_operand.hbm [shape: f32[1,256], index: 10, kind: output, shape index: {}]
  %s11 = sld [smem:[#allocation0]]
  $region73: #{tpu_custom_call.1} parent=0
    _
  %s13 = ssub.s32 1, %s11
  %s14 = scalar_select 0, %s13, %s11
  $region1: #{tpu_custom_call.1} parent=0
    #allocation2 [shape = 'u8[1024]{0}', space=vmem, size = 0x400, scoped, tag = 'output window, operand 0']
    #allocation3 [shape = 's32[2]{0}', space=sflag, size = 0x8, scoped, tag = 'scoped memory for tpu_custom_call.1']
    %15 = vsyncpa [#allocation3], 0
    %s16 = scalar_lea.sflag [#allocation3], 1
    %17 = vsyncpa %s16, 0
    loop: start=0, step=1, limit=4
    $region2: #{tpu_custom_call.1} parent=1 // loop_pre_header
      _
    $region3: #{tpu_custom_call.1} parent=1 // loop_header
      %s19 = sphi 0, %s23
      %p20 = scmp.ge.s32.totalorder %s19, 4
      %s29 = sphi 0, %s31
      %s32 = sphi 0, %s29
      %s33 = sphi 0, %s32
      %s49 = sphi 0, %s33
      %s55 = sphi 0, %s57
      %s58 = sphi 0, %s55
      %s59 = sphi 0, %s58
      %s75 = sphi 0, %s59
      %s79 = sphi 0, %s79
      %s81 = sphi 0, %s79
      %s82 = sphi 0, %s81
      %s96 = sphi 0, %s82
      %s100 = sphi 0, %s100
      %s102 = sphi 0, %s100
      %s103 = sphi 0, %s102
      %s117 = sphi 0, %s103
      %s121 = sphi 0, %s121
      %s123 = sphi 0, %s121
      %s124 = sphi 0, %s123
      %s138 = sphi 0, %s124
      %s142 = sphi 0, %s142
      %s144 = sphi 0, %s142
      %s145 = sphi 0, %s144
      %s159 = sphi 0, %s145
      %s163 = sphi 0, %s163
      %s165 = sphi 0, %s163
      %s166 = sphi 0, %s165
      %s180 = sphi 0, %s166
      %s184 = sphi 0, %s184
      %s186 = sphi 0, %s184
      %s187 = sphi 0, %s186
      %s201 = sphi 0, %s187
      %s205 = sphi 0, %s205
      %s207 = sphi 0, %s205
      %s208 = sphi 0, %s207
      %s222 = sphi 0, %s208
      %s226 = sphi 0, %s226
      %s228 = sphi 0, %s226
      %s229 = sphi 0, %s228
      %s243 = sphi 0, %s229
      %s249 = sphi 0, %s251
      %s252 = sphi 0, %s249
      %s253 = sphi 0, %s252
      %s269 = sphi 0, %s253
    $region4: #{tpu_custom_call.1} parent=1 // loop_header_branch
      %22 = sbr.rel (%p20) target = $region8
    $region5: #{tpu_custom_call.1} parent=1 // loop_body
      %s24 = ssub.s32 %s19, 1
      %s25 = ssub.s32 %s19, 2
      %s26 = sadd.s32 %s19, 1
      %s27 = ssub.s32 %s19, %s26
      %p28 = scmp.eq.s32.totalorder %s27, 0
      %s30 = sadd.s32 %s29, 1
      %s31 = scalar_select %p28, %s29, %s30
      %p34 = pneg %p28
      %p35 = scmp.eq.s32.totalorder %s19, 1
      %p36 = por %p34, %p35
      %p37 = scmp.ne.s32.totalorder %s29, %s32
      %p38 = scmp.eq.s32.totalorder %s19, 0
      %p39 = por %p37, %p38
      %p40 = scmp.ne.s32.totalorder %s29, %s32
      %p41 = scmp.eq.s32.totalorder %s24, 1
      %p42 = por %p40, %p41
      %p43 = scmp.ne.s32.totalorder %s32, %s33
      %p44 = scmp.eq.s32.totalorder %s24, 0
      %p45 = por %p43, %p44
      %p46 = scmp.ne.s32.totalorder %s32, %s33
      %p47 = scmp.eq.s32.totalorder %s25, 1
      %p48 = por %p46, %p47
      %p50 = scmp.ne.s32.totalorder %s33, %s49
      %p51 = scmp.eq.s32.totalorder %s25, 0
      %p52 = por %p50, %p51
      %s53 = ssub.s32 %s19, %s26
      %p54 = scmp.eq.s32.totalorder %s53, 0
      %s56 = sadd.s32 %s55, 1
      %s57 = scalar_select %p54, %s55, %s56
      %p60 = pneg %p54
      %p61 = scmp.eq.s32.totalorder %s19, 1
      %p62 = por %p60, %p61
      %p63 = scmp.ne.s32.totalorder %s55, %s58
      %p64 = scmp.eq.s32.totalorder %s19, 0
      %p65 = por %p63, %p64
      %p66 = scmp.ne.s32.totalorder %s55, %s58
      %p67 = scmp.eq.s32.totalorder %s24, 1
      %p68 = por %p66, %p67
      %p69 = scmp.ne.s32.totalorder %s58, %s59
      %p70 = scmp.eq.s32.totalorder %s24, 0
      %p71 = por %p69, %p70
      %p72 = scmp.ne.s32.totalorder %s58, %s59
      %p73 = scmp.eq.s32.totalorder %s25, 1
      %p74 = por %p72, %p73
      %p76 = scmp.ne.s32.totalorder %s59, %s75
      %p77 = scmp.eq.s32.totalorder %s25, 0
      %p78 = por %p76, %p77
      %s80 = sadd.s32 %s79, 1
      %p83 = scmp.eq.s32.totalorder %s19, 1
      %p84 = scmp.ne.s32.totalorder %s79, %s81
      %p85 = scmp.eq.s32.totalorder %s19, 0
      %p86 = por %p84, %p85
      %p87 = scmp.ne.s32.totalorder %s79, %s81
      %p88 = scmp.eq.s32.totalorder %s24, 1
      %p89 = por %p87, %p88
      %p90 = scmp.ne.s32.totalorder %s81, %s82
      %p91 = scmp.eq.s32.totalorder %s24, 0
      %p92 = por %p90, %p91
      %p93 = scmp.ne.s32.totalorder %s81, %s82
      %p94 = scmp.eq.s32.totalorder %s25, 1
      %p95 = por %p93, %p94
      %p97 = scmp.ne.s32.totalorder %s82, %s96
      %p98 = scmp.eq.s32.totalorder %s25, 0
      %p99 = por %p97, %p98
      %s101 = sadd.s32 %s100, 1
      %p104 = scmp.eq.s32.totalorder %s19, 1
      %p105 = scmp.ne.s32.totalorder %s100, %s102
      %p106 = scmp.eq.s32.totalorder %s19, 0
      %p107 = por %p105, %p106
      %p108 = scmp.ne.s32.totalorder %s100, %s102
      %p109 = scmp.eq.s32.totalorder %s24, 1
      %p110 = por %p108, %p109
      %p111 = scmp.ne.s32.totalorder %s102, %s103
      %p112 = scmp.eq.s32.totalorder %s24, 0
      %p113 = por %p111, %p112
      %p114 = scmp.ne.s32.totalorder %s102, %s103
      %p115 = scmp.eq.s32.totalorder %s25, 1
      %p116 = por %p114, %p115
      %p118 = scmp.ne.s32.totalorder %s103, %s117
      %p119 = scmp.eq.s32.totalorder %s25, 0
      %p120 = por %p118, %p119
      %s122 = sadd.s32 %s121, 1
      %p125 = scmp.eq.s32.totalorder %s19, 1
      %p126 = scmp.ne.s32.totalorder %s121, %s123
      %p127 = scmp.eq.s32.totalorder %s19, 0
      %p128 = por %p126, %p127
      %p129 = scmp.ne.s32.totalorder %s121, %s123
      %p130 = scmp.eq.s32.totalorder %s24, 1
      %p131 = por %p129, %p130
      %p132 = scmp.ne.s32.totalorder %s123, %s124
      %p133 = scmp.eq.s32.totalorder %s24, 0
      %p134 = por %p132, %p133
      %p135 = scmp.ne.s32.totalorder %s123, %s124
      %p136 = scmp.eq.s32.totalorder %s25, 1
      %p137 = por %p135, %p136
      %p139 = scmp.ne.s32.totalorder %s124, %s138
      %p140 = scmp.eq.s32.totalorder %s25, 0
      %p141 = por %p139, %p140
      %s143 = sadd.s32 %s142, 1
      %p146 = scmp.eq.s32.totalorder %s19, 1
      %p147 = scmp.ne.s32.totalorder %s142, %s144
      %p148 = scmp.eq.s32.totalorder %s19, 0
      %p149 = por %p147, %p148
      %p150 = scmp.ne.s32.totalorder %s142, %s144
      %p151 = scmp.eq.s32.totalorder %s24, 1
      %p152 = por %p150, %p151
      %p153 = scmp.ne.s32.totalorder %s144, %s145
      %p154 = scmp.eq.s32.totalorder %s24, 0
      %p155 = por %p153, %p154
      %p156 = scmp.ne.s32.totalorder %s144, %s145
      %p157 = scmp.eq.s32.totalorder %s25, 1
      %p158 = por %p156, %p157
      %p160 = scmp.ne.s32.totalorder %s145, %s159
      %p161 = scmp.eq.s32.totalorder %s25, 0
      %p162 = por %p160, %p161
      %s164 = sadd.s32 %s163, 1
      %p167 = scmp.eq.s32.totalorder %s19, 1
      %p168 = scmp.ne.s32.totalorder %s163, %s165
      %p169 = scmp.eq.s32.totalorder %s19, 0
      %p170 = por %p168, %p169
      %p171 = scmp.ne.s32.totalorder %s163, %s165
      %p172 = scmp.eq.s32.totalorder %s24, 1
      %p173 = por %p171, %p172
      %p174 = scmp.ne.s32.totalorder %s165, %s166
      %p175 = scmp.eq.s32.totalorder %s24, 0
      %p176 = por %p174, %p175
      %p177 = scmp.ne.s32.totalorder %s165, %s166
      %p178 = scmp.eq.s32.totalorder %s25, 1
      %p179 = por %p177, %p178
      %p181 = scmp.ne.s32.totalorder %s166, %s180
      %p182 = scmp.eq.s32.totalorder %s25, 0
      %p183 = por %p181, %p182
      %s185 = sadd.s32 %s184, 1
      %p188 = scmp.eq.s32.totalorder %s19, 1
      %p189 = scmp.ne.s32.totalorder %s184, %s186
      %p190 = scmp.eq.s32.totalorder %s19, 0
      %p191 = por %p189, %p190
      %p192 = scmp.ne.s32.totalorder %s184, %s186
      %p193 = scmp.eq.s32.totalorder %s24, 1
      %p194 = por %p192, %p193
      %p195 = scmp.ne.s32.totalorder %s186, %s187
      %p196 = scmp.eq.s32.totalorder %s24, 0
      %p197 = por %p195, %p196
      %p198 = scmp.ne.s32.totalorder %s186, %s187
      %p199 = scmp.eq.s32.totalorder %s25, 1
      %p200 = por %p198, %p199
      %p202 = scmp.ne.s32.totalorder %s187, %s201
      %p203 = scmp.eq.s32.totalorder %s25, 0
      %p204 = por %p202, %p203
      %s206 = sadd.s32 %s205, 1
      %p209 = scmp.eq.s32.totalorder %s19, 1
      %p210 = scmp.ne.s32.totalorder %s205, %s207
      %p211 = scmp.eq.s32.totalorder %s19, 0
      %p212 = por %p210, %p211
      %p213 = scmp.ne.s32.totalorder %s205, %s207
      %p214 = scmp.eq.s32.totalorder %s24, 1
      %p215 = por %p213, %p214
      %p216 = scmp.ne.s32.totalorder %s207, %s208
      %p217 = scmp.eq.s32.totalorder %s24, 0
      %p218 = por %p216, %p217
      %p219 = scmp.ne.s32.totalorder %s207, %s208
      %p220 = scmp.eq.s32.totalorder %s25, 1
      %p221 = por %p219, %p220
      %p223 = scmp.ne.s32.totalorder %s208, %s222
      %p224 = scmp.eq.s32.totalorder %s25, 0
      %p225 = por %p223, %p224
      %s227 = sadd.s32 %s226, 1
      %p230 = scmp.eq.s32.totalorder %s19, 1
      %p231 = scmp.ne.s32.totalorder %s226, %s228
      %p232 = scmp.eq.s32.totalorder %s19, 0
      %p233 = por %p231, %p232
      %p234 = scmp.ne.s32.totalorder %s226, %s228
      %p235 = scmp.eq.s32.totalorder %s24, 1
      %p236 = por %p234, %p235
      %p237 = scmp.ne.s32.totalorder %s228, %s229
      %p238 = scmp.eq.s32.totalorder %s24, 0
      %p239 = por %p237, %p238
      %p240 = scmp.ne.s32.totalorder %s228, %s229
      %p241 = scmp.eq.s32.totalorder %s25, 1
      %p242 = por %p240, %p241
      %p244 = scmp.ne.s32.totalorder %s229, %s243
      %p245 = scmp.eq.s32.totalorder %s25, 0
      %p246 = por %p244, %p245
      %s247 = ssub.s32 %s19, %s26
      %p248 = scmp.eq.s32.totalorder %s247, 0
      %s250 = sadd.s32 %s249, 1
      %s251 = scalar_select %p248, %s249, %s250
      %p254 = pneg %p248
      %p255 = scmp.eq.s32.totalorder %s19, 1
      %p256 = por %p254, %p255
      %p257 = scmp.ne.s32.totalorder %s249, %s252
      %p258 = scmp.eq.s32.totalorder %s19, 0
      %p259 = por %p257, %p258
      %p260 = scmp.ne.s32.totalorder %s249, %s252
      %p261 = scmp.eq.s32.totalorder %s24, 1
      %p262 = por %p260, %p261
      %p263 = scmp.ne.s32.totalorder %s252, %s253
      %p264 = scmp.eq.s32.totalorder %s24, 0
      %p265 = por %p263, %p264
      %p266 = scmp.ne.s32.totalorder %s252, %s253
      %p267 = scmp.eq.s32.totalorder %s25, 1
      %p268 = por %p266, %p267
      %p270 = scmp.ne.s32.totalorder %s253, %s269
      %p271 = scmp.eq.s32.totalorder %s25, 0
      %p272 = por %p270, %p271
      %p273 = scmp.le.s32.totalorder 1, %s19
      %p274 = scmp.lt.s32.totalorder %s19, 3
      %p275 = pnand %p273, %p274
      %p276 = pneg %p275
      // Predicated region
      $region9: #{tpu_custom_call.1} parent=5 // pred_check
        _
      $region10: #{tpu_custom_call.1} parent=5 // pred_check_branch
        %278 = sbr.rel (%p275) target = $region12
      $region11: #{tpu_custom_call.1} parent=5 // pred_region
        %s279 = ssub.s32 %s19, 1
        // Predicated region
        $region13: #{tpu_custom_call.1} parent=11 // pred_check
          %p280 = pneg %p92
        $region14: #{tpu_custom_call.1} parent=11 // pred_check_branch
          %282 = sbr.rel (%p280) target = $region16
        $region15: #{tpu_custom_call.1} parent=11 // pred_region
          _
        $region16: #{tpu_custom_call.1} parent=11 // pred_fallthru
          _
        // Predicated region
        $region17: #{tpu_custom_call.1} parent=11 // pred_check
          %p283 = pneg %p113
        $region18: #{tpu_custom_call.1} parent=11 // pred_check_branch
          %285 = sbr.rel (%p283) target = $region20
        $region19: #{tpu_custom_call.1} parent=11 // pred_region
          _
        $region20: #{tpu_custom_call.1} parent=11 // pred_fallthru
          _
        // Predicated region
        $region21: #{tpu_custom_call.1} parent=11 // pred_check
          %p286 = pneg %p134
        $region22: #{tpu_custom_call.1} parent=11 // pred_check_branch
          %288 = sbr.rel (%p286) target = $region24
        $region23: #{tpu_custom_call.1} parent=11 // pred_region
          _
        $region24: #{tpu_custom_call.1} parent=11 // pred_fallthru
          _
        // Predicated region
        $region25: #{tpu_custom_call.1} parent=11 // pred_check
          %p289 = pneg %p155
        $region26: #{tpu_custom_call.1} parent=11 // pred_check_branch
          %291 = sbr.rel (%p289) target = $region28
        $region27: #{tpu_custom_call.1} parent=11 // pred_region
          _
        $region28: #{tpu_custom_call.1} parent=11 // pred_fallthru
          _
        // Predicated region
        $region29: #{tpu_custom_call.1} parent=11 // pred_check
          %p292 = pneg %p176
        $region30: #{tpu_custom_call.1} parent=11 // pred_check_branch
          %294 = sbr.rel (%p292) target = $region32
        $region31: #{tpu_custom_call.1} parent=11 // pred_region
          _
        $region32: #{tpu_custom_call.1} parent=11 // pred_fallthru
          _
        // Predicated region
        $region33: #{tpu_custom_call.1} parent=11 // pred_check
          %p295 = pneg %p197
        $region34: #{tpu_custom_call.1} parent=11 // pred_check_branch
          %297 = sbr.rel (%p295) target = $region36
        $region35: #{tpu_custom_call.1} parent=11 // pred_region
          _
        $region36: #{tpu_custom_call.1} parent=11 // pred_fallthru
          _
        // Predicated region
        $region37: #{tpu_custom_call.1} parent=11 // pred_check
          %p298 = pneg %p218
        $region38: #{tpu_custom_call.1} parent=11 // pred_check_branch
          %300 = sbr.rel (%p298) target = $region40
        $region39: #{tpu_custom_call.1} parent=11 // pred_region
          _
        $region40: #{tpu_custom_call.1} parent=11 // pred_fallthru
          _
        // Predicated region
        $region41: #{tpu_custom_call.1} parent=11 // pred_check
          %p301 = pneg %p239
        $region42: #{tpu_custom_call.1} parent=11 // pred_check_branch
          %303 = sbr.rel (%p301) target = $region44
        $region43: #{tpu_custom_call.1} parent=11 // pred_region
          _
        $region44: #{tpu_custom_call.1} parent=11 // pred_fallthru
          _
      $region12: #{tpu_custom_call.1} parent=5 // pred_fallthru
        _
      %p304 = scmp.lt.s32.totalorder %s19, 2
      // Predicated region
      $region45: #{tpu_custom_call.1} parent=5 // pred_check
        %p305 = pneg %p304
      $region46: #{tpu_custom_call.1} parent=5 // pred_check_branch
        %307 = sbr.rel (%p305) target = $region48
      $region47: #{tpu_custom_call.1} parent=5 // pred_region
        // Predicated region
        $region49: #{tpu_custom_call.1} parent=47 // pred_check
          %p308 = pneg %p39
        $region50: #{tpu_custom_call.1} parent=47 // pred_check_branch
          %310 = sbr.rel (%p308) target = $region52
        $region51: #{tpu_custom_call.1} parent=47 // pred_region
          %s311 = smul.u32 16, %s19
          %p312 = scmp.lt.s32.totalorder %s311, 31
          %s313 = scalar_select %p312, %s311, 31
          %s314 = smul.addr %s313, 7
          %s315 = smul.addr %s314, 8
          %s316 = scalar_lea.vmem %s0, %s315
          %s317 = smul.u32 16, %s19
        $region52: #{tpu_custom_call.1} parent=47 // pred_fallthru
          _
        // Predicated region
        $region53: #{tpu_custom_call.1} parent=47 // pred_check
          %p318 = pneg %p65
        $region54: #{tpu_custom_call.1} parent=47 // pred_check_branch
          %320 = sbr.rel (%p318) target = $region56
        $region55: #{tpu_custom_call.1} parent=47 // pred_region
          %s321 = smul.u32 16, %s19
          %p322 = scmp.lt.s32.totalorder %s321, 31
          %s323 = scalar_select %p322, %s321, 31
          %s324 = smul.addr %s323, 8
          %s325 = scalar_lea.vmem %s1, %s324
          %s326 = smul.u32 16, %s19
        $region56: #{tpu_custom_call.1} parent=47 // pred_fallthru
          _
      $region48: #{tpu_custom_call.1} parent=5 // pred_fallthru
        _
      %p327 = scmp.le.s32.totalorder 1, %s19
      %p328 = scmp.lt.s32.totalorder %s19, 3
      %p329 = pnand %p327, %p328
      %p330 = pneg %p329
      // Predicated region
      $region57: #{tpu_custom_call.1} parent=5 // pred_check
        _
      $region58: #{tpu_custom_call.1} parent=5 // pred_check_branch
        %332 = sbr.rel (%p329) target = $region60
      $region59: #{tpu_custom_call.1} parent=5 // pred_region
        %s333 = ssub.s32 %s19, 1
        %s334 = smul.u32 16, %s24
        %p335 = scmp.lt.s32.totalorder %s334, 31
        %s336 = scalar_select %p335, %s334, 31
        %s337 = smul.addr %s336, 7
        %s338 = smul.addr %s337, 8
        %s339 = scalar_lea.vmem %s0, %s338
        %p340 = pneg %p45
        %p341 = pneg %p42
        %s342 = smul.u32 16, %s24
        %p343 = scmp.lt.s32.totalorder %s342, 31
        %s344 = scalar_select %p343, %s342, 31
        %s345 = smul.addr %s344, 8
        %s346 = scalar_lea.vmem %s1, %s345
        %p347 = pneg %p71
        %p348 = pneg %p68
        %p349 = pneg %p92
        %p350 = pneg %p89
        %p351 = pneg %p113
        %p352 = pneg %p110
        %p353 = pneg %p134
        %p354 = pneg %p131
        %p355 = pneg %p155
        %p356 = pneg %p152
        %p357 = pneg %p176
        %p358 = pneg %p173
        %p359 = pneg %p197
        %p360 = pneg %p194
        %p361 = pneg %p218
        %p362 = pneg %p215
        %p363 = pneg %p239
        %p364 = pneg %p236
        %p365 = pneg %p265
        %p366 = pneg %p262
        %s367 = sand.u32 %s252, 1
        %s368 = scalar_lea.sflag [#allocation3], %s367
        %s369 = sand.u32 %s252, 1
        %s370 = scalar_lea.vmem [#allocation2], %s369
        %s371 = smul.u32 16, %s24
        %p372 = scmp.lt.s32.totalorder %s371, 31
        %s373 = scalar_select %p372, %s371, 31
        %s374 = smul.addr %s373, 7
        %s375 = smul.addr %s374, 8
        %s376 = scalar_lea.vmem %s0, %s375
        %s377 = smul.u32 16, %s24
        %s378 = smul.u32 16, %s24
        %p379 = scmp.lt.s32.totalorder %s378, 31
        %s380 = scalar_select %p379, %s378, 31
        %s381 = smul.addr %s380, 8
        %s382 = scalar_lea.vmem %s1, %s381
        %s383 = smul.u32 16, %s24
        %v385 = vld [vmem:[%s376] sm:$0xff]
        %v386 = vld [vmem:[%s376 + $0x8] sm:$0xff]
        %v387 = vld [vmem:[%s376 + $0x10] sm:$0xff]
        %v388 = vld [vmem:[%s376 + $0x18] sm:$0xff]
        %v389 = vld [vmem:[%s376 + $0x20] sm:$0xff]
        %v390 = vld [vmem:[%s376 + $0x28] sm:$0xff]
        %v391 = vld [vmem:[%s376 + $0x30] sm:$0xff]
        %v392 = vld [vmem:[%s376 + $0x38] sm:$0xff]
        %v393 = vld [vmem:[%s376 + $0x40] sm:$0xff]
        %v394 = vld [vmem:[%s376 + $0x48] sm:$0xff]
        %v395 = vld [vmem:[%s376 + $0x50] sm:$0xff]
        %v396 = vld [vmem:[%s376 + $0x58] sm:$0xff]
        %v397 = vld [vmem:[%s376 + $0x60] sm:$0xff]
        %v398 = vld [vmem:[%s376 + $0x68] sm:$0xff]
        %v399 = vld [vmem:[%s376 + $0x70] sm:$0xff]
        %v400 = vld [vmem:[%s376 + $0x78] sm:$0xff]
        %v401 = vld [vmem:[%s376 + $0x80] sm:$0xff]
        %v402 = vld [vmem:[%s376 + $0x88] sm:$0xff]
        %v403 = vld [vmem:[%s376 + $0x90] sm:$0xff]
        %v404 = vld [vmem:[%s376 + $0x98] sm:$0xff]
        %v405 = vld [vmem:[%s376 + $0xa0] sm:$0xff]
        %v406 = vld [vmem:[%s376 + $0xa8] sm:$0xff]
        %v407 = vld [vmem:[%s376 + $0xb0] sm:$0xff]
        %v408 = vld [vmem:[%s376 + $0xb8] sm:$0xff]
        %v409 = vld [vmem:[%s376 + $0xc0] sm:$0xff]
        %v410 = vld [vmem:[%s376 + $0xc8] sm:$0xff]
        %v411 = vld [vmem:[%s376 + $0xd0] sm:$0xff]
        %v412 = vld [vmem:[%s376 + $0xd8] sm:$0xff]
        %v413 = vld [vmem:[%s376 + $0xe0] sm:$0xff]
        %v414 = vld [vmem:[%s376 + $0xe8] sm:$0xff]
        %v415 = vld [vmem:[%s376 + $0xf0] sm:$0xff]
        %v416 = vld [vmem:[%s376 + $0xf8] sm:$0xff]
        %v417 = vld [vmem:[%s376 + $0x100] sm:$0xff]
        %v418 = vld [vmem:[%s376 + $0x108] sm:$0xff]
        %v419 = vld [vmem:[%s376 + $0x110] sm:$0xff]
        %v420 = vld [vmem:[%s376 + $0x118] sm:$0xff]
        %v421 = vld [vmem:[%s376 + $0x120] sm:$0xff]
        %v422 = vld [vmem:[%s376 + $0x128] sm:$0xff]
        %v423 = vld [vmem:[%s376 + $0x130] sm:$0xff]
        %v424 = vld [vmem:[%s376 + $0x138] sm:$0xff]
        %v425 = vld [vmem:[%s376 + $0x140] sm:$0xff]
        %v426 = vld [vmem:[%s376 + $0x148] sm:$0xff]
        %v427 = vld [vmem:[%s376 + $0x150] sm:$0xff]
        %v428 = vld [vmem:[%s376 + $0x158] sm:$0xff]
        %v429 = vld [vmem:[%s376 + $0x160] sm:$0xff]
        %v430 = vld [vmem:[%s376 + $0x168] sm:$0xff]
        %v431 = vld [vmem:[%s376 + $0x170] sm:$0xff]
        %v432 = vld [vmem:[%s376 + $0x178] sm:$0xff]
        %v433 = vld [vmem:[%s376 + $0x180] sm:$0xff]
        %v434 = vld [vmem:[%s376 + $0x188] sm:$0xff]
        %v435 = vld [vmem:[%s376 + $0x190] sm:$0xff]
        %v436 = vld [vmem:[%s376 + $0x198] sm:$0xff]
        %v437 = vld [vmem:[%s376 + $0x1a0] sm:$0xff]
        %v438 = vld [vmem:[%s376 + $0x1a8] sm:$0xff]
        %v439 = vld [vmem:[%s376 + $0x1b0] sm:$0xff]
        %v440 = vld [vmem:[%s376 + $0x1b8] sm:$0xff]
        %v441 = vld [vmem:[%s376 + $0x1c0] sm:$0xff]
        %v442 = vld [vmem:[%s376 + $0x1c8] sm:$0xff]
        %v443 = vld [vmem:[%s376 + $0x1d0] sm:$0xff]
        %v444 = vld [vmem:[%s376 + $0x1d8] sm:$0xff]
        %v445 = vld [vmem:[%s376 + $0x1e0] sm:$0xff]
        %v446 = vld [vmem:[%s376 + $0x1e8] sm:$0xff]
        %v447 = vld [vmem:[%s376 + $0x1f0] sm:$0xff]
        %v448 = vld [vmem:[%s376 + $0x1f8] sm:$0xff]
        %v449 = vld [vmem:[%s376 + $0x200] sm:$0xff]
        %v450 = vld [vmem:[%s376 + $0x208] sm:$0xff]
        %v451 = vld [vmem:[%s376 + $0x210] sm:$0xff]
        %v452 = vld [vmem:[%s376 + $0x218] sm:$0xff]
        %v453 = vld [vmem:[%s376 + $0x220] sm:$0xff]
        %v454 = vld [vmem:[%s376 + $0x228] sm:$0xff]
        %v455 = vld [vmem:[%s376 + $0x230] sm:$0xff]
        %v456 = vld [vmem:[%s376 + $0x238] sm:$0xff]
        %v457 = vld [vmem:[%s376 + $0x240] sm:$0xff]
        %v458 = vld [vmem:[%s376 + $0x248] sm:$0xff]
        %v459 = vld [vmem:[%s376 + $0x250] sm:$0xff]
        %v460 = vld [vmem:[%s376 + $0x258] sm:$0xff]
        %v461 = vld [vmem:[%s376 + $0x260] sm:$0xff]
        %v462 = vld [vmem:[%s376 + $0x268] sm:$0xff]
        %v463 = vld [vmem:[%s376 + $0x270] sm:$0xff]
        %v464 = vld [vmem:[%s376 + $0x278] sm:$0xff]
        %v465 = vld [vmem:[%s376 + $0x280] sm:$0xff]
        %v466 = vld [vmem:[%s376 + $0x288] sm:$0xff]
        %v467 = vld [vmem:[%s376 + $0x290] sm:$0xff]
        %v468 = vld [vmem:[%s376 + $0x298] sm:$0xff]
        %v469 = vld [vmem:[%s376 + $0x2a0] sm:$0xff]
        %v470 = vld [vmem:[%s376 + $0x2a8] sm:$0xff]
        %v471 = vld [vmem:[%s376 + $0x2b0] sm:$0xff]
        %v472 = vld [vmem:[%s376 + $0x2b8] sm:$0xff]
        %v473 = vld [vmem:[%s376 + $0x2c0] sm:$0xff]
        %v474 = vld [vmem:[%s376 + $0x2c8] sm:$0xff]
        %v475 = vld [vmem:[%s376 + $0x2d0] sm:$0xff]
        %v476 = vld [vmem:[%s376 + $0x2d8] sm:$0xff]
        %v477 = vld [vmem:[%s376 + $0x2e0] sm:$0xff]
        %v478 = vld [vmem:[%s376 + $0x2e8] sm:$0xff]
        %v479 = vld [vmem:[%s376 + $0x2f0] sm:$0xff]
        %v480 = vld [vmem:[%s376 + $0x2f8] sm:$0xff]
        %v481 = vld [vmem:[%s376 + $0x300] sm:$0xff]
        %v482 = vld [vmem:[%s376 + $0x308] sm:$0xff]
        %v483 = vld [vmem:[%s376 + $0x310] sm:$0xff]
        %v484 = vld [vmem:[%s376 + $0x318] sm:$0xff]
        %v485 = vld [vmem:[%s376 + $0x320] sm:$0xff]
        %v486 = vld [vmem:[%s376 + $0x328] sm:$0xff]
        %v487 = vld [vmem:[%s376 + $0x330] sm:$0xff]
        %v488 = vld [vmem:[%s376 + $0x338] sm:$0xff]
        %v489 = vld [vmem:[%s376 + $0x340] sm:$0xff]
        %v490 = vld [vmem:[%s376 + $0x348] sm:$0xff]
        %v491 = vld [vmem:[%s376 + $0x350] sm:$0xff]
        %v492 = vld [vmem:[%s376 + $0x358] sm:$0xff]
        %v493 = vld [vmem:[%s376 + $0x360] sm:$0xff]
        %v494 = vld [vmem:[%s376 + $0x368] sm:$0xff]
        %v495 = vld [vmem:[%s376 + $0x370] sm:$0xff]
        %v496 = vld [vmem:[%s376 + $0x378] sm:$0xff]
        %v497 = vpack.c.bf16 %v392, %v385
        %v498 = vpack.c.bf16 %v393, %v386
        %v499 = vpack.c.bf16 %v394, %v387
        %v500 = vpack.c.bf16 %v395, %v388
        %v501 = vpack.c.bf16 %v396, %v389
        %v502 = vpack.c.bf16 %v397, %v390
        %v503 = vpack.c.bf16 %v398, %v391
        %v504 = vpack.c.bf16 %v406, %v399
        %v505 = vpack.c.bf16 %v407, %v400
        %v506 = vpack.c.bf16 %v408, %v401
        %v507 = vpack.c.bf16 %v409, %v402
        %v508 = vpack.c.bf16 %v410, %v403
        %v509 = vpack.c.bf16 %v411, %v404
        %v510 = vpack.c.bf16 %v412, %v405
        %v511 = vpack.c.bf16 %v420, %v413
        %v512 = vpack.c.bf16 %v421, %v414
        %v513 = vpack.c.bf16 %v422, %v415
        %v514 = vpack.c.bf16 %v423, %v416
        %v515 = vpack.c.bf16 %v424, %v417
        %v516 = vpack.c.bf16 %v425, %v418
        %v517 = vpack.c.bf16 %v426, %v419
        %v518 = vpack.c.bf16 %v434, %v427
        %v519 = vpack.c.bf16 %v435, %v428
        %v520 = vpack.c.bf16 %v436, %v429
        %v521 = vpack.c.bf16 %v437, %v430
        %v522 = vpack.c.bf16 %v438, %v431
        %v523 = vpack.c.bf16 %v439, %v432
        %v524 = vpack.c.bf16 %v440, %v433
        %v525 = vpack.c.bf16 %v448, %v441
        %v526 = vpack.c.bf16 %v449, %v442
        %v527 = vpack.c.bf16 %v450, %v443
        %v528 = vpack.c.bf16 %v451, %v444
        %v529 = vpack.c.bf16 %v452, %v445
        %v530 = vpack.c.bf16 %v453, %v446
        %v531 = vpack.c.bf16 %v454, %v447
        %v532 = vpack.c.bf16 %v462, %v455
        %v533 = vpack.c.bf16 %v463, %v456
        %v534 = vpack.c.bf16 %v464, %v457
        %v535 = vpack.c.bf16 %v465, %v458
        %v536 = vpack.c.bf16 %v466, %v459
        %v537 = vpack.c.bf16 %v467, %v460
        %v538 = vpack.c.bf16 %v468, %v461
        %v539 = vpack.c.bf16 %v476, %v469
        %v540 = vpack.c.bf16 %v477, %v470
        %v541 = vpack.c.bf16 %v478, %v471
        %v542 = vpack.c.bf16 %v479, %v472
        %v543 = vpack.c.bf16 %v480, %v473
        %v544 = vpack.c.bf16 %v481, %v474
        %v545 = vpack.c.bf16 %v482, %v475
        %v546 = vpack.c.bf16 %v490, %v483
        %v547 = vpack.c.bf16 %v491, %v484
        %v548 = vpack.c.bf16 %v492, %v485
        %v549 = vpack.c.bf16 %v493, %v486
        %v550 = vpack.c.bf16 %v494, %v487
        %v551 = vpack.c.bf16 %v495, %v488
        %v552 = vpack.c.bf16 %v496, %v489
        %v553 = vld [vmem:[%s2] sm:$0xff]
        %v554 = vld [vmem:[%s2 + $0x8] sm:$0xff]
        %v555 = vld [vmem:[%s2 + $0x10] sm:$0xff]
        %v556 = vld [vmem:[%s2 + $0x18] sm:$0xff]
        %v557 = vld [vmem:[%s2 + $0x20] sm:$0xff]
        %v558 = vld [vmem:[%s2 + $0x28] sm:$0xff]
        %v559 = vld [vmem:[%s2 + $0x30] sm:$0xff]
        %v560 = vld [vmem:[%s2 + $0x38] sm:$0xff]
        %v561 = vld [vmem:[%s2 + $0x40] sm:$0xff]
        %v562 = vld [vmem:[%s2 + $0x48] sm:$0xff]
        %v563 = vld [vmem:[%s2 + $0x50] sm:$0xff]
        %v564 = vld [vmem:[%s2 + $0x58] sm:$0xff]
        %v565 = vld [vmem:[%s2 + $0x60] sm:$0xff]
        %v566 = vld [vmem:[%s2 + $0x68] sm:$0xff]
        %v567 = vld [vmem:[%s2 + $0x70] sm:$0xff]
        %v568 = vld [vmem:[%s2 + $0x78] sm:$0xff]
        %v569 = vld [vmem:[%s2 + $0x80] sm:$0xff]
        %v570 = vld [vmem:[%s2 + $0x88] sm:$0xff]
        %v571 = vld [vmem:[%s2 + $0x90] sm:$0xff]
        %v572 = vld [vmem:[%s2 + $0x98] sm:$0xff]
        %v573 = vld [vmem:[%s2 + $0xa0] sm:$0xff]
        %v574 = vld [vmem:[%s2 + $0xa8] sm:$0xff]
        %v575 = vld [vmem:[%s2 + $0xb0] sm:$0xff]
        %v576 = vld [vmem:[%s2 + $0xb8] sm:$0xff]
        %v577 = vld [vmem:[%s2 + $0xc0] sm:$0xff]
        %v578 = vld [vmem:[%s2 + $0xc8] sm:$0xff]
        %v579 = vld [vmem:[%s2 + $0xd0] sm:$0xff]
        %v580 = vld [vmem:[%s2 + $0xd8] sm:$0xff]
        %v581 = vld [vmem:[%s2 + $0xe0] sm:$0xff]
        %v582 = vld [vmem:[%s2 + $0xe8] sm:$0xff]
        %v583 = vld [vmem:[%s2 + $0xf0] sm:$0xff]
        %v584 = vld [vmem:[%s2 + $0xf8] sm:$0xff]
        %v585 = vld [vmem:[%s2 + $0x100] sm:$0xff]
        %v586 = vld [vmem:[%s2 + $0x108] sm:$0xff]
        %v587 = vld [vmem:[%s2 + $0x110] sm:$0xff]
        %v588 = vld [vmem:[%s2 + $0x118] sm:$0xff]
        %v589 = vld [vmem:[%s2 + $0x120] sm:$0xff]
        %v590 = vld [vmem:[%s2 + $0x128] sm:$0xff]
        %v591 = vld [vmem:[%s2 + $0x130] sm:$0xff]
        %v592 = vld [vmem:[%s2 + $0x138] sm:$0xff]
        %v593 = vld [vmem:[%s2 + $0x140] sm:$0xff]
        %v594 = vld [vmem:[%s2 + $0x148] sm:$0xff]
        %v595 = vld [vmem:[%s2 + $0x150] sm:$0xff]
        %v596 = vld [vmem:[%s2 + $0x158] sm:$0xff]
        %v597 = vld [vmem:[%s2 + $0x160] sm:$0xff]
        %v598 = vld [vmem:[%s2 + $0x168] sm:$0xff]
        %v599 = vld [vmem:[%s2 + $0x170] sm:$0xff]
        %v600 = vld [vmem:[%s2 + $0x178] sm:$0xff]
        %v601 = vld [vmem:[%s2 + $0x180] sm:$0xff]
        %v602 = vld [vmem:[%s2 + $0x188] sm:$0xff]
        %v603 = vld [vmem:[%s2 + $0x190] sm:$0xff]
        %v604 = vld [vmem:[%s2 + $0x198] sm:$0xff]
        %v605 = vld [vmem:[%s2 + $0x1a0] sm:$0xff]
        %v606 = vld [vmem:[%s2 + $0x1a8] sm:$0xff]
        %v607 = vld [vmem:[%s2 + $0x1b0] sm:$0xff]
        %v608 = vld [vmem:[%s2 + $0x1b8] sm:$0xff]
        %v609 = vld [vmem:[%s2 + $0x1c0] sm:$0xff]
        %v610 = vld [vmem:[%s2 + $0x1c8] sm:$0xff]
        %v611 = vld [vmem:[%s2 + $0x1d0] sm:$0xff]
        %v612 = vld [vmem:[%s2 + $0x1d8] sm:$0xff]
        %v613 = vld [vmem:[%s2 + $0x1e0] sm:$0xff]
        %v614 = vld [vmem:[%s2 + $0x1e8] sm:$0xff]
        %v615 = vld [vmem:[%s2 + $0x1f0] sm:$0xff]
        %v616 = vld [vmem:[%s2 + $0x1f8] sm:$0xff]
        %v617 = vld [vmem:[%s2 + $0x200] sm:$0xff]
        %v618 = vld [vmem:[%s2 + $0x208] sm:$0xff]
        %v619 = vld [vmem:[%s2 + $0x210] sm:$0xff]
        %v620 = vld [vmem:[%s2 + $0x218] sm:$0xff]
        %v621 = vld [vmem:[%s2 + $0x220] sm:$0xff]
        %v622 = vld [vmem:[%s2 + $0x228] sm:$0xff]
        %v623 = vld [vmem:[%s2 + $0x230] sm:$0xff]
        %v624 = vld [vmem:[%s2 + $0x238] sm:$0xff]
        %v625 = vld [vmem:[%s2 + $0x240] sm:$0xff]
        %v626 = vld [vmem:[%s2 + $0x248] sm:$0xff]
        %v627 = vld [vmem:[%s2 + $0x250] sm:$0xff]
        %v628 = vld [vmem:[%s2 + $0x258] sm:$0xff]
        %v629 = vld [vmem:[%s2 + $0x260] sm:$0xff]
        %v630 = vld [vmem:[%s2 + $0x268] sm:$0xff]
        %v631 = vld [vmem:[%s2 + $0x270] sm:$0xff]
        %v632 = vld [vmem:[%s2 + $0x278] sm:$0xff]
        %v633 = vld [vmem:[%s2 + $0x280] sm:$0xff]
        %v634 = vld [vmem:[%s2 + $0x288] sm:$0xff]
        %v635 = vld [vmem:[%s2 + $0x290] sm:$0xff]
        %v636 = vld [vmem:[%s2 + $0x298] sm:$0xff]
        %v637 = vld [vmem:[%s2 + $0x2a0] sm:$0xff]
        %v638 = vld [vmem:[%s2 + $0x2a8] sm:$0xff]
        %v639 = vld [vmem:[%s2 + $0x2b0] sm:$0xff]
        %v640 = vld [vmem:[%s2 + $0x2b8] sm:$0xff]
        %v641 = vld [vmem:[%s2 + $0x2c0] sm:$0xff]
        %v642 = vld [vmem:[%s2 + $0x2c8] sm:$0xff]
        %v643 = vld [vmem:[%s2 + $0x2d0] sm:$0xff]
        %v644 = vld [vmem:[%s2 + $0x2d8] sm:$0xff]
        %v645 = vld [vmem:[%s2 + $0x2e0] sm:$0xff]
        %v646 = vld [vmem:[%s2 + $0x2e8] sm:$0xff]
        %v647 = vld [vmem:[%s2 + $0x2f0] sm:$0xff]
        %v648 = vld [vmem:[%s2 + $0x2f8] sm:$0xff]
        %v649 = vld [vmem:[%s2 + $0x300] sm:$0xff]
        %v650 = vld [vmem:[%s2 + $0x308] sm:$0xff]
        %v651 = vld [vmem:[%s3] sm:$0x3]
        %v653 = vlaneseq
        %v654 = vshrl.u32 %v653, 7
        %v655 = vsub.s32 0, %v654
        %v656 = vrot.slane %v651, %v655
        %v657 = vlaneseq
        %v658 = vshrl.u32 %v657, 7
        %v659 = vsub.s32 1, %v658
        %v660 = vrot.slane %v651, %v659
        %v761 = vunpack.c.l.b16 %v553
        %v762 = vunpack.c.h.b16 %v553
        %v763 = vunpack.c.l.b16 %v554
        %v764 = vunpack.c.h.b16 %v554
        %v765 = vunpack.c.l.b16 %v555
        %v766 = vunpack.c.h.b16 %v555
        %v767 = vunpack.c.l.b16 %v556
        %v768 = vunpack.c.h.b16 %v556
        %v769 = vunpack.c.l.b16 %v557
        %v770 = vunpack.c.h.b16 %v557
        %v771 = vunpack.c.l.b16 %v558
        %v772 = vunpack.c.h.b16 %v558
        %v773 = vunpack.c.l.b16 %v559
        %v774 = vunpack.c.h.b16 %v559
        %v775 = vunpack.c.l.b16 %v560
        %v776 = vunpack.c.h.b16 %v560
        %v777 = vunpack.c.l.b16 %v561
        %v778 = vunpack.c.h.b16 %v561
        %v779 = vunpack.c.l.b16 %v562
        %v780 = vunpack.c.h.b16 %v562
        %v781 = vunpack.c.l.b16 %v563
        %v782 = vunpack.c.h.b16 %v563
        %v783 = vunpack.c.l.b16 %v564
        %v784 = vunpack.c.h.b16 %v564
        %v785 = vunpack.c.l.b16 %v565
        %v786 = vunpack.c.h.b16 %v565
        %v787 = vunpack.c.l.b16 %v566
        %v788 = vunpack.c.h.b16 %v566
        %v789 = vunpack.c.l.b16 %v567
        %v790 = vunpack.c.h.b16 %v567
        %v791 = vunpack.c.l.b16 %v568
        %v792 = vunpack.c.h.b16 %v568
        %v793 = vunpack.c.l.b16 %v569
        %v794 = vunpack.c.h.b16 %v569
        %v795 = vunpack.c.l.b16 %v570
        %v796 = vunpack.c.h.b16 %v570
        %v797 = vunpack.c.l.b16 %v571
        %v798 = vunpack.c.h.b16 %v571
        %v799 = vunpack.c.l.b16 %v572
        %v800 = vunpack.c.h.b16 %v572
        %v801 = vunpack.c.l.b16 %v573
        %v802 = vunpack.c.h.b16 %v573
        %v803 = vunpack.c.l.b16 %v574
        %v804 = vunpack.c.h.b16 %v574
        %v805 = vunpack.c.l.b16 %v575
        %v806 = vunpack.c.h.b16 %v575
        %v807 = vunpack.c.l.b16 %v576
        %v808 = vunpack.c.h.b16 %v576
        %v809 = vunpack.c.l.b16 %v577
        %v810 = vunpack.c.h.b16 %v577
        %v811 = vunpack.c.l.b16 %v578
        %v812 = vunpack.c.h.b16 %v578
        %v813 = vunpack.c.l.b16 %v579
        %v814 = vunpack.c.h.b16 %v579
        %v815 = vunpack.c.l.b16 %v580
        %v816 = vunpack.c.h.b16 %v580
        %v817 = vunpack.c.l.b16 %v581
        %v818 = vunpack.c.h.b16 %v581
        %v819 = vunpack.c.l.b16 %v582
        %v820 = vunpack.c.h.b16 %v582
        %v821 = vunpack.c.l.b16 %v583
        %v822 = vunpack.c.h.b16 %v583
        %v823 = vunpack.c.l.b16 %v584
        %v824 = vunpack.c.h.b16 %v584
        %v825 = vunpack.c.l.b16 %v585
        %v826 = vunpack.c.h.b16 %v585
        %v827 = vunpack.c.l.b16 %v586
        %v828 = vunpack.c.h.b16 %v586
        %v829 = vunpack.c.l.b16 %v587
        %v830 = vunpack.c.h.b16 %v587
        %v831 = vunpack.c.l.b16 %v588
        %v832 = vunpack.c.h.b16 %v588
        %v833 = vunpack.c.l.b16 %v589
        %v834 = vunpack.c.h.b16 %v589
        %v835 = vunpack.c.l.b16 %v590
        %v836 = vunpack.c.h.b16 %v590
        %v837 = vunpack.c.l.b16 %v591
        %v838 = vunpack.c.h.b16 %v591
        %v839 = vunpack.c.l.b16 %v592
        %v840 = vunpack.c.h.b16 %v592
        %v841 = vunpack.c.l.b16 %v593
        %v842 = vunpack.c.h.b16 %v593
        %v843 = vunpack.c.l.b16 %v594
        %v844 = vunpack.c.h.b16 %v594
        %v845 = vunpack.c.l.b16 %v595
        %v846 = vunpack.c.h.b16 %v595
        %v847 = vunpack.c.l.b16 %v596
        %v848 = vunpack.c.h.b16 %v596
        %v849 = vunpack.c.l.b16 %v597
        %v850 = vunpack.c.h.b16 %v597
        %v851 = vunpack.c.l.b16 %v598
        %v852 = vunpack.c.h.b16 %v598
        %v853 = vunpack.c.l.b16 %v599
        %v854 = vunpack.c.h.b16 %v599
        %v855 = vunpack.c.l.b16 %v600
        %v856 = vunpack.c.h.b16 %v600
        %v857 = vunpack.c.l.b16 %v601
        %v858 = vunpack.c.h.b16 %v601
        %v859 = vunpack.c.l.b16 %v602
        %v860 = vunpack.c.h.b16 %v602
        %v861 = vunpack.c.l.b16 %v603
        %v862 = vunpack.c.h.b16 %v603
        %v863 = vunpack.c.l.b16 %v604
        %v864 = vunpack.c.h.b16 %v604
        %v865 = vunpack.c.l.b16 %v605
        %v866 = vunpack.c.h.b16 %v605
        %v867 = vunpack.c.l.b16 %v606
        %v868 = vunpack.c.h.b16 %v606
        %v869 = vunpack.c.l.b16 %v607
        %v870 = vunpack.c.h.b16 %v607
        %v871 = vunpack.c.l.b16 %v608
        %v872 = vunpack.c.h.b16 %v608
        %v873 = vunpack.c.l.b16 %v609
        %v874 = vunpack.c.h.b16 %v609
        %v875 = vunpack.c.l.b16 %v610
        %v876 = vunpack.c.h.b16 %v610
        %v877 = vunpack.c.l.b16 %v611
        %v878 = vunpack.c.h.b16 %v611
        %v879 = vunpack.c.l.b16 %v612
        %v880 = vunpack.c.h.b16 %v612
        %v881 = vunpack.c.l.b16 %v613
        %v882 = vunpack.c.h.b16 %v613
        %v883 = vunpack.c.l.b16 %v614
        %v884 = vunpack.c.h.b16 %v614
        %v885 = vunpack.c.l.b16 %v615
        %v886 = vunpack.c.h.b16 %v615
        %v887 = vunpack.c.l.b16 %v616
        %v888 = vunpack.c.h.b16 %v616
        %v889 = vunpack.c.l.b16 %v617
        %v890 = vunpack.c.h.b16 %v617
        %v891 = vunpack.c.l.b16 %v618
        %v892 = vunpack.c.h.b16 %v618
        %v893 = vunpack.c.l.b16 %v619
        %v894 = vunpack.c.h.b16 %v619
        %v895 = vunpack.c.l.b16 %v620
        %v896 = vunpack.c.h.b16 %v620
        %v897 = vunpack.c.l.b16 %v621
        %v898 = vunpack.c.h.b16 %v621
        %v899 = vunpack.c.l.b16 %v622
        %v900 = vunpack.c.h.b16 %v622
        %v901 = vunpack.c.l.b16 %v623
        %v902 = vunpack.c.h.b16 %v623
        %v903 = vunpack.c.l.b16 %v624
        %v904 = vunpack.c.h.b16 %v624
        %v905 = vunpack.c.l.b16 %v625
        %v906 = vunpack.c.h.b16 %v625
        %v907 = vunpack.c.l.b16 %v626
        %v908 = vunpack.c.h.b16 %v626
        %v909 = vunpack.c.l.b16 %v627
        %v910 = vunpack.c.h.b16 %v627
        %v911 = vunpack.c.l.b16 %v628
        %v912 = vunpack.c.h.b16 %v628
        %v913 = vunpack.c.l.b16 %v629
        %v914 = vunpack.c.h.b16 %v629
        %v915 = vunpack.c.l.b16 %v630
        %v916 = vunpack.c.h.b16 %v630
        %v917 = vunpack.c.l.b16 %v631
        %v918 = vunpack.c.h.b16 %v631
        %v919 = vunpack.c.l.b16 %v632
        %v920 = vunpack.c.h.b16 %v632
        %v921 = vunpack.c.l.b16 %v633
        %v922 = vunpack.c.h.b16 %v633
        %v923 = vunpack.c.l.b16 %v634
        %v924 = vunpack.c.h.b16 %v634
        %v925 = vunpack.c.l.b16 %v635
        %v926 = vunpack.c.h.b16 %v635
        %v927 = vunpack.c.l.b16 %v636
        %v928 = vunpack.c.h.b16 %v636
        %v929 = vunpack.c.l.b16 %v637
        %v930 = vunpack.c.h.b16 %v637
        %v931 = vunpack.c.l.b16 %v638
        %v932 = vunpack.c.h.b16 %v638
        %v933 = vunpack.c.l.b16 %v639
        %v934 = vunpack.c.h.b16 %v639
        %v935 = vunpack.c.l.b16 %v640
        %v936 = vunpack.c.h.b16 %v640
        %v937 = vunpack.c.l.b16 %v641
        %v938 = vunpack.c.h.b16 %v641
        %v939 = vunpack.c.l.b16 %v642
        %v940 = vunpack.c.h.b16 %v642
        %v941 = vunpack.c.l.b16 %v643
        %v942 = vunpack.c.h.b16 %v643
        %v943 = vunpack.c.l.b16 %v644
        %v944 = vunpack.c.h.b16 %v644
        %v945 = vunpack.c.l.b16 %v645
        %v946 = vunpack.c.h.b16 %v645
        %v947 = vunpack.c.l.b16 %v646
        %v948 = vunpack.c.h.b16 %v646
        %v949 = vunpack.c.l.b16 %v647
        %v950 = vunpack.c.h.b16 %v647
        %v951 = vunpack.c.l.b16 %v648
        %v952 = vunpack.c.h.b16 %v648
        %v953 = vunpack.c.l.b16 %v649
        %v954 = vunpack.c.h.b16 %v649
        %v955 = vunpack.c.l.b16 %v650
        %v956 = vunpack.c.h.b16 %v650
        %v957 = vpack.c.b16 %v763, %v761
        %v958 = vpack.c.b16 %v764, %v762
        %v959 = vpack.c.b16 %v767, %v765
        %v960 = vpack.c.b16 %v768, %v766
        %v961 = vpack.c.b16 %v771, %v769
        %v962 = vpack.c.b16 %v772, %v770
        %v963 = vpack.c.b16 %v775, %v773
        %v964 = vpack.c.b16 %v776, %v774
        %v965 = vpack.c.b16 %v779, %v777
        %v966 = vpack.c.b16 %v780, %v778
        %v967 = vpack.c.b16 %v783, %v781
        %v968 = vpack.c.b16 %v784, %v782
        %v969 = vpack.c.b16 %v787, %v785
        %v970 = vpack.c.b16 %v788, %v786
        %v971 = vpack.c.b16 %v791, %v789
        %v972 = vpack.c.b16 %v792, %v790
        %v973 = vpack.c.b16 %v795, %v793
        %v974 = vpack.c.b16 %v796, %v794
        %v975 = vpack.c.b16 %v799, %v797
        %v976 = vpack.c.b16 %v800, %v798
        %v977 = vpack.c.b16 %v803, %v801
        %v978 = vpack.c.b16 %v804, %v802
        %v979 = vpack.c.b16 %v807, %v805
        %v980 = vpack.c.b16 %v808, %v806
        %v981 = vpack.c.b16 %v811, %v809
        %v982 = vpack.c.b16 %v812, %v810
        %v983 = vpack.c.b16 %v815, %v813
        %v984 = vpack.c.b16 %v816, %v814
        %v985 = vpack.c.b16 %v819, %v817
        %v986 = vpack.c.b16 %v820, %v818
        %v987 = vpack.c.b16 %v823, %v821
        %v988 = vpack.c.b16 %v824, %v822
        %v989 = vpack.c.b16 %v827, %v825
        %v990 = vpack.c.b16 %v828, %v826
        %v991 = vpack.c.b16 %v831, %v829
        %v992 = vpack.c.b16 %v832, %v830
        %v993 = vpack.c.b16 %v835, %v833
        %v994 = vpack.c.b16 %v836, %v834
        %v995 = vpack.c.b16 %v839, %v837
        %v996 = vpack.c.b16 %v840, %v838
        %v997 = vpack.c.b16 %v843, %v841
        %v998 = vpack.c.b16 %v844, %v842
        %v999 = vpack.c.b16 %v847, %v845
        %v1000 = vpack.c.b16 %v848, %v846
        %v1001 = vpack.c.b16 %v851, %v849
        %v1002 = vpack.c.b16 %v852, %v850
        %v1003 = vpack.c.b16 %v855, %v853
        %v1004 = vpack.c.b16 %v856, %v854
        %v1005 = vpack.c.b16 %v859, %v857
        %v1006 = vpack.c.b16 %v860, %v858
        %v1007 = vpack.c.b16 %v863, %v861
        %v1008 = vpack.c.b16 %v864, %v862
        %v1009 = vpack.c.b16 %v867, %v865
        %v1010 = vpack.c.b16 %v868, %v866
        %v1011 = vpack.c.b16 %v871, %v869
        %v1012 = vpack.c.b16 %v872, %v870
        %v1013 = vpack.c.b16 %v875, %v873
        %v1014 = vpack.c.b16 %v876, %v874
        %v1015 = vpack.c.b16 %v879, %v877
        %v1016 = vpack.c.b16 %v880, %v878
        %v1017 = vpack.c.b16 %v883, %v881
        %v1018 = vpack.c.b16 %v884, %v882
        %v1019 = vpack.c.b16 %v887, %v885
        %v1020 = vpack.c.b16 %v888, %v886
        %v1021 = vpack.c.b16 %v891, %v889
        %v1022 = vpack.c.b16 %v892, %v890
        %v1023 = vpack.c.b16 %v895, %v893
        %v1024 = vpack.c.b16 %v896, %v894
        %v1025 = vpack.c.b16 %v899, %v897
        %v1026 = vpack.c.b16 %v900, %v898
        %v1027 = vpack.c.b16 %v903, %v901
        %v1028 = vpack.c.b16 %v904, %v902
        %v1029 = vpack.c.b16 %v907, %v905
        %v1030 = vpack.c.b16 %v908, %v906
        %v1031 = vpack.c.b16 %v911, %v909
        %v1032 = vpack.c.b16 %v912, %v910
        %v1033 = vpack.c.b16 %v915, %v913
        %v1034 = vpack.c.b16 %v916, %v914
        %v1035 = vpack.c.b16 %v919, %v917
        %v1036 = vpack.c.b16 %v920, %v918
        %v1037 = vpack.c.b16 %v923, %v921
        %v1038 = vpack.c.b16 %v924, %v922
        %v1039 = vpack.c.b16 %v927, %v925
        %v1040 = vpack.c.b16 %v928, %v926
        %v1041 = vpack.c.b16 %v931, %v929
        %v1042 = vpack.c.b16 %v932, %v930
        %v1043 = vpack.c.b16 %v935, %v933
        %v1044 = vpack.c.b16 %v936, %v934
        %v1045 = vpack.c.b16 %v939, %v937
        %v1046 = vpack.c.b16 %v940, %v938
        %v1047 = vpack.c.b16 %v943, %v941
        %v1048 = vpack.c.b16 %v944, %v942
        %v1049 = vpack.c.b16 %v947, %v945
        %v1050 = vpack.c.b16 %v948, %v946
        %v1051 = vpack.c.b16 %v951, %v949
        %v1052 = vpack.c.b16 %v952, %v950
        %v1053 = vpack.c.b16 %v955, %v953
        %v1054 = vpack.c.b16 %v956, %v954
        %vm1153 = vcmask 130048
        %v1155 = vsel %vm1153, %v503, 0
        %v1158 = vsel %vm1153, %v510, 0
        %v1161 = vsel %vm1153, %v517, 0
        %v1164 = vsel %vm1153, %v524, 0
        %v1167 = vsel %vm1153, %v531, 0
        %v1170 = vsel %vm1153, %v538, 0
        %v1173 = vsel %vm1153, %v545, 0
        %v1176 = vsel %vm1153, %v552, 0
        %1178 = vmatprep.subr.bf16.mxu0 %v972
        %1179 = vmatpush1.bf16.msra.mxu0 %v971
        %1180 = vmatprep.subr.bf16.mxu0 %v970
        %1181 = vmatpush1.bf16.msra.mxu0 %v969
        %1182 = vmatprep.subr.bf16.mxu0 %v968
        %1183 = vmatpush1.bf16.msra.mxu0 %v967
        %1184 = vmatprep.subr.bf16.mxu0 %v966
        %1185 = vmatpush1.bf16.msra.mxu0 %v965
        %1186 = vmatprep.subr.bf16.mxu0 %v964
        %1187 = vmatpush1.bf16.msra.mxu0 %v963
        %1188 = vmatprep.subr.bf16.mxu0 %v962
        %1189 = vmatpush1.bf16.msra.mxu0 %v961
        %1190 = vmatprep.subr.bf16.mxu0 %v960
        %1191 = vmatpush1.bf16.msra.mxu0 %v959
        %1192 = vmatprep.subr.bf16.mxu0 %v958
        %1193 = vmatpush1.bf16.msra.mxu0 %v957
        %1194 = vmatprep.subr.bf16.mxu0 %v988
        %1195 = vmatpush2.bf16.msra.mxu0 %v987
        %1196 = vmatprep.subr.bf16.mxu0 %v986
        %1197 = vmatpush2.bf16.msra.mxu0 %v985
        %1198 = vmatprep.subr.bf16.mxu0 %v984
        %1199 = vmatpush2.bf16.msra.mxu0 %v983
        %1200 = vmatprep.subr.bf16.mxu0 %v982
        %1201 = vmatpush2.bf16.msra.mxu0 %v981
        %1202 = vmatprep.subr.bf16.mxu0 %v980
        %1203 = vmatpush2.bf16.msra.mxu0 %v979
        %1204 = vmatprep.subr.bf16.mxu0 %v978
        %1205 = vmatpush2.bf16.msra.mxu0 %v977
        %1206 = vmatprep.subr.bf16.mxu0 %v976
        %1207 = vmatpush2.bf16.msra.mxu0 %v975
        %1208 = vmatprep.subr.bf16.mxu0 %v974
        %1209 = vmatpush2.bf16.msra.mxu0 %v973
        %1210 = vmatprep.mubr.bf16.mxu0 %v498
        %1211 = vmatmul.mubr.bf16.gmra.mxu0 %v497
        %v1212 = vpop.f32.mrf.mxu0
        %v1213 = vadd.f32 %v656, %v1212
        %v1214 = vpop.f32.mrf.mxu0
        %v1215 = vadd.f32 %v660, %v1214
        %v1216 = vpop.f32.mrf.mxu0
        %v1217 = vadd.f32 %v656, %v1216
        %v1218 = vpop.f32.mrf.mxu0
        %v1219 = vadd.f32 %v660, %v1218
        %1220 = vmatprep.mubr.bf16.mxu0 %v505
        %1221 = vmatmul.mubr.bf16.gmra.mxu0 %v504
        %v1222 = vpop.f32.mrf.mxu0
        %v1223 = vadd.f32 %v656, %v1222
        %v1224 = vpop.f32.mrf.mxu0
        %v1225 = vadd.f32 %v660, %v1224
        %v1226 = vpop.f32.mrf.mxu0
        %v1227 = vadd.f32 %v656, %v1226
        %v1228 = vpop.f32.mrf.mxu0
        %v1229 = vadd.f32 %v660, %v1228
        %1230 = vmatprep.mubr.bf16.mxu0 %v512
        %1231 = vmatmul.mubr.bf16.gmra.mxu0 %v511
        %v1232 = vpop.f32.mrf.mxu0
        %v1233 = vadd.f32 %v656, %v1232
        %v1234 = vpop.f32.mrf.mxu0
        %v1235 = vadd.f32 %v660, %v1234
        %v1236 = vpop.f32.mrf.mxu0
        %v1237 = vadd.f32 %v656, %v1236
        %v1238 = vpop.f32.mrf.mxu0
        %v1239 = vadd.f32 %v660, %v1238
        %1240 = vmatprep.mubr.bf16.mxu0 %v519
        %1241 = vmatmul.mubr.bf16.gmra.mxu0 %v518
        %v1242 = vpop.f32.mrf.mxu0
        %v1243 = vadd.f32 %v656, %v1242
        %v1244 = vpop.f32.mrf.mxu0
        %v1245 = vadd.f32 %v660, %v1244
        %v1246 = vpop.f32.mrf.mxu0
        %v1247 = vadd.f32 %v656, %v1246
        %v1248 = vpop.f32.mrf.mxu0
        %v1249 = vadd.f32 %v660, %v1248
        %1250 = vmatprep.mubr.bf16.mxu0 %v526
        %1251 = vmatmul.mubr.bf16.gmra.mxu0 %v525
        %v1252 = vpop.f32.mrf.mxu0
        %v1253 = vadd.f32 %v656, %v1252
        %v1254 = vpop.f32.mrf.mxu0
        %v1255 = vadd.f32 %v660, %v1254
        %v1256 = vpop.f32.mrf.mxu0
        %v1257 = vadd.f32 %v656, %v1256
        %v1258 = vpop.f32.mrf.mxu0
        %v1259 = vadd.f32 %v660, %v1258
        %1260 = vmatprep.mubr.bf16.mxu0 %v533
        %1261 = vmatmul.mubr.bf16.gmra.mxu0 %v532
        %v1262 = vpop.f32.mrf.mxu0
        %v1263 = vadd.f32 %v656, %v1262
        %v1264 = vpop.f32.mrf.mxu0
        %v1265 = vadd.f32 %v660, %v1264
        %v1266 = vpop.f32.mrf.mxu0
        %v1267 = vadd.f32 %v656, %v1266
        %v1268 = vpop.f32.mrf.mxu0
        %v1269 = vadd.f32 %v660, %v1268
        %1270 = vmatprep.mubr.bf16.mxu0 %v540
        %1271 = vmatmul.mubr.bf16.gmra.mxu0 %v539
        %v1272 = vpop.f32.mrf.mxu0
        %v1273 = vadd.f32 %v656, %v1272
        %v1274 = vpop.f32.mrf.mxu0
        %v1275 = vadd.f32 %v660, %v1274
        %v1276 = vpop.f32.mrf.mxu0
        %v1277 = vadd.f32 %v656, %v1276
        %v1278 = vpop.f32.mrf.mxu0
        %v1279 = vadd.f32 %v660, %v1278
        %1280 = vmatprep.mubr.bf16.mxu0 %v547
        %1281 = vmatmul.mubr.bf16.gmra.mxu0 %v546
        %v1282 = vpop.f32.mrf.mxu0
        %v1283 = vadd.f32 %v656, %v1282
        %v1284 = vpop.f32.mrf.mxu0
        %v1285 = vadd.f32 %v660, %v1284
        %v1286 = vpop.f32.mrf.mxu0
        %v1287 = vadd.f32 %v656, %v1286
        %v1288 = vpop.f32.mrf.mxu0
        %v1289 = vadd.f32 %v660, %v1288
        %1290 = vdwg.mxu0
        %1291 = vmatprep.subr.bf16.mxu0 %v1004
        %1292 = vmatpush1.bf16.msra.mxu0 %v1003
        %1293 = vmatprep.subr.bf16.mxu0 %v1002
        %1294 = vmatpush1.bf16.msra.mxu0 %v1001
        %1295 = vmatprep.subr.bf16.mxu0 %v1000
        %1296 = vmatpush1.bf16.msra.mxu0 %v999
        %1297 = vmatprep.subr.bf16.mxu0 %v998
        %1298 = vmatpush1.bf16.msra.mxu0 %v997
        %1299 = vmatprep.subr.bf16.mxu0 %v996
        %1300 = vmatpush1.bf16.msra.mxu0 %v995
        %1301 = vmatprep.subr.bf16.mxu0 %v994
        %1302 = vmatpush1.bf16.msra.mxu0 %v993
        %1303 = vmatprep.subr.bf16.mxu0 %v992
        %1304 = vmatpush1.bf16.msra.mxu0 %v991
        %1305 = vmatprep.subr.bf16.mxu0 %v990
        %1306 = vmatpush1.bf16.msra.mxu0 %v989
        %1307 = vmatprep.subr.bf16.mxu0 %v1020
        %1308 = vmatpush2.bf16.msra.mxu0 %v1019
        %1309 = vmatprep.subr.bf16.mxu0 %v1018
        %1310 = vmatpush2.bf16.msra.mxu0 %v1017
        %1311 = vmatprep.subr.bf16.mxu0 %v1016
        %1312 = vmatpush2.bf16.msra.mxu0 %v1015
        %1313 = vmatprep.subr.bf16.mxu0 %v1014
        %1314 = vmatpush2.bf16.msra.mxu0 %v1013
        %1315 = vmatprep.subr.bf16.mxu0 %v1012
        %1316 = vmatpush2.bf16.msra.mxu0 %v1011
        %1317 = vmatprep.subr.bf16.mxu0 %v1010
        %1318 = vmatpush2.bf16.msra.mxu0 %v1009
        %1319 = vmatprep.subr.bf16.mxu0 %v1008
        %1320 = vmatpush2.bf16.msra.mxu0 %v1007
        %1321 = vmatprep.subr.bf16.mxu0 %v1006
        %1322 = vmatpush2.bf16.msra.mxu0 %v1005
        %1323 = vmatprep.mubr.bf16.mxu0 %v500
        %1324 = vmatmul.mubr.bf16.gmra.mxu0 %v499
        %v1325 = vpop.f32.mrf.mxu0
        %v1326 = vadd.f32 %v1213, %v1325
        %v1327 = vpop.f32.mrf.mxu0
        %v1328 = vadd.f32 %v1215, %v1327
        %v1329 = vpop.f32.mrf.mxu0
        %v1330 = vadd.f32 %v1217, %v1329
        %v1331 = vpop.f32.mrf.mxu0
        %v1332 = vadd.f32 %v1219, %v1331
        %1333 = vmatprep.mubr.bf16.mxu0 %v507
        %1334 = vmatmul.mubr.bf16.gmra.mxu0 %v506
        %v1335 = vpop.f32.mrf.mxu0
        %v1336 = vadd.f32 %v1223, %v1335
        %v1337 = vpop.f32.mrf.mxu0
        %v1338 = vadd.f32 %v1225, %v1337
        %v1339 = vpop.f32.mrf.mxu0
        %v1340 = vadd.f32 %v1227, %v1339
        %v1341 = vpop.f32.mrf.mxu0
        %v1342 = vadd.f32 %v1229, %v1341
        %1343 = vmatprep.mubr.bf16.mxu0 %v514
        %1344 = vmatmul.mubr.bf16.gmra.mxu0 %v513
        %v1345 = vpop.f32.mrf.mxu0
        %v1346 = vadd.f32 %v1233, %v1345
        %v1347 = vpop.f32.mrf.mxu0
        %v1348 = vadd.f32 %v1235, %v1347
        %v1349 = vpop.f32.mrf.mxu0
        %v1350 = vadd.f32 %v1237, %v1349
        %v1351 = vpop.f32.mrf.mxu0
        %v1352 = vadd.f32 %v1239, %v1351
        %1353 = vmatprep.mubr.bf16.mxu0 %v521
        %1354 = vmatmul.mubr.bf16.gmra.mxu0 %v520
        %v1355 = vpop.f32.mrf.mxu0
        %v1356 = vadd.f32 %v1243, %v1355
        %v1357 = vpop.f32.mrf.mxu0
        %v1358 = vadd.f32 %v1245, %v1357
        %v1359 = vpop.f32.mrf.mxu0
        %v1360 = vadd.f32 %v1247, %v1359
        %v1361 = vpop.f32.mrf.mxu0
        %v1362 = vadd.f32 %v1249, %v1361
        %1363 = vmatprep.mubr.bf16.mxu0 %v528
        %1364 = vmatmul.mubr.bf16.gmra.mxu0 %v527
        %v1365 = vpop.f32.mrf.mxu0
        %v1366 = vadd.f32 %v1253, %v1365
        %v1367 = vpop.f32.mrf.mxu0
        %v1368 = vadd.f32 %v1255, %v1367
        %v1369 = vpop.f32.mrf.mxu0
        %v1370 = vadd.f32 %v1257, %v1369
        %v1371 = vpop.f32.mrf.mxu0
        %v1372 = vadd.f32 %v1259, %v1371
        %1373 = vmatprep.mubr.bf16.mxu0 %v535
        %1374 = vmatmul.mubr.bf16.gmra.mxu0 %v534
        %v1375 = vpop.f32.mrf.mxu0
        %v1376 = vadd.f32 %v1263, %v1375
        %v1377 = vpop.f32.mrf.mxu0
        %v1378 = vadd.f32 %v1265, %v1377
        %v1379 = vpop.f32.mrf.mxu0
        %v1380 = vadd.f32 %v1267, %v1379
        %v1381 = vpop.f32.mrf.mxu0
        %v1382 = vadd.f32 %v1269, %v1381
        %1383 = vmatprep.mubr.bf16.mxu0 %v542
        %1384 = vmatmul.mubr.bf16.gmra.mxu0 %v541
        %v1385 = vpop.f32.mrf.mxu0
        %v1386 = vadd.f32 %v1273, %v1385
        %v1387 = vpop.f32.mrf.mxu0
        %v1388 = vadd.f32 %v1275, %v1387
        %v1389 = vpop.f32.mrf.mxu0
        %v1390 = vadd.f32 %v1277, %v1389
        %v1391 = vpop.f32.mrf.mxu0
        %v1392 = vadd.f32 %v1279, %v1391
        %1393 = vmatprep.mubr.bf16.mxu0 %v549
        %1394 = vmatmul.mubr.bf16.gmra.mxu0 %v548
        %v1395 = vpop.f32.mrf.mxu0
        %v1396 = vadd.f32 %v1283, %v1395
        %v1397 = vpop.f32.mrf.mxu0
        %v1398 = vadd.f32 %v1285, %v1397
        %v1399 = vpop.f32.mrf.mxu0
        %v1400 = vadd.f32 %v1287, %v1399
        %v1401 = vpop.f32.mrf.mxu0
        %v1402 = vadd.f32 %v1289, %v1401
        %1403 = vdwg.mxu0
        %1404 = vmatprep.subr.bf16.mxu0 %v1036
        %1405 = vmatpush1.bf16.msra.mxu0 %v1035
        %1406 = vmatprep.subr.bf16.mxu0 %v1034
        %1407 = vmatpush1.bf16.msra.mxu0 %v1033
        %1408 = vmatprep.subr.bf16.mxu0 %v1032
        %1409 = vmatpush1.bf16.msra.mxu0 %v1031
        %1410 = vmatprep.subr.bf16.mxu0 %v1030
        %1411 = vmatpush1.bf16.msra.mxu0 %v1029
        %1412 = vmatprep.subr.bf16.mxu0 %v1028
        %1413 = vmatpush1.bf16.msra.mxu0 %v1027
        %1414 = vmatprep.subr.bf16.mxu0 %v1026
        %1415 = vmatpush1.bf16.msra.mxu0 %v1025
        %1416 = vmatprep.subr.bf16.mxu0 %v1024
        %1417 = vmatpush1.bf16.msra.mxu0 %v1023
        %1418 = vmatprep.subr.bf16.mxu0 %v1022
        %1419 = vmatpush1.bf16.msra.mxu0 %v1021
        %1420 = vmatprep.subr.bf16.mxu0 %v1052
        %1421 = vmatpush2.bf16.msra.mxu0 %v1051
        %1422 = vmatprep.subr.bf16.mxu0 %v1050
        %1423 = vmatpush2.bf16.msra.mxu0 %v1049
        %1424 = vmatprep.subr.bf16.mxu0 %v1048
        %1425 = vmatpush2.bf16.msra.mxu0 %v1047
        %1426 = vmatprep.subr.bf16.mxu0 %v1046
        %1427 = vmatpush2.bf16.msra.mxu0 %v1045
        %1428 = vmatprep.subr.bf16.mxu0 %v1044
        %1429 = vmatpush2.bf16.msra.mxu0 %v1043
        %1430 = vmatprep.subr.bf16.mxu0 %v1042
        %1431 = vmatpush2.bf16.msra.mxu0 %v1041
        %1432 = vmatprep.subr.bf16.mxu0 %v1040
        %1433 = vmatpush2.bf16.msra.mxu0 %v1039
        %1434 = vmatprep.subr.bf16.mxu0 %v1038
        %1435 = vmatpush2.bf16.msra.mxu0 %v1037
        %1436 = vmatprep.mubr.bf16.mxu0 %v502
        %1437 = vmatmul.mubr.bf16.gmra.mxu0 %v501
        %v1438 = vpop.f32.mrf.mxu0
        %v1439 = vadd.f32 %v1326, %v1438
        %v1440 = vpop.f32.mrf.mxu0
        %v1441 = vadd.f32 %v1328, %v1440
        %v1442 = vpop.f32.mrf.mxu0
        %v1443 = vadd.f32 %v1330, %v1442
        %v1444 = vpop.f32.mrf.mxu0
        %v1445 = vadd.f32 %v1332, %v1444
        %1446 = vmatprep.mubr.bf16.mxu0 %v509
        %1447 = vmatmul.mubr.bf16.gmra.mxu0 %v508
        %v1448 = vpop.f32.mrf.mxu0
        %v1449 = vadd.f32 %v1336, %v1448
        %v1450 = vpop.f32.mrf.mxu0
        %v1451 = vadd.f32 %v1338, %v1450
        %v1452 = vpop.f32.mrf.mxu0
        %v1453 = vadd.f32 %v1340, %v1452
        %v1454 = vpop.f32.mrf.mxu0
        %v1455 = vadd.f32 %v1342, %v1454
        %1456 = vmatprep.mubr.bf16.mxu0 %v516
        %1457 = vmatmul.mubr.bf16.gmra.mxu0 %v515
        %v1458 = vpop.f32.mrf.mxu0
        %v1459 = vadd.f32 %v1346, %v1458
        %v1460 = vpop.f32.mrf.mxu0
        %v1461 = vadd.f32 %v1348, %v1460
        %v1462 = vpop.f32.mrf.mxu0
        %v1463 = vadd.f32 %v1350, %v1462
        %v1464 = vpop.f32.mrf.mxu0
        %v1465 = vadd.f32 %v1352, %v1464
        %1466 = vmatprep.mubr.bf16.mxu0 %v523
        %1467 = vmatmul.mubr.bf16.gmra.mxu0 %v522
        %v1468 = vpop.f32.mrf.mxu0
        %v1469 = vadd.f32 %v1356, %v1468
        %v1470 = vpop.f32.mrf.mxu0
        %v1471 = vadd.f32 %v1358, %v1470
        %v1472 = vpop.f32.mrf.mxu0
        %v1473 = vadd.f32 %v1360, %v1472
        %v1474 = vpop.f32.mrf.mxu0
        %v1475 = vadd.f32 %v1362, %v1474
        %1476 = vmatprep.mubr.bf16.mxu0 %v530
        %1477 = vmatmul.mubr.bf16.gmra.mxu0 %v529
        %v1478 = vpop.f32.mrf.mxu0
        %v1479 = vadd.f32 %v1366, %v1478
        %v1480 = vpop.f32.mrf.mxu0
        %v1481 = vadd.f32 %v1368, %v1480
        %v1482 = vpop.f32.mrf.mxu0
        %v1483 = vadd.f32 %v1370, %v1482
        %v1484 = vpop.f32.mrf.mxu0
        %v1485 = vadd.f32 %v1372, %v1484
        %1486 = vmatprep.mubr.bf16.mxu0 %v537
        %1487 = vmatmul.mubr.bf16.gmra.mxu0 %v536
        %v1488 = vpop.f32.mrf.mxu0
        %v1489 = vadd.f32 %v1376, %v1488
        %v1490 = vpop.f32.mrf.mxu0
        %v1491 = vadd.f32 %v1378, %v1490
        %v1492 = vpop.f32.mrf.mxu0
        %v1493 = vadd.f32 %v1380, %v1492
        %v1494 = vpop.f32.mrf.mxu0
        %v1495 = vadd.f32 %v1382, %v1494
        %1496 = vmatprep.mubr.bf16.mxu0 %v544
        %1497 = vmatmul.mubr.bf16.gmra.mxu0 %v543
        %v1498 = vpop.f32.mrf.mxu0
        %v1499 = vadd.f32 %v1386, %v1498
        %v1500 = vpop.f32.mrf.mxu0
        %v1501 = vadd.f32 %v1388, %v1500
        %v1502 = vpop.f32.mrf.mxu0
        %v1503 = vadd.f32 %v1390, %v1502
        %v1504 = vpop.f32.mrf.mxu0
        %v1505 = vadd.f32 %v1392, %v1504
        %1506 = vmatprep.mubr.bf16.mxu0 %v551
        %1507 = vmatmul.mubr.bf16.gmra.mxu0 %v550
        %v1508 = vpop.f32.mrf.mxu0
        %v1509 = vadd.f32 %v1396, %v1508
        %v1510 = vpop.f32.mrf.mxu0
        %v1511 = vadd.f32 %v1398, %v1510
        %v1512 = vpop.f32.mrf.mxu0
        %v1513 = vadd.f32 %v1400, %v1512
        %v1514 = vpop.f32.mrf.mxu0
        %v1515 = vadd.f32 %v1402, %v1514
        %1516 = vdwg.mxu0
        %1517 = vmatprep.subr.bf16.mxu0 0
        %1518 = vmatpush1.bf16.msra.mxu0 0
        %1519 = vmatprep.subr.bf16.mxu0 0
        %1520 = vmatpush1.bf16.msra.mxu0 0
        %1521 = vmatprep.subr.bf16.mxu0 0
        %1522 = vmatpush1.bf16.msra.mxu0 0
        %1523 = vmatprep.subr.bf16.mxu0 0
        %1524 = vmatpush1.bf16.msra.mxu0 0
        %1525 = vmatprep.subr.bf16.mxu0 0
        %1526 = vmatpush1.bf16.msra.mxu0 0
        %1527 = vmatprep.subr.bf16.mxu0 0
        %1528 = vmatpush1.bf16.msra.mxu0 0
        %1529 = vmatprep.subr.bf16.mxu0 0
        %1530 = vmatpush1.bf16.msra.mxu0 0
        %1531 = vmatprep.subr.bf16.mxu0 %v1054
        %1532 = vmatpush1.bf16.msra.mxu0 %v1053
        %1533 = vmatprep.subr.bf16.mxu0 0
        %1534 = vmatpush2.bf16.msra.mxu0 0
        %1535 = vmatprep.subr.bf16.mxu0 0
        %1536 = vmatpush2.bf16.msra.mxu0 0
        %1537 = vmatprep.subr.bf16.mxu0 0
        %1538 = vmatpush2.bf16.msra.mxu0 0
        %1539 = vmatprep.subr.bf16.mxu0 0
        %1540 = vmatpush2.bf16.msra.mxu0 0
        %1541 = vmatprep.subr.bf16.mxu0 0
        %1542 = vmatpush2.bf16.msra.mxu0 0
        %1543 = vmatprep.subr.bf16.mxu0 0
        %1544 = vmatpush2.bf16.msra.mxu0 0
        %1545 = vmatprep.subr.bf16.mxu0 0
        %1546 = vmatpush2.bf16.msra.mxu0 0
        %1547 = vmatprep.subr.bf16.mxu0 0
        %1548 = vmatpush2.bf16.msra.mxu0 0
        %1549 = vmatprep.mubr.bf16.mxu0 0
        %1550 = vmatmul.mubr.bf16.gmra.mxu0 %v1155
        %v1551 = vpop.f32.mrf.mxu0
        %v1552 = vadd.f32 %v1439, %v1551
        %v1553 = vpop.f32.mrf.mxu0
        %v1554 = vadd.f32 %v1441, %v1553
        %v1555 = vpop.f32.mrf.mxu0
        %v1556 = vadd.f32 %v1443, %v1555
        %v1557 = vpop.f32.mrf.mxu0
        %v1558 = vadd.f32 %v1445, %v1557
        %1559 = vmatprep.mubr.bf16.mxu0 0
        %1560 = vmatmul.mubr.bf16.gmra.mxu0 %v1158
        %v1561 = vpop.f32.mrf.mxu0
        %v1562 = vadd.f32 %v1449, %v1561
        %v1563 = vpop.f32.mrf.mxu0
        %v1564 = vadd.f32 %v1451, %v1563
        %v1565 = vpop.f32.mrf.mxu0
        %v1566 = vadd.f32 %v1453, %v1565
        %v1567 = vpop.f32.mrf.mxu0
        %v1568 = vadd.f32 %v1455, %v1567
        %1569 = vmatprep.mubr.bf16.mxu0 0
        %1570 = vmatmul.mubr.bf16.gmra.mxu0 %v1161
        %v1571 = vpop.f32.mrf.mxu0
        %v1572 = vadd.f32 %v1459, %v1571
        %v1573 = vpop.f32.mrf.mxu0
        %v1574 = vadd.f32 %v1461, %v1573
        %v1575 = vpop.f32.mrf.mxu0
        %v1576 = vadd.f32 %v1463, %v1575
        %v1577 = vpop.f32.mrf.mxu0
        %v1578 = vadd.f32 %v1465, %v1577
        %1579 = vmatprep.mubr.bf16.mxu0 0
        %1580 = vmatmul.mubr.bf16.gmra.mxu0 %v1164
        %v1581 = vpop.f32.mrf.mxu0
        %v1582 = vadd.f32 %v1469, %v1581
        %v1583 = vpop.f32.mrf.mxu0
        %v1584 = vadd.f32 %v1471, %v1583
        %v1585 = vpop.f32.mrf.mxu0
        %v1586 = vadd.f32 %v1473, %v1585
        %v1587 = vpop.f32.mrf.mxu0
        %v1588 = vadd.f32 %v1475, %v1587
        %1589 = vmatprep.mubr.bf16.mxu0 0
        %1590 = vmatmul.mubr.bf16.gmra.mxu0 %v1167
        %v1591 = vpop.f32.mrf.mxu0
        %v1592 = vadd.f32 %v1479, %v1591
        %v1593 = vpop.f32.mrf.mxu0
        %v1594 = vadd.f32 %v1481, %v1593
        %v1595 = vpop.f32.mrf.mxu0
        %v1596 = vadd.f32 %v1483, %v1595
        %v1597 = vpop.f32.mrf.mxu0
        %v1598 = vadd.f32 %v1485, %v1597
        %1599 = vmatprep.mubr.bf16.mxu0 0
        %1600 = vmatmul.mubr.bf16.gmra.mxu0 %v1170
        %v1601 = vpop.f32.mrf.mxu0
        %v1602 = vadd.f32 %v1489, %v1601
        %v1603 = vpop.f32.mrf.mxu0
        %v1604 = vadd.f32 %v1491, %v1603
        %v1605 = vpop.f32.mrf.mxu0
        %v1606 = vadd.f32 %v1493, %v1605
        %v1607 = vpop.f32.mrf.mxu0
        %v1608 = vadd.f32 %v1495, %v1607
        %1609 = vmatprep.mubr.bf16.mxu0 0
        %1610 = vmatmul.mubr.bf16.gmra.mxu0 %v1173
        %v1611 = vpop.f32.mrf.mxu0
        %v1612 = vadd.f32 %v1499, %v1611
        %v1613 = vpop.f32.mrf.mxu0
        %v1614 = vadd.f32 %v1501, %v1613
        %v1615 = vpop.f32.mrf.mxu0
        %v1616 = vadd.f32 %v1503, %v1615
        %v1617 = vpop.f32.mrf.mxu0
        %v1618 = vadd.f32 %v1505, %v1617
        %1619 = vmatprep.mubr.bf16.mxu0 0
        %1620 = vmatmul.mubr.bf16.gmra.mxu0 %v1176
        %v1621 = vpop.f32.mrf.mxu0
        %v1622 = vadd.f32 %v1509, %v1621
        %v1623 = vpop.f32.mrf.mxu0
        %v1624 = vadd.f32 %v1511, %v1623
        %v1625 = vpop.f32.mrf.mxu0
        %v1626 = vadd.f32 %v1513, %v1625
        %v1627 = vpop.f32.mrf.mxu0
        %v1628 = vadd.f32 %v1515, %v1627
        %1629 = vdwg.mxu0
        %v1630 = vtanh.pop %v1552
        %v1631 = vtanh.pop %v1554
        %v1632 = vtanh.pop %v1556
        %v1633 = vtanh.pop %v1558
        %v1634 = vtanh.pop %v1562
        %v1635 = vtanh.pop %v1564
        %v1636 = vtanh.pop %v1566
        %v1637 = vtanh.pop %v1568
        %v1638 = vtanh.pop %v1572
        %v1639 = vtanh.pop %v1574
        %v1640 = vtanh.pop %v1576
        %v1641 = vtanh.pop %v1578
        %v1642 = vtanh.pop %v1582
        %v1643 = vtanh.pop %v1584
        %v1644 = vtanh.pop %v1586
        %v1645 = vtanh.pop %v1588
        %v1646 = vtanh.pop %v1592
        %v1647 = vtanh.pop %v1594
        %v1648 = vtanh.pop %v1596
        %v1649 = vtanh.pop %v1598
        %v1650 = vtanh.pop %v1602
        %v1651 = vtanh.pop %v1604
        %v1652 = vtanh.pop %v1606
        %v1653 = vtanh.pop %v1608
        %v1654 = vtanh.pop %v1612
        %v1655 = vtanh.pop %v1614
        %v1656 = vtanh.pop %v1616
        %v1657 = vtanh.pop %v1618
        %v1658 = vtanh.pop %v1622
        %v1659 = vtanh.pop %v1624
        %v1660 = vtanh.pop %v1626
        %v1661 = vtanh.pop %v1628
        %v1662 = vpack.c.bf16 %v1632, %v1630
        %v1663 = vpack.c.bf16 %v1633, %v1631
        %v1664 = vpack.c.bf16 %v1636, %v1634
        %v1665 = vpack.c.bf16 %v1637, %v1635
        %v1666 = vpack.c.bf16 %v1640, %v1638
        %v1667 = vpack.c.bf16 %v1641, %v1639
        %v1668 = vpack.c.bf16 %v1644, %v1642
        %v1669 = vpack.c.bf16 %v1645, %v1643
        %v1670 = vpack.c.bf16 %v1648, %v1646
        %v1671 = vpack.c.bf16 %v1649, %v1647
        %v1672 = vpack.c.bf16 %v1652, %v1650
        %v1673 = vpack.c.bf16 %v1653, %v1651
        %v1674 = vpack.c.bf16 %v1656, %v1654
        %v1675 = vpack.c.bf16 %v1657, %v1655
        %v1676 = vpack.c.bf16 %v1660, %v1658
        %v1677 = vpack.c.bf16 %v1661, %v1659
        %v1678 = vld [vmem:[%s4] sm:$0xf]
        %v1679 = vld [vmem:[%s4 + $0x4] sm:$0xf]
        %v1680 = vld [vmem:[%s4 + $0x8] sm:$0xf]
        %v1681 = vld [vmem:[%s4 + $0xc] sm:$0xf]
        %v1682 = vld [vmem:[%s4 + $0x10] sm:$0xf]
        %v1683 = vld [vmem:[%s4 + $0x14] sm:$0xf]
        %v1684 = vld [vmem:[%s4 + $0x18] sm:$0xf]
        %v1685 = vld [vmem:[%s4 + $0x1c] sm:$0xf]
        %v1686 = vld [vmem:[%s4 + $0x20] sm:$0xf]
        %v1687 = vld [vmem:[%s4 + $0x24] sm:$0xf]
        %v1688 = vld [vmem:[%s4 + $0x28] sm:$0xf]
        %v1689 = vld [vmem:[%s4 + $0x2c] sm:$0xf]
        %v1690 = vld [vmem:[%s4 + $0x30] sm:$0xf]
        %v1691 = vld [vmem:[%s4 + $0x34] sm:$0xf]
        %v1692 = vld [vmem:[%s4 + $0x38] sm:$0xf]
        %v1693 = vld [vmem:[%s4 + $0x3c] sm:$0xf]
        %v1694 = vld [vmem:[%s4 + $0x40] sm:$0xf]
        %v1695 = vld [vmem:[%s4 + $0x44] sm:$0xf]
        %v1696 = vld [vmem:[%s4 + $0x48] sm:$0xf]
        %v1697 = vld [vmem:[%s4 + $0x4c] sm:$0xf]
        %v1698 = vld [vmem:[%s4 + $0x50] sm:$0xf]
        %v1699 = vld [vmem:[%s4 + $0x54] sm:$0xf]
        %v1700 = vld [vmem:[%s4 + $0x58] sm:$0xf]
        %v1701 = vld [vmem:[%s4 + $0x5c] sm:$0xf]
        %v1702 = vld [vmem:[%s4 + $0x60] sm:$0xf]
        %v1703 = vld [vmem:[%s4 + $0x64] sm:$0xf]
        %v1704 = vld [vmem:[%s4 + $0x68] sm:$0xf]
        %v1705 = vld [vmem:[%s4 + $0x6c] sm:$0xf]
        %v1706 = vld [vmem:[%s4 + $0x70] sm:$0xf]
        %v1707 = vld [vmem:[%s4 + $0x74] sm:$0xf]
        %v1708 = vld [vmem:[%s4 + $0x78] sm:$0xf]
        %v1709 = vld [vmem:[%s4 + $0x7c] sm:$0xf]
        %v1710 = vld [vmem:[%s5] sm:$0x1]
        %v1712 = vlaneseq
        %v1713 = vshrl.u32 %v1712, 7
        %v1714 = vsub.s32 0, %v1713
        %v1715 = vrot.slane %v1710, %v1714
        %v1749 = vunpack.c.l.b16 %v1678
        %v1750 = vunpack.c.l.b16 %v1679
        %v1751 = vunpack.c.l.b16 %v1680
        %v1752 = vunpack.c.l.b16 %v1681
        %v1753 = vunpack.c.l.b16 %v1682
        %v1754 = vunpack.c.l.b16 %v1683
        %v1755 = vunpack.c.l.b16 %v1684
        %v1756 = vunpack.c.l.b16 %v1685
        %v1757 = vunpack.c.l.b16 %v1686
        %v1758 = vunpack.c.l.b16 %v1687
        %v1759 = vunpack.c.l.b16 %v1688
        %v1760 = vunpack.c.l.b16 %v1689
        %v1761 = vunpack.c.l.b16 %v1690
        %v1762 = vunpack.c.l.b16 %v1691
        %v1763 = vunpack.c.l.b16 %v1692
        %v1764 = vunpack.c.l.b16 %v1693
        %v1765 = vunpack.c.l.b16 %v1694
        %v1766 = vunpack.c.l.b16 %v1695
        %v1767 = vunpack.c.l.b16 %v1696
        %v1768 = vunpack.c.l.b16 %v1697
        %v1769 = vunpack.c.l.b16 %v1698
        %v1770 = vunpack.c.l.b16 %v1699
        %v1771 = vunpack.c.l.b16 %v1700
        %v1772 = vunpack.c.l.b16 %v1701
        %v1773 = vunpack.c.l.b16 %v1702
        %v1774 = vunpack.c.l.b16 %v1703
        %v1775 = vunpack.c.l.b16 %v1704
        %v1776 = vunpack.c.l.b16 %v1705
        %v1777 = vunpack.c.l.b16 %v1706
        %v1778 = vunpack.c.l.b16 %v1707
        %v1779 = vunpack.c.l.b16 %v1708
        %v1780 = vunpack.c.l.b16 %v1709
        %v1781 = vpack.c.b16 %v1750, %v1749
        %v1782 = vpack.c.b16 %v1752, %v1751
        %v1783 = vpack.c.b16 %v1754, %v1753
        %v1784 = vpack.c.b16 %v1756, %v1755
        %v1785 = vpack.c.b16 %v1758, %v1757
        %v1786 = vpack.c.b16 %v1760, %v1759
        %v1787 = vpack.c.b16 %v1762, %v1761
        %v1788 = vpack.c.b16 %v1764, %v1763
        %v1789 = vpack.c.b16 %v1766, %v1765
        %v1790 = vpack.c.b16 %v1768, %v1767
        %v1791 = vpack.c.b16 %v1770, %v1769
        %v1792 = vpack.c.b16 %v1772, %v1771
        %v1793 = vpack.c.b16 %v1774, %v1773
        %v1794 = vpack.c.b16 %v1776, %v1775
        %v1795 = vpack.c.b16 %v1778, %v1777
        %v1796 = vpack.c.b16 %v1780, %v1779
        %1813 = vmatprep.subr.bf16.mxu0 0
        %1814 = vmatpush1.bf16.msra.mxu0 %v1788
        %1815 = vmatprep.subr.bf16.mxu0 0
        %1816 = vmatpush1.bf16.msra.mxu0 %v1787
        %1817 = vmatprep.subr.bf16.mxu0 0
        %1818 = vmatpush1.bf16.msra.mxu0 %v1786
        %1819 = vmatprep.subr.bf16.mxu0 0
        %1820 = vmatpush1.bf16.msra.mxu0 %v1785
        %1821 = vmatprep.subr.bf16.mxu0 0
        %1822 = vmatpush1.bf16.msra.mxu0 %v1784
        %1823 = vmatprep.subr.bf16.mxu0 0
        %1824 = vmatpush1.bf16.msra.mxu0 %v1783
        %1825 = vmatprep.subr.bf16.mxu0 0
        %1826 = vmatpush1.bf16.msra.mxu0 %v1782
        %1827 = vmatprep.subr.bf16.mxu0 0
        %1828 = vmatpush1.bf16.msra.mxu0 %v1781
        %1829 = vmatprep.subr.bf16.mxu0 0
        %1830 = vmatpush2.bf16.msra.mxu0 %v1796
        %1831 = vmatprep.subr.bf16.mxu0 0
        %1832 = vmatpush2.bf16.msra.mxu0 %v1795
        %1833 = vmatprep.subr.bf16.mxu0 0
        %1834 = vmatpush2.bf16.msra.mxu0 %v1794
        %1835 = vmatprep.subr.bf16.mxu0 0
        %1836 = vmatpush2.bf16.msra.mxu0 %v1793
        %1837 = vmatprep.subr.bf16.mxu0 0
        %1838 = vmatpush2.bf16.msra.mxu0 %v1792
        %1839 = vmatprep.subr.bf16.mxu0 0
        %1840 = vmatpush2.bf16.msra.mxu0 %v1791
        %1841 = vmatprep.subr.bf16.mxu0 0
        %1842 = vmatpush2.bf16.msra.mxu0 %v1790
        %1843 = vmatprep.subr.bf16.mxu0 0
        %1844 = vmatpush2.bf16.msra.mxu0 %v1789
        %1845 = vmatprep.mubr.bf16.mxu0 %v1663
        %1846 = vmatmul.mubr.bf16.gmra.mxu0 %v1662
        %v1847 = vpop.f32.mrf.mxu0
        %v1848 = vadd.f32 %v1715, %v1847
        %v1849 = vpop.f32.mrf.mxu0
        %v1850 = vpop.f32.mrf.mxu0
        %v1851 = vadd.f32 %v1715, %v1850
        %v1852 = vpop.f32.mrf.mxu0
        %1853 = vmatprep.mubr.bf16.mxu0 %v1665
        %1854 = vmatmul.mubr.bf16.gmra.mxu0 %v1664
        %v1855 = vpop.f32.mrf.mxu0
        %v1856 = vadd.f32 %v1715, %v1855
        %v1857 = vpop.f32.mrf.mxu0
        %v1858 = vpop.f32.mrf.mxu0
        %v1859 = vadd.f32 %v1715, %v1858
        %v1860 = vpop.f32.mrf.mxu0
        %1861 = vmatprep.mubr.bf16.mxu0 %v1667
        %1862 = vmatmul.mubr.bf16.gmra.mxu0 %v1666
        %v1863 = vpop.f32.mrf.mxu0
        %v1864 = vadd.f32 %v1715, %v1863
        %v1865 = vpop.f32.mrf.mxu0
        %v1866 = vpop.f32.mrf.mxu0
        %v1867 = vadd.f32 %v1715, %v1866
        %v1868 = vpop.f32.mrf.mxu0
        %1869 = vmatprep.mubr.bf16.mxu0 %v1669
        %1870 = vmatmul.mubr.bf16.gmra.mxu0 %v1668
        %v1871 = vpop.f32.mrf.mxu0
        %v1872 = vadd.f32 %v1715, %v1871
        %v1873 = vpop.f32.mrf.mxu0
        %v1874 = vpop.f32.mrf.mxu0
        %v1875 = vadd.f32 %v1715, %v1874
        %v1876 = vpop.f32.mrf.mxu0
        %1877 = vmatprep.mubr.bf16.mxu0 %v1671
        %1878 = vmatmul.mubr.bf16.gmra.mxu0 %v1670
        %v1879 = vpop.f32.mrf.mxu0
        %v1880 = vadd.f32 %v1715, %v1879
        %v1881 = vpop.f32.mrf.mxu0
        %v1882 = vpop.f32.mrf.mxu0
        %v1883 = vadd.f32 %v1715, %v1882
        %v1884 = vpop.f32.mrf.mxu0
        %1885 = vmatprep.mubr.bf16.mxu0 %v1673
        %1886 = vmatmul.mubr.bf16.gmra.mxu0 %v1672
        %v1887 = vpop.f32.mrf.mxu0
        %v1888 = vadd.f32 %v1715, %v1887
        %v1889 = vpop.f32.mrf.mxu0
        %v1890 = vpop.f32.mrf.mxu0
        %v1891 = vadd.f32 %v1715, %v1890
        %v1892 = vpop.f32.mrf.mxu0
        %1893 = vmatprep.mubr.bf16.mxu0 %v1675
        %1894 = vmatmul.mubr.bf16.gmra.mxu0 %v1674
        %v1895 = vpop.f32.mrf.mxu0
        %v1896 = vadd.f32 %v1715, %v1895
        %v1897 = vpop.f32.mrf.mxu0
        %v1898 = vpop.f32.mrf.mxu0
        %v1899 = vadd.f32 %v1715, %v1898
        %v1900 = vpop.f32.mrf.mxu0
        %1901 = vmatprep.mubr.bf16.mxu0 %v1677
        %1902 = vmatmul.mubr.bf16.gmra.mxu0 %v1676
        %v1903 = vpop.f32.mrf.mxu0
        %v1904 = vadd.f32 %v1715, %v1903
        %v1905 = vpop.f32.mrf.mxu0
        %v1906 = vpop.f32.mrf.mxu0
        %v1907 = vadd.f32 %v1715, %v1906
        %v1908 = vpop.f32.mrf.mxu0
        %1909 = vdwg.mxu0
        %v1910 = vmul.f32 %v1848, 0.5
        %v1911 = vmul.f32 %v1851, 0.5
        %v1912 = vmul.f32 %v1856, 0.5
        %v1913 = vmul.f32 %v1859, 0.5
        %v1914 = vmul.f32 %v1864, 0.5
        %v1915 = vmul.f32 %v1867, 0.5
        %v1916 = vmul.f32 %v1872, 0.5
        %v1917 = vmul.f32 %v1875, 0.5
        %v1918 = vmul.f32 %v1880, 0.5
        %v1919 = vmul.f32 %v1883, 0.5
        %v1920 = vmul.f32 %v1888, 0.5
        %v1921 = vmul.f32 %v1891, 0.5
        %v1922 = vmul.f32 %v1896, 0.5
        %v1923 = vmul.f32 %v1899, 0.5
        %v1924 = vmul.f32 %v1904, 0.5
        %v1925 = vmul.f32 %v1907, 0.5
        %v1926 = vmul.f32 %v1910, 1.442695
        %v1927 = vpow.pop %v1926
        %v1928 = vmul.f32 %v1911, 1.442695
        %v1929 = vpow.pop %v1928
        %v1930 = vmul.f32 %v1912, 1.442695
        %v1931 = vpow.pop %v1930
        %v1932 = vmul.f32 %v1913, 1.442695
        %v1933 = vpow.pop %v1932
        %v1934 = vmul.f32 %v1914, 1.442695
        %v1935 = vpow.pop %v1934
        %v1936 = vmul.f32 %v1915, 1.442695
        %v1937 = vpow.pop %v1936
        %v1938 = vmul.f32 %v1916, 1.442695
        %v1939 = vpow.pop %v1938
        %v1940 = vmul.f32 %v1917, 1.442695
        %v1941 = vpow.pop %v1940
        %v1942 = vmul.f32 %v1918, 1.442695
        %v1943 = vpow.pop %v1942
        %v1944 = vmul.f32 %v1919, 1.442695
        %v1945 = vpow.pop %v1944
        %v1946 = vmul.f32 %v1920, 1.442695
        %v1947 = vpow.pop %v1946
        %v1948 = vmul.f32 %v1921, 1.442695
        %v1949 = vpow.pop %v1948
        %v1950 = vmul.f32 %v1922, 1.442695
        %v1951 = vpow.pop %v1950
        %v1952 = vmul.f32 %v1923, 1.442695
        %v1953 = vpow.pop %v1952
        %v1954 = vmul.f32 %v1924, 1.442695
        %v1955 = vpow.pop %v1954
        %v1956 = vmul.f32 %v1925, 1.442695
        %v1957 = vpow.pop %v1956
        %v1958 = vmul.f32 %v1927, %v1927
        %v1959 = vmul.f32 %v1929, %v1929
        %v1960 = vmul.f32 %v1931, %v1931
        %v1961 = vmul.f32 %v1933, %v1933
        %v1962 = vmul.f32 %v1935, %v1935
        %v1963 = vmul.f32 %v1937, %v1937
        %v1964 = vmul.f32 %v1939, %v1939
        %v1965 = vmul.f32 %v1941, %v1941
        %v1966 = vmul.f32 %v1943, %v1943
        %v1967 = vmul.f32 %v1945, %v1945
        %v1968 = vmul.f32 %v1947, %v1947
        %v1969 = vmul.f32 %v1949, %v1949
        %v1970 = vmul.f32 %v1951, %v1951
        %v1971 = vmul.f32 %v1953, %v1953
        %v1972 = vmul.f32 %v1955, %v1955
        %v1973 = vmul.f32 %v1957, %v1957
        %v1974 = vld [vmem:[%s382] sm:$0xff]
        %v1975 = vld [vmem:[%s382 + $0x8] sm:$0xff]
        %v1976 = vld [vmem:[%s382 + $0x10] sm:$0xff]
        %v1977 = vld [vmem:[%s382 + $0x18] sm:$0xff]
        %v1978 = vld [vmem:[%s382 + $0x20] sm:$0xff]
        %v1979 = vld [vmem:[%s382 + $0x28] sm:$0xff]
        %v1980 = vld [vmem:[%s382 + $0x30] sm:$0xff]
        %v1981 = vld [vmem:[%s382 + $0x38] sm:$0xff]
        %v1982 = vld [vmem:[%s382 + $0x40] sm:$0xff]
        %v1983 = vld [vmem:[%s382 + $0x48] sm:$0xff]
        %v1984 = vld [vmem:[%s382 + $0x50] sm:$0xff]
        %v1985 = vld [vmem:[%s382 + $0x58] sm:$0xff]
        %v1986 = vld [vmem:[%s382 + $0x60] sm:$0xff]
        %v1987 = vld [vmem:[%s382 + $0x68] sm:$0xff]
        %v1988 = vld [vmem:[%s382 + $0x70] sm:$0xff]
        %v1989 = vld [vmem:[%s382 + $0x78] sm:$0xff]
        %2006 = vrot.lane.b32.xlu0 %v1927, 96
        %v2007 = vpop.permute.xlu0 %2006
        %2008 = vrot.lane.b32.xlu0 %v1929, 96
        %v2009 = vpop.permute.xlu0 %2008
        %2010 = vrot.lane.b32.xlu0 %v1931, 96
        %v2011 = vpop.permute.xlu0 %2010
        %2012 = vrot.lane.b32.xlu0 %v1933, 96
        %v2013 = vpop.permute.xlu0 %2012
        %2014 = vrot.lane.b32.xlu0 %v1935, 96
        %v2015 = vpop.permute.xlu0 %2014
        %2016 = vrot.lane.b32.xlu0 %v1937, 96
        %v2017 = vpop.permute.xlu0 %2016
        %2018 = vrot.lane.b32.xlu0 %v1939, 96
        %v2019 = vpop.permute.xlu0 %2018
        %2020 = vrot.lane.b32.xlu0 %v1941, 96
        %v2021 = vpop.permute.xlu0 %2020
        %2022 = vrot.lane.b32.xlu0 %v1943, 96
        %v2023 = vpop.permute.xlu0 %2022
        %2024 = vrot.lane.b32.xlu0 %v1945, 96
        %v2025 = vpop.permute.xlu0 %2024
        %2026 = vrot.lane.b32.xlu0 %v1947, 96
        %v2027 = vpop.permute.xlu0 %2026
        %2028 = vrot.lane.b32.xlu0 %v1949, 96
        %v2029 = vpop.permute.xlu0 %2028
        %2030 = vrot.lane.b32.xlu0 %v1951, 96
        %v2031 = vpop.permute.xlu0 %2030
        %2032 = vrot.lane.b32.xlu0 %v1953, 96
        %v2033 = vpop.permute.xlu0 %2032
        %2034 = vrot.lane.b32.xlu0 %v1955, 96
        %v2035 = vpop.permute.xlu0 %2034
        %2036 = vrot.lane.b32.xlu0 %v1957, 96
        %v2037 = vpop.permute.xlu0 %2036
        %v2054 = vmul.f32 %v1974, %v2007
        %v2055 = vmul.f32 %v1975, %v2009
        %v2056 = vmul.f32 %v1976, %v2011
        %v2057 = vmul.f32 %v1977, %v2013
        %v2058 = vmul.f32 %v1978, %v2015
        %v2059 = vmul.f32 %v1979, %v2017
        %v2060 = vmul.f32 %v1980, %v2019
        %v2061 = vmul.f32 %v1981, %v2021
        %v2062 = vmul.f32 %v1982, %v2023
        %v2063 = vmul.f32 %v1983, %v2025
        %v2064 = vmul.f32 %v1984, %v2027
        %v2065 = vmul.f32 %v1985, %v2029
        %v2066 = vmul.f32 %v1986, %v2031
        %v2067 = vmul.f32 %v1987, %v2033
        %v2068 = vmul.f32 %v1988, %v2035
        %v2069 = vmul.f32 %v1989, %v2037
        %v2070 = vadd.f32 %v1848, %v2054
        %v2071 = vadd.f32 %v1851, %v2055
        %v2072 = vadd.f32 %v1856, %v2056
        %v2073 = vadd.f32 %v1859, %v2057
        %v2074 = vadd.f32 %v1864, %v2058
        %v2075 = vadd.f32 %v1867, %v2059
        %v2076 = vadd.f32 %v1872, %v2060
        %v2077 = vadd.f32 %v1875, %v2061
        %v2078 = vadd.f32 %v1880, %v2062
        %v2079 = vadd.f32 %v1883, %v2063
        %v2080 = vadd.f32 %v1888, %v2064
        %v2081 = vadd.f32 %v1891, %v2065
        %v2082 = vadd.f32 %v1896, %v2066
        %v2083 = vadd.f32 %v1899, %v2067
        %v2084 = vadd.f32 %v1904, %v2068
        %v2085 = vadd.f32 %v1907, %v2069
        %v2086 = vpack.c.bf16 %v2071, %v2070
        %v2087 = vpack.c.bf16 %v2073, %v2072
        %v2088 = vpack.c.bf16 %v2075, %v2074
        %v2089 = vpack.c.bf16 %v2077, %v2076
        %v2090 = vpack.c.bf16 %v2079, %v2078
        %v2091 = vpack.c.bf16 %v2081, %v2080
        %v2092 = vpack.c.bf16 %v2083, %v2082
        %v2093 = vpack.c.bf16 %v2085, %v2084
        %v2094 = vld [vmem:[%s6] sm:$0xff]
        %v2095 = vld [vmem:[%s6 + $0x8] sm:$0xff]
        %v2096 = vld [vmem:[%s6 + $0x10] sm:$0xff]
        %v2097 = vld [vmem:[%s6 + $0x18] sm:$0xff]
        %v2098 = vld [vmem:[%s7] sm:$0x3]
        %v2100 = vlaneseq
        %v2101 = vshrl.u32 %v2100, 7
        %v2102 = vsub.s32 0, %v2101
        %v2103 = vrot.slane %v2098, %v2102
        %v2104 = vlaneseq
        %v2105 = vshrl.u32 %v2104, 7
        %v2106 = vsub.s32 1, %v2105
        %v2107 = vrot.slane %v2098, %v2106
        %v2114 = vunpack.c.l.b16 %v2094
        %v2115 = vunpack.c.h.b16 %v2094
        %v2116 = vunpack.c.l.b16 %v2095
        %v2117 = vunpack.c.h.b16 %v2095
        %v2118 = vunpack.c.l.b16 %v2096
        %v2119 = vunpack.c.h.b16 %v2096
        %v2120 = vunpack.c.l.b16 %v2097
        %v2121 = vunpack.c.h.b16 %v2097
        %v2122 = vpack.c.b16 %v2116, %v2114
        %v2123 = vpack.c.b16 %v2117, %v2115
        %v2124 = vpack.c.b16 %v2120, %v2118
        %v2125 = vpack.c.b16 %v2121, %v2119
        %vm2130 = vcmask 261120
        %v2132 = vsel %vm2130, %v2086, 0
        %v2135 = vsel %vm2130, %v2087, 0
        %v2138 = vsel %vm2130, %v2088, 0
        %v2141 = vsel %vm2130, %v2089, 0
        %v2144 = vsel %vm2130, %v2090, 0
        %v2147 = vsel %vm2130, %v2091, 0
        %v2150 = vsel %vm2130, %v2092, 0
        %v2153 = vsel %vm2130, %v2093, 0
        %2155 = vmatprep.subr.bf16.mxu0 0
        %2156 = vmatpush1.bf16.msra.mxu0 0
        %2157 = vmatprep.subr.bf16.mxu0 0
        %2158 = vmatpush1.bf16.msra.mxu0 0
        %2159 = vmatprep.subr.bf16.mxu0 0
        %2160 = vmatpush1.bf16.msra.mxu0 0
        %2161 = vmatprep.subr.bf16.mxu0 0
        %2162 = vmatpush1.bf16.msra.mxu0 0
        %2163 = vmatprep.subr.bf16.mxu0 0
        %2164 = vmatpush1.bf16.msra.mxu0 0
        %2165 = vmatprep.subr.bf16.mxu0 0
        %2166 = vmatpush1.bf16.msra.mxu0 0
        %2167 = vmatprep.subr.bf16.mxu0 %v2125
        %2168 = vmatpush1.bf16.msra.mxu0 %v2124
        %2169 = vmatprep.subr.bf16.mxu0 %v2123
        %2170 = vmatpush1.bf16.msra.mxu0 %v2122
        %2171 = vmatprep.subr.bf16.mxu0 0
        %2172 = vmatpush2.bf16.msra.mxu0 0
        %2173 = vmatprep.subr.bf16.mxu0 0
        %2174 = vmatpush2.bf16.msra.mxu0 0
        %2175 = vmatprep.subr.bf16.mxu0 0
        %2176 = vmatpush2.bf16.msra.mxu0 0
        %2177 = vmatprep.subr.bf16.mxu0 0
        %2178 = vmatpush2.bf16.msra.mxu0 0
        %2179 = vmatprep.subr.bf16.mxu0 0
        %2180 = vmatpush2.bf16.msra.mxu0 0
        %2181 = vmatprep.subr.bf16.mxu0 0
        %2182 = vmatpush2.bf16.msra.mxu0 0
        %2183 = vmatprep.subr.bf16.mxu0 0
        %2184 = vmatpush2.bf16.msra.mxu0 0
        %2185 = vmatprep.subr.bf16.mxu0 0
        %2186 = vmatpush2.bf16.msra.mxu0 0
        %2187 = vmatprep.mubr.bf16.mxu0 0
        %2188 = vmatmul.mubr.bf16.gmra.mxu0 %v2132
        %v2189 = vpop.f32.mrf.mxu0
        %v2190 = vadd.f32 %v2103, %v2189
        %v2191 = vpop.f32.mrf.mxu0
        %v2192 = vadd.f32 %v2107, %v2191
        %v2193 = vpop.f32.mrf.mxu0
        %v2194 = vadd.f32 %v2103, %v2193
        %v2195 = vpop.f32.mrf.mxu0
        %v2196 = vadd.f32 %v2107, %v2195
        %2197 = vmatprep.mubr.bf16.mxu0 0
        %2198 = vmatmul.mubr.bf16.gmra.mxu0 %v2135
        %v2199 = vpop.f32.mrf.mxu0
        %v2200 = vadd.f32 %v2103, %v2199
        %v2201 = vpop.f32.mrf.mxu0
        %v2202 = vadd.f32 %v2107, %v2201
        %v2203 = vpop.f32.mrf.mxu0
        %v2204 = vadd.f32 %v2103, %v2203
        %v2205 = vpop.f32.mrf.mxu0
        %v2206 = vadd.f32 %v2107, %v2205
        %2207 = vmatprep.mubr.bf16.mxu0 0
        %2208 = vmatmul.mubr.bf16.gmra.mxu0 %v2138
        %v2209 = vpop.f32.mrf.mxu0
        %v2210 = vadd.f32 %v2103, %v2209
        %v2211 = vpop.f32.mrf.mxu0
        %v2212 = vadd.f32 %v2107, %v2211
        %v2213 = vpop.f32.mrf.mxu0
        %v2214 = vadd.f32 %v2103, %v2213
        %v2215 = vpop.f32.mrf.mxu0
        %v2216 = vadd.f32 %v2107, %v2215
        %2217 = vmatprep.mubr.bf16.mxu0 0
        %2218 = vmatmul.mubr.bf16.gmra.mxu0 %v2141
        %v2219 = vpop.f32.mrf.mxu0
        %v2220 = vadd.f32 %v2103, %v2219
        %v2221 = vpop.f32.mrf.mxu0
        %v2222 = vadd.f32 %v2107, %v2221
        %v2223 = vpop.f32.mrf.mxu0
        %v2224 = vadd.f32 %v2103, %v2223
        %v2225 = vpop.f32.mrf.mxu0
        %v2226 = vadd.f32 %v2107, %v2225
        %2227 = vmatprep.mubr.bf16.mxu0 0
        %2228 = vmatmul.mubr.bf16.gmra.mxu0 %v2144
        %v2229 = vpop.f32.mrf.mxu0
        %v2230 = vadd.f32 %v2103, %v2229
        %v2231 = vpop.f32.mrf.mxu0
        %v2232 = vadd.f32 %v2107, %v2231
        %v2233 = vpop.f32.mrf.mxu0
        %v2234 = vadd.f32 %v2103, %v2233
        %v2235 = vpop.f32.mrf.mxu0
        %v2236 = vadd.f32 %v2107, %v2235
        %2237 = vmatprep.mubr.bf16.mxu0 0
        %2238 = vmatmul.mubr.bf16.gmra.mxu0 %v2147
        %v2239 = vpop.f32.mrf.mxu0
        %v2240 = vadd.f32 %v2103, %v2239
        %v2241 = vpop.f32.mrf.mxu0
        %v2242 = vadd.f32 %v2107, %v2241
        %v2243 = vpop.f32.mrf.mxu0
        %v2244 = vadd.f32 %v2103, %v2243
        %v2245 = vpop.f32.mrf.mxu0
        %v2246 = vadd.f32 %v2107, %v2245
        %2247 = vmatprep.mubr.bf16.mxu0 0
        %2248 = vmatmul.mubr.bf16.gmra.mxu0 %v2150
        %v2249 = vpop.f32.mrf.mxu0
        %v2250 = vadd.f32 %v2103, %v2249
        %v2251 = vpop.f32.mrf.mxu0
        %v2252 = vadd.f32 %v2107, %v2251
        %v2253 = vpop.f32.mrf.mxu0
        %v2254 = vadd.f32 %v2103, %v2253
        %v2255 = vpop.f32.mrf.mxu0
        %v2256 = vadd.f32 %v2107, %v2255
        %2257 = vmatprep.mubr.bf16.mxu0 0
        %2258 = vmatmul.mubr.bf16.gmra.mxu0 %v2153
        %v2259 = vpop.f32.mrf.mxu0
        %v2260 = vadd.f32 %v2103, %v2259
        %v2261 = vpop.f32.mrf.mxu0
        %v2262 = vadd.f32 %v2107, %v2261
        %v2263 = vpop.f32.mrf.mxu0
        %v2264 = vadd.f32 %v2103, %v2263
        %v2265 = vpop.f32.mrf.mxu0
        %v2266 = vadd.f32 %v2107, %v2265
        %2267 = vdwg.mxu0
        %v2268 = vtanh.pop %v2190
        %v2269 = vtanh.pop %v2192
        %v2270 = vtanh.pop %v2194
        %v2271 = vtanh.pop %v2196
        %v2272 = vtanh.pop %v2200
        %v2273 = vtanh.pop %v2202
        %v2274 = vtanh.pop %v2204
        %v2275 = vtanh.pop %v2206
        %v2276 = vtanh.pop %v2210
        %v2277 = vtanh.pop %v2212
        %v2278 = vtanh.pop %v2214
        %v2279 = vtanh.pop %v2216
        %v2280 = vtanh.pop %v2220
        %v2281 = vtanh.pop %v2222
        %v2282 = vtanh.pop %v2224
        %v2283 = vtanh.pop %v2226
        %v2284 = vtanh.pop %v2230
        %v2285 = vtanh.pop %v2232
        %v2286 = vtanh.pop %v2234
        %v2287 = vtanh.pop %v2236
        %v2288 = vtanh.pop %v2240
        %v2289 = vtanh.pop %v2242
        %v2290 = vtanh.pop %v2244
        %v2291 = vtanh.pop %v2246
        %v2292 = vtanh.pop %v2250
        %v2293 = vtanh.pop %v2252
        %v2294 = vtanh.pop %v2254
        %v2295 = vtanh.pop %v2256
        %v2296 = vtanh.pop %v2260
        %v2297 = vtanh.pop %v2262
        %v2298 = vtanh.pop %v2264
        %v2299 = vtanh.pop %v2266
        %v2300 = vpack.c.bf16 %v2270, %v2268
        %v2301 = vpack.c.bf16 %v2271, %v2269
        %v2302 = vpack.c.bf16 %v2274, %v2272
        %v2303 = vpack.c.bf16 %v2275, %v2273
        %v2304 = vpack.c.bf16 %v2278, %v2276
        %v2305 = vpack.c.bf16 %v2279, %v2277
        %v2306 = vpack.c.bf16 %v2282, %v2280
        %v2307 = vpack.c.bf16 %v2283, %v2281
        %v2308 = vpack.c.bf16 %v2286, %v2284
        %v2309 = vpack.c.bf16 %v2287, %v2285
        %v2310 = vpack.c.bf16 %v2290, %v2288
        %v2311 = vpack.c.bf16 %v2291, %v2289
        %v2312 = vpack.c.bf16 %v2294, %v2292
        %v2313 = vpack.c.bf16 %v2295, %v2293
        %v2314 = vpack.c.bf16 %v2298, %v2296
        %v2315 = vpack.c.bf16 %v2299, %v2297
        %v2316 = vld [vmem:[%s8] sm:$0xff]
        %v2317 = vld [vmem:[%s8 + $0x8] sm:$0xff]
        %v2318 = vld [vmem:[%s8 + $0x10] sm:$0xff]
        %v2319 = vld [vmem:[%s8 + $0x18] sm:$0xf]
        %v2320 = vld [vmem:[%s8 + $0x1c] sm:$0xff]
        %v2321 = vld [vmem:[%s8 + $0x24] sm:$0xff]
        %v2322 = vld [vmem:[%s8 + $0x2c] sm:$0xff]
        %v2323 = vld [vmem:[%s8 + $0x34] sm:$0xf]
        %v2324 = vld [vmem:[%s8 + $0x38] sm:$0xff]
        %v2325 = vld [vmem:[%s8 + $0x40] sm:$0xff]
        %v2326 = vld [vmem:[%s8 + $0x48] sm:$0xff]
        %v2327 = vld [vmem:[%s8 + $0x50] sm:$0xf]
        %v2328 = vld [vmem:[%s8 + $0x54] sm:$0xff]
        %v2329 = vld [vmem:[%s8 + $0x5c] sm:$0xff]
        %v2330 = vld [vmem:[%s8 + $0x64] sm:$0xff]
        %v2331 = vld [vmem:[%s8 + $0x6c] sm:$0xf]
        %v2332 = vld [vmem:[%s8 + $0x70] sm:$0xff]
        %v2333 = vld [vmem:[%s8 + $0x78] sm:$0xff]
        %v2334 = vld [vmem:[%s8 + $0x80] sm:$0xff]
        %v2335 = vld [vmem:[%s8 + $0x88] sm:$0xf]
        %v2336 = vld [vmem:[%s8 + $0x8c] sm:$0xff]
        %v2337 = vld [vmem:[%s8 + $0x94] sm:$0xff]
        %v2338 = vld [vmem:[%s8 + $0x9c] sm:$0xff]
        %v2339 = vld [vmem:[%s8 + $0xa4] sm:$0xf]
        %v2340 = vld [vmem:[%s8 + $0xa8] sm:$0xff]
        %v2341 = vld [vmem:[%s8 + $0xb0] sm:$0xff]
        %v2342 = vld [vmem:[%s8 + $0xb8] sm:$0xff]
        %v2343 = vld [vmem:[%s8 + $0xc0] sm:$0xf]
        %v2344 = vld [vmem:[%s8 + $0xc4] sm:$0xff]
        %v2345 = vld [vmem:[%s8 + $0xcc] sm:$0xff]
        %v2346 = vld [vmem:[%s8 + $0xd4] sm:$0xff]
        %v2347 = vld [vmem:[%s8 + $0xdc] sm:$0xf]
        %v2348 = vld [vmem:[%s8 + $0xe0] sm:$0xff]
        %v2349 = vld [vmem:[%s8 + $0xe8] sm:$0xff]
        %v2350 = vld [vmem:[%s8 + $0xf0] sm:$0xff]
        %v2351 = vld [vmem:[%s8 + $0xf8] sm:$0xf]
        %v2352 = vld [vmem:[%s8 + $0xfc] sm:$0xff]
        %v2353 = vld [vmem:[%s8 + $0x104] sm:$0xff]
        %v2354 = vld [vmem:[%s8 + $0x10c] sm:$0xff]
        %v2355 = vld [vmem:[%s8 + $0x114] sm:$0xf]
        %v2356 = vld [vmem:[%s8 + $0x118] sm:$0xff]
        %v2357 = vld [vmem:[%s8 + $0x120] sm:$0xff]
        %v2358 = vld [vmem:[%s8 + $0x128] sm:$0xff]
        %v2359 = vld [vmem:[%s8 + $0x130] sm:$0xf]
        %v2360 = vld [vmem:[%s8 + $0x134] sm:$0xff]
        %v2361 = vld [vmem:[%s8 + $0x13c] sm:$0xff]
        %v2362 = vld [vmem:[%s8 + $0x144] sm:$0xff]
        %v2363 = vld [vmem:[%s8 + $0x14c] sm:$0xf]
        %v2364 = vld [vmem:[%s8 + $0x150] sm:$0xff]
        %v2365 = vld [vmem:[%s8 + $0x158] sm:$0xff]
        %v2366 = vld [vmem:[%s8 + $0x160] sm:$0xff]
        %v2367 = vld [vmem:[%s8 + $0x168] sm:$0xf]
        %v2368 = vld [vmem:[%s8 + $0x16c] sm:$0xff]
        %v2369 = vld [vmem:[%s8 + $0x174] sm:$0xff]
        %v2370 = vld [vmem:[%s8 + $0x17c] sm:$0xff]
        %v2371 = vld [vmem:[%s8 + $0x184] sm:$0xf]
        %v2372 = vld [vmem:[%s8 + $0x188] sm:$0xff]
        %v2373 = vld [vmem:[%s8 + $0x190] sm:$0xff]
        %v2374 = vld [vmem:[%s8 + $0x198] sm:$0xff]
        %v2375 = vld [vmem:[%s8 + $0x1a0] sm:$0xf]
        %v2376 = vld [vmem:[%s8 + $0x1a4] sm:$0xff]
        %v2377 = vld [vmem:[%s8 + $0x1ac] sm:$0xff]
        %v2378 = vld [vmem:[%s8 + $0x1b4] sm:$0xff]
        %v2379 = vld [vmem:[%s8 + $0x1bc] sm:$0xf]
        %v2380 = vld [vmem:[%s8 + $0x1c0] sm:$0xff]
        %v2381 = vld [vmem:[%s8 + $0x1c8] sm:$0xff]
        %v2382 = vld [vmem:[%s8 + $0x1d0] sm:$0xff]
        %v2383 = vld [vmem:[%s8 + $0x1d8] sm:$0xf]
        %v2384 = vld [vmem:[%s8 + $0x1dc] sm:$0xff]
        %v2385 = vld [vmem:[%s8 + $0x1e4] sm:$0xff]
        %v2386 = vld [vmem:[%s8 + $0x1ec] sm:$0xff]
        %v2387 = vld [vmem:[%s8 + $0x1f4] sm:$0xf]
        %v2388 = vld [vmem:[%s8 + $0x1f8] sm:$0xff]
        %v2389 = vld [vmem:[%s8 + $0x200] sm:$0xff]
        %v2390 = vld [vmem:[%s8 + $0x208] sm:$0xff]
        %v2391 = vld [vmem:[%s8 + $0x210] sm:$0xf]
        %v2392 = vld [vmem:[%s8 + $0x214] sm:$0xff]
        %v2393 = vld [vmem:[%s8 + $0x21c] sm:$0xff]
        %v2394 = vld [vmem:[%s8 + $0x224] sm:$0xff]
        %v2395 = vld [vmem:[%s8 + $0x22c] sm:$0xf]
        %v2396 = vld [vmem:[%s8 + $0x230] sm:$0xff]
        %v2397 = vld [vmem:[%s8 + $0x238] sm:$0xff]
        %v2398 = vld [vmem:[%s8 + $0x240] sm:$0xff]
        %v2399 = vld [vmem:[%s8 + $0x248] sm:$0xf]
        %v2400 = vld [vmem:[%s8 + $0x24c] sm:$0xff]
        %v2401 = vld [vmem:[%s8 + $0x254] sm:$0xff]
        %v2402 = vld [vmem:[%s8 + $0x25c] sm:$0xff]
        %v2403 = vld [vmem:[%s8 + $0x264] sm:$0xf]
        %v2404 = vld [vmem:[%s8 + $0x268] sm:$0xff]
        %v2405 = vld [vmem:[%s8 + $0x270] sm:$0xff]
        %v2406 = vld [vmem:[%s8 + $0x278] sm:$0xff]
        %v2407 = vld [vmem:[%s8 + $0x280] sm:$0xf]
        %v2408 = vld [vmem:[%s8 + $0x284] sm:$0xff]
        %v2409 = vld [vmem:[%s8 + $0x28c] sm:$0xff]
        %v2410 = vld [vmem:[%s8 + $0x294] sm:$0xff]
        %v2411 = vld [vmem:[%s8 + $0x29c] sm:$0xf]
        %v2412 = vld [vmem:[%s8 + $0x2a0] sm:$0xff]
        %v2413 = vld [vmem:[%s8 + $0x2a8] sm:$0xff]
        %v2414 = vld [vmem:[%s8 + $0x2b0] sm:$0xff]
        %v2415 = vld [vmem:[%s8 + $0x2b8] sm:$0xf]
        %v2416 = vld [vmem:[%s8 + $0x2bc] sm:$0xff]
        %v2417 = vld [vmem:[%s8 + $0x2c4] sm:$0xff]
        %v2418 = vld [vmem:[%s8 + $0x2cc] sm:$0xff]
        %v2419 = vld [vmem:[%s8 + $0x2d4] sm:$0xf]
        %v2420 = vld [vmem:[%s8 + $0x2d8] sm:$0xff]
        %v2421 = vld [vmem:[%s8 + $0x2e0] sm:$0xff]
        %v2422 = vld [vmem:[%s8 + $0x2e8] sm:$0xff]
        %v2423 = vld [vmem:[%s8 + $0x2f0] sm:$0xf]
        %v2424 = vld [vmem:[%s8 + $0x2f4] sm:$0xff]
        %v2425 = vld [vmem:[%s8 + $0x2fc] sm:$0xff]
        %v2426 = vld [vmem:[%s8 + $0x304] sm:$0xff]
        %v2427 = vld [vmem:[%s8 + $0x30c] sm:$0xf]
        %v2428 = vld [vmem:[%s8 + $0x310] sm:$0xff]
        %v2429 = vld [vmem:[%s8 + $0x318] sm:$0xff]
        %v2430 = vld [vmem:[%s8 + $0x320] sm:$0xff]
        %v2431 = vld [vmem:[%s8 + $0x328] sm:$0xf]
        %v2432 = vld [vmem:[%s8 + $0x32c] sm:$0xff]
        %v2433 = vld [vmem:[%s8 + $0x334] sm:$0xff]
        %v2434 = vld [vmem:[%s8 + $0x33c] sm:$0xff]
        %v2435 = vld [vmem:[%s8 + $0x344] sm:$0xf]
        %v2436 = vld [vmem:[%s8 + $0x348] sm:$0xff]
        %v2437 = vld [vmem:[%s8 + $0x350] sm:$0xff]
        %v2438 = vld [vmem:[%s8 + $0x358] sm:$0xff]
        %v2439 = vld [vmem:[%s8 + $0x360] sm:$0xf]
        %v2440 = vld [vmem:[%s8 + $0x364] sm:$0xff]
        %v2441 = vld [vmem:[%s8 + $0x36c] sm:$0xff]
        %v2442 = vld [vmem:[%s8 + $0x374] sm:$0xff]
        %v2443 = vld [vmem:[%s8 + $0x37c] sm:$0xf]
        %v2444 = vld [vmem:[%s9] sm:$0x7f]
        %v2446 = vlaneseq
        %v2447 = vshrl.u32 %v2446, 7
        %v2448 = vsub.s32 0, %v2447
        %v2449 = vrot.slane %v2444, %v2448
        %v2450 = vlaneseq
        %v2451 = vshrl.u32 %v2450, 7
        %v2452 = vsub.s32 1, %v2451
        %v2453 = vrot.slane %v2444, %v2452
        %v2454 = vlaneseq
        %v2455 = vshrl.u32 %v2454, 7
        %v2456 = vsub.s32 2, %v2455
        %v2457 = vrot.slane %v2444, %v2456
        %v2458 = vlaneseq
        %v2459 = vshrl.u32 %v2458, 7
        %v2460 = vsub.s32 3, %v2459
        %v2461 = vrot.slane %v2444, %v2460
        %v2462 = vlaneseq
        %v2463 = vshrl.u32 %v2462, 7
        %v2464 = vsub.s32 4, %v2463
        %v2465 = vrot.slane %v2444, %v2464
        %v2466 = vlaneseq
        %v2467 = vshrl.u32 %v2466, 7
        %v2468 = vsub.s32 5, %v2467
        %v2469 = vrot.slane %v2444, %v2468
        %v2470 = vlaneseq
        %v2471 = vshrl.u32 %v2470, 7
        %v2472 = vsub.s32 6, %v2471
        %v2473 = vrot.slane %v2444, %v2472
        %v2609 = vunpack.c.l.b16 %v2316
        %v2610 = vunpack.c.h.b16 %v2316
        %v2611 = vunpack.c.l.b16 %v2317
        %v2612 = vunpack.c.h.b16 %v2317
        %v2613 = vunpack.c.l.b16 %v2318
        %v2614 = vunpack.c.h.b16 %v2318
        %v2615 = vunpack.c.l.b16 %v2319
        %v2616 = vunpack.c.l.b16 %v2320
        %v2617 = vunpack.c.h.b16 %v2320
        %v2618 = vunpack.c.l.b16 %v2321
        %v2619 = vunpack.c.h.b16 %v2321
        %v2620 = vunpack.c.l.b16 %v2322
        %v2621 = vunpack.c.h.b16 %v2322
        %v2622 = vunpack.c.l.b16 %v2323
        %v2623 = vunpack.c.l.b16 %v2324
        %v2624 = vunpack.c.h.b16 %v2324
        %v2625 = vunpack.c.l.b16 %v2325
        %v2626 = vunpack.c.h.b16 %v2325
        %v2627 = vunpack.c.l.b16 %v2326
        %v2628 = vunpack.c.h.b16 %v2326
        %v2629 = vunpack.c.l.b16 %v2327
        %v2630 = vunpack.c.l.b16 %v2328
        %v2631 = vunpack.c.h.b16 %v2328
        %v2632 = vunpack.c.l.b16 %v2329
        %v2633 = vunpack.c.h.b16 %v2329
        %v2634 = vunpack.c.l.b16 %v2330
        %v2635 = vunpack.c.h.b16 %v2330
        %v2636 = vunpack.c.l.b16 %v2331
        %v2637 = vunpack.c.l.b16 %v2332
        %v2638 = vunpack.c.h.b16 %v2332
        %v2639 = vunpack.c.l.b16 %v2333
        %v2640 = vunpack.c.h.b16 %v2333
        %v2641 = vunpack.c.l.b16 %v2334
        %v2642 = vunpack.c.h.b16 %v2334
        %v2643 = vunpack.c.l.b16 %v2335
        %v2644 = vunpack.c.l.b16 %v2336
        %v2645 = vunpack.c.h.b16 %v2336
        %v2646 = vunpack.c.l.b16 %v2337
        %v2647 = vunpack.c.h.b16 %v2337
        %v2648 = vunpack.c.l.b16 %v2338
        %v2649 = vunpack.c.h.b16 %v2338
        %v2650 = vunpack.c.l.b16 %v2339
        %v2651 = vunpack.c.l.b16 %v2340
        %v2652 = vunpack.c.h.b16 %v2340
        %v2653 = vunpack.c.l.b16 %v2341
        %v2654 = vunpack.c.h.b16 %v2341
        %v2655 = vunpack.c.l.b16 %v2342
        %v2656 = vunpack.c.h.b16 %v2342
        %v2657 = vunpack.c.l.b16 %v2343
        %v2658 = vunpack.c.l.b16 %v2344
        %v2659 = vunpack.c.h.b16 %v2344
        %v2660 = vunpack.c.l.b16 %v2345
        %v2661 = vunpack.c.h.b16 %v2345
        %v2662 = vunpack.c.l.b16 %v2346
        %v2663 = vunpack.c.h.b16 %v2346
        %v2664 = vunpack.c.l.b16 %v2347
        %v2665 = vunpack.c.l.b16 %v2348
        %v2666 = vunpack.c.h.b16 %v2348
        %v2667 = vunpack.c.l.b16 %v2349
        %v2668 = vunpack.c.h.b16 %v2349
        %v2669 = vunpack.c.l.b16 %v2350
        %v2670 = vunpack.c.h.b16 %v2350
        %v2671 = vunpack.c.l.b16 %v2351
        %v2672 = vunpack.c.l.b16 %v2352
        %v2673 = vunpack.c.h.b16 %v2352
        %v2674 = vunpack.c.l.b16 %v2353
        %v2675 = vunpack.c.h.b16 %v2353
        %v2676 = vunpack.c.l.b16 %v2354
        %v2677 = vunpack.c.h.b16 %v2354
        %v2678 = vunpack.c.l.b16 %v2355
        %v2679 = vunpack.c.l.b16 %v2356
        %v2680 = vunpack.c.h.b16 %v2356
        %v2681 = vunpack.c.l.b16 %v2357
        %v2682 = vunpack.c.h.b16 %v2357
        %v2683 = vunpack.c.l.b16 %v2358
        %v2684 = vunpack.c.h.b16 %v2358
        %v2685 = vunpack.c.l.b16 %v2359
        %v2686 = vunpack.c.l.b16 %v2360
        %v2687 = vunpack.c.h.b16 %v2360
        %v2688 = vunpack.c.l.b16 %v2361
        %v2689 = vunpack.c.h.b16 %v2361
        %v2690 = vunpack.c.l.b16 %v2362
        %v2691 = vunpack.c.h.b16 %v2362
        %v2692 = vunpack.c.l.b16 %v2363
        %v2693 = vunpack.c.l.b16 %v2364
        %v2694 = vunpack.c.h.b16 %v2364
        %v2695 = vunpack.c.l.b16 %v2365
        %v2696 = vunpack.c.h.b16 %v2365
        %v2697 = vunpack.c.l.b16 %v2366
        %v2698 = vunpack.c.h.b16 %v2366
        %v2699 = vunpack.c.l.b16 %v2367
        %v2700 = vunpack.c.l.b16 %v2368
        %v2701 = vunpack.c.h.b16 %v2368
        %v2702 = vunpack.c.l.b16 %v2369
        %v2703 = vunpack.c.h.b16 %v2369
        %v2704 = vunpack.c.l.b16 %v2370
        %v2705 = vunpack.c.h.b16 %v2370
        %v2706 = vunpack.c.l.b16 %v2371
        %v2707 = vunpack.c.l.b16 %v2372
        %v2708 = vunpack.c.h.b16 %v2372
        %v2709 = vunpack.c.l.b16 %v2373
        %v2710 = vunpack.c.h.b16 %v2373
        %v2711 = vunpack.c.l.b16 %v2374
        %v2712 = vunpack.c.h.b16 %v2374
        %v2713 = vunpack.c.l.b16 %v2375
        %v2714 = vunpack.c.l.b16 %v2376
        %v2715 = vunpack.c.h.b16 %v2376
        %v2716 = vunpack.c.l.b16 %v2377
        %v2717 = vunpack.c.h.b16 %v2377
        %v2718 = vunpack.c.l.b16 %v2378
        %v2719 = vunpack.c.h.b16 %v2378
        %v2720 = vunpack.c.l.b16 %v2379
        %v2721 = vunpack.c.l.b16 %v2380
        %v2722 = vunpack.c.h.b16 %v2380
        %v2723 = vunpack.c.l.b16 %v2381
        %v2724 = vunpack.c.h.b16 %v2381
        %v2725 = vunpack.c.l.b16 %v2382
        %v2726 = vunpack.c.h.b16 %v2382
        %v2727 = vunpack.c.l.b16 %v2383
        %v2728 = vunpack.c.l.b16 %v2384
        %v2729 = vunpack.c.h.b16 %v2384
        %v2730 = vunpack.c.l.b16 %v2385
        %v2731 = vunpack.c.h.b16 %v2385
        %v2732 = vunpack.c.l.b16 %v2386
        %v2733 = vunpack.c.h.b16 %v2386
        %v2734 = vunpack.c.l.b16 %v2387
        %v2735 = vunpack.c.l.b16 %v2388
        %v2736 = vunpack.c.h.b16 %v2388
        %v2737 = vunpack.c.l.b16 %v2389
        %v2738 = vunpack.c.h.b16 %v2389
        %v2739 = vunpack.c.l.b16 %v2390
        %v2740 = vunpack.c.h.b16 %v2390
        %v2741 = vunpack.c.l.b16 %v2391
        %v2742 = vunpack.c.l.b16 %v2392
        %v2743 = vunpack.c.h.b16 %v2392
        %v2744 = vunpack.c.l.b16 %v2393
        %v2745 = vunpack.c.h.b16 %v2393
        %v2746 = vunpack.c.l.b16 %v2394
        %v2747 = vunpack.c.h.b16 %v2394
        %v2748 = vunpack.c.l.b16 %v2395
        %v2749 = vunpack.c.l.b16 %v2396
        %v2750 = vunpack.c.h.b16 %v2396
        %v2751 = vunpack.c.l.b16 %v2397
        %v2752 = vunpack.c.h.b16 %v2397
        %v2753 = vunpack.c.l.b16 %v2398
        %v2754 = vunpack.c.h.b16 %v2398
        %v2755 = vunpack.c.l.b16 %v2399
        %v2756 = vunpack.c.l.b16 %v2400
        %v2757 = vunpack.c.h.b16 %v2400
        %v2758 = vunpack.c.l.b16 %v2401
        %v2759 = vunpack.c.h.b16 %v2401
        %v2760 = vunpack.c.l.b16 %v2402
        %v2761 = vunpack.c.h.b16 %v2402
        %v2762 = vunpack.c.l.b16 %v2403
        %v2763 = vunpack.c.l.b16 %v2404
        %v2764 = vunpack.c.h.b16 %v2404
        %v2765 = vunpack.c.l.b16 %v2405
        %v2766 = vunpack.c.h.b16 %v2405
        %v2767 = vunpack.c.l.b16 %v2406
        %v2768 = vunpack.c.h.b16 %v2406
        %v2769 = vunpack.c.l.b16 %v2407
        %v2770 = vunpack.c.l.b16 %v2408
        %v2771 = vunpack.c.h.b16 %v2408
        %v2772 = vunpack.c.l.b16 %v2409
        %v2773 = vunpack.c.h.b16 %v2409
        %v2774 = vunpack.c.l.b16 %v2410
        %v2775 = vunpack.c.h.b16 %v2410
        %v2776 = vunpack.c.l.b16 %v2411
        %v2777 = vunpack.c.l.b16 %v2412
        %v2778 = vunpack.c.h.b16 %v2412
        %v2779 = vunpack.c.l.b16 %v2413
        %v2780 = vunpack.c.h.b16 %v2413
        %v2781 = vunpack.c.l.b16 %v2414
        %v2782 = vunpack.c.h.b16 %v2414
        %v2783 = vunpack.c.l.b16 %v2415
        %v2784 = vunpack.c.l.b16 %v2416
        %v2785 = vunpack.c.h.b16 %v2416
        %v2786 = vunpack.c.l.b16 %v2417
        %v2787 = vunpack.c.h.b16 %v2417
        %v2788 = vunpack.c.l.b16 %v2418
        %v2789 = vunpack.c.h.b16 %v2418
        %v2790 = vunpack.c.l.b16 %v2419
        %v2791 = vunpack.c.l.b16 %v2420
        %v2792 = vunpack.c.h.b16 %v2420
        %v2793 = vunpack.c.l.b16 %v2421
        %v2794 = vunpack.c.h.b16 %v2421
        %v2795 = vunpack.c.l.b16 %v2422
        %v2796 = vunpack.c.h.b16 %v2422
        %v2797 = vunpack.c.l.b16 %v2423
        %v2798 = vunpack.c.l.b16 %v2424
        %v2799 = vunpack.c.h.b16 %v2424
        %v2800 = vunpack.c.l.b16 %v2425
        %v2801 = vunpack.c.h.b16 %v2425
        %v2802 = vunpack.c.l.b16 %v2426
        %v2803 = vunpack.c.h.b16 %v2426
        %v2804 = vunpack.c.l.b16 %v2427
        %v2805 = vunpack.c.l.b16 %v2428
        %v2806 = vunpack.c.h.b16 %v2428
        %v2807 = vunpack.c.l.b16 %v2429
        %v2808 = vunpack.c.h.b16 %v2429
        %v2809 = vunpack.c.l.b16 %v2430
        %v2810 = vunpack.c.h.b16 %v2430
        %v2811 = vunpack.c.l.b16 %v2431
        %v2812 = vunpack.c.l.b16 %v2432
        %v2813 = vunpack.c.h.b16 %v2432
        %v2814 = vunpack.c.l.b16 %v2433
        %v2815 = vunpack.c.h.b16 %v2433
        %v2816 = vunpack.c.l.b16 %v2434
        %v2817 = vunpack.c.h.b16 %v2434
        %v2818 = vunpack.c.l.b16 %v2435
        %v2819 = vunpack.c.l.b16 %v2436
        %v2820 = vunpack.c.h.b16 %v2436
        %v2821 = vunpack.c.l.b16 %v2437
        %v2822 = vunpack.c.h.b16 %v2437
        %v2823 = vunpack.c.l.b16 %v2438
        %v2824 = vunpack.c.h.b16 %v2438
        %v2825 = vunpack.c.l.b16 %v2439
        %v2826 = vunpack.c.l.b16 %v2440
        %v2827 = vunpack.c.h.b16 %v2440
        %v2828 = vunpack.c.l.b16 %v2441
        %v2829 = vunpack.c.h.b16 %v2441
        %v2830 = vunpack.c.l.b16 %v2442
        %v2831 = vunpack.c.h.b16 %v2442
        %v2832 = vunpack.c.l.b16 %v2443
        %v2833 = vpack.c.b16 %v2616, %v2609
        %v2834 = vpack.c.b16 %v2617, %v2610
        %v2835 = vpack.c.b16 %v2618, %v2611
        %v2836 = vpack.c.b16 %v2619, %v2612
        %v2837 = vpack.c.b16 %v2620, %v2613
        %v2838 = vpack.c.b16 %v2621, %v2614
        %v2839 = vpack.c.b16 %v2622, %v2615
        %v2840 = vpack.c.b16 %v2630, %v2623
        %v2841 = vpack.c.b16 %v2631, %v2624
        %v2842 = vpack.c.b16 %v2632, %v2625
        %v2843 = vpack.c.b16 %v2633, %v2626
        %v2844 = vpack.c.b16 %v2634, %v2627
        %v2845 = vpack.c.b16 %v2635, %v2628
        %v2846 = vpack.c.b16 %v2636, %v2629
        %v2847 = vpack.c.b16 %v2644, %v2637
        %v2848 = vpack.c.b16 %v2645, %v2638
        %v2849 = vpack.c.b16 %v2646, %v2639
        %v2850 = vpack.c.b16 %v2647, %v2640
        %v2851 = vpack.c.b16 %v2648, %v2641
        %v2852 = vpack.c.b16 %v2649, %v2642
        %v2853 = vpack.c.b16 %v2650, %v2643
        %v2854 = vpack.c.b16 %v2658, %v2651
        %v2855 = vpack.c.b16 %v2659, %v2652
        %v2856 = vpack.c.b16 %v2660, %v2653
        %v2857 = vpack.c.b16 %v2661, %v2654
        %v2858 = vpack.c.b16 %v2662, %v2655
        %v2859 = vpack.c.b16 %v2663, %v2656
        %v2860 = vpack.c.b16 %v2664, %v2657
        %v2861 = vpack.c.b16 %v2672, %v2665
        %v2862 = vpack.c.b16 %v2673, %v2666
        %v2863 = vpack.c.b16 %v2674, %v2667
        %v2864 = vpack.c.b16 %v2675, %v2668
        %v2865 = vpack.c.b16 %v2676, %v2669
        %v2866 = vpack.c.b16 %v2677, %v2670
        %v2867 = vpack.c.b16 %v2678, %v2671
        %v2868 = vpack.c.b16 %v2686, %v2679
        %v2869 = vpack.c.b16 %v2687, %v2680
        %v2870 = vpack.c.b16 %v2688, %v2681
        %v2871 = vpack.c.b16 %v2689, %v2682
        %v2872 = vpack.c.b16 %v2690, %v2683
        %v2873 = vpack.c.b16 %v2691, %v2684
        %v2874 = vpack.c.b16 %v2692, %v2685
        %v2875 = vpack.c.b16 %v2700, %v2693
        %v2876 = vpack.c.b16 %v2701, %v2694
        %v2877 = vpack.c.b16 %v2702, %v2695
        %v2878 = vpack.c.b16 %v2703, %v2696
        %v2879 = vpack.c.b16 %v2704, %v2697
        %v2880 = vpack.c.b16 %v2705, %v2698
        %v2881 = vpack.c.b16 %v2706, %v2699
        %v2882 = vpack.c.b16 %v2714, %v2707
        %v2883 = vpack.c.b16 %v2715, %v2708
        %v2884 = vpack.c.b16 %v2716, %v2709
        %v2885 = vpack.c.b16 %v2717, %v2710
        %v2886 = vpack.c.b16 %v2718, %v2711
        %v2887 = vpack.c.b16 %v2719, %v2712
        %v2888 = vpack.c.b16 %v2720, %v2713
        %v2889 = vpack.c.b16 %v2728, %v2721
        %v2890 = vpack.c.b16 %v2729, %v2722
        %v2891 = vpack.c.b16 %v2730, %v2723
        %v2892 = vpack.c.b16 %v2731, %v2724
        %v2893 = vpack.c.b16 %v2732, %v2725
        %v2894 = vpack.c.b16 %v2733, %v2726
        %v2895 = vpack.c.b16 %v2734, %v2727
        %v2896 = vpack.c.b16 %v2742, %v2735
        %v2897 = vpack.c.b16 %v2743, %v2736
        %v2898 = vpack.c.b16 %v2744, %v2737
        %v2899 = vpack.c.b16 %v2745, %v2738
        %v2900 = vpack.c.b16 %v2746, %v2739
        %v2901 = vpack.c.b16 %v2747, %v2740
        %v2902 = vpack.c.b16 %v2748, %v2741
        %v2903 = vpack.c.b16 %v2756, %v2749
        %v2904 = vpack.c.b16 %v2757, %v2750
        %v2905 = vpack.c.b16 %v2758, %v2751
        %v2906 = vpack.c.b16 %v2759, %v2752
        %v2907 = vpack.c.b16 %v2760, %v2753
        %v2908 = vpack.c.b16 %v2761, %v2754
        %v2909 = vpack.c.b16 %v2762, %v2755
        %v2910 = vpack.c.b16 %v2770, %v2763
        %v2911 = vpack.c.b16 %v2771, %v2764
        %v2912 = vpack.c.b16 %v2772, %v2765
        %v2913 = vpack.c.b16 %v2773, %v2766
        %v2914 = vpack.c.b16 %v2774, %v2767
        %v2915 = vpack.c.b16 %v2775, %v2768
        %v2916 = vpack.c.b16 %v2776, %v2769
        %v2917 = vpack.c.b16 %v2784, %v2777
        %v2918 = vpack.c.b16 %v2785, %v2778
        %v2919 = vpack.c.b16 %v2786, %v2779
        %v2920 = vpack.c.b16 %v2787, %v2780
        %v2921 = vpack.c.b16 %v2788, %v2781
        %v2922 = vpack.c.b16 %v2789, %v2782
        %v2923 = vpack.c.b16 %v2790, %v2783
        %v2924 = vpack.c.b16 %v2798, %v2791
        %v2925 = vpack.c.b16 %v2799, %v2792
        %v2926 = vpack.c.b16 %v2800, %v2793
        %v2927 = vpack.c.b16 %v2801, %v2794
        %v2928 = vpack.c.b16 %v2802, %v2795
        %v2929 = vpack.c.b16 %v2803, %v2796
        %v2930 = vpack.c.b16 %v2804, %v2797
        %v2931 = vpack.c.b16 %v2812, %v2805
        %v2932 = vpack.c.b16 %v2813, %v2806
        %v2933 = vpack.c.b16 %v2814, %v2807
        %v2934 = vpack.c.b16 %v2815, %v2808
        %v2935 = vpack.c.b16 %v2816, %v2809
        %v2936 = vpack.c.b16 %v2817, %v2810
        %v2937 = vpack.c.b16 %v2818, %v2811
        %v2938 = vpack.c.b16 %v2826, %v2819
        %v2939 = vpack.c.b16 %v2827, %v2820
        %v2940 = vpack.c.b16 %v2828, %v2821
        %v2941 = vpack.c.b16 %v2829, %v2822
        %v2942 = vpack.c.b16 %v2830, %v2823
        %v2943 = vpack.c.b16 %v2831, %v2824
        %v2944 = vpack.c.b16 %v2832, %v2825
        %3057 = vmatprep.subr.bf16.mxu0 %v2883
        %3058 = vmatpush1.bf16.msra.mxu0 %v2882
        %3059 = vmatprep.subr.bf16.mxu0 %v2876
        %3060 = vmatpush1.bf16.msra.mxu0 %v2875
        %3061 = vmatprep.subr.bf16.mxu0 %v2869
        %3062 = vmatpush1.bf16.msra.mxu0 %v2868
        %3063 = vmatprep.subr.bf16.mxu0 %v2862
        %3064 = vmatpush1.bf16.msra.mxu0 %v2861
        %3065 = vmatprep.subr.bf16.mxu0 %v2855
        %3066 = vmatpush1.bf16.msra.mxu0 %v2854
        %3067 = vmatprep.subr.bf16.mxu0 %v2848
        %3068 = vmatpush1.bf16.msra.mxu0 %v2847
        %3069 = vmatprep.subr.bf16.mxu0 %v2841
        %3070 = vmatpush1.bf16.msra.mxu0 %v2840
        %3071 = vmatprep.subr.bf16.mxu0 %v2834
        %3072 = vmatpush1.bf16.msra.mxu0 %v2833
        %3073 = vmatprep.subr.bf16.mxu0 %v2939
        %3074 = vmatpush2.bf16.msra.mxu0 %v2938
        %3075 = vmatprep.subr.bf16.mxu0 %v2932
        %3076 = vmatpush2.bf16.msra.mxu0 %v2931
        %3077 = vmatprep.subr.bf16.mxu0 %v2925
        %3078 = vmatpush2.bf16.msra.mxu0 %v2924
        %3079 = vmatprep.subr.bf16.mxu0 %v2918
        %3080 = vmatpush2.bf16.msra.mxu0 %v2917
        %3081 = vmatprep.subr.bf16.mxu0 %v2911
        %3082 = vmatpush2.bf16.msra.mxu0 %v2910
        %3083 = vmatprep.subr.bf16.mxu0 %v2904
        %3084 = vmatpush2.bf16.msra.mxu0 %v2903
        %3085 = vmatprep.subr.bf16.mxu0 %v2897
        %3086 = vmatpush2.bf16.msra.mxu0 %v2896
        %3087 = vmatprep.subr.bf16.mxu0 %v2890
        %3088 = vmatpush2.bf16.msra.mxu0 %v2889
        %3089 = vmatprep.mubr.bf16.mxu0 %v2301
        %3090 = vmatmul.mubr.bf16.gmra.mxu0 %v2300
        %v3091 = vpop.f32.mrf.mxu0
        %v3092 = vadd.f32 %v2449, %v3091
        %v3093 = vpop.f32.mrf.mxu0
        %v3094 = vadd.f32 %v2453, %v3093
        %v3095 = vpop.f32.mrf.mxu0
        %v3096 = vadd.f32 %v2449, %v3095
        %v3097 = vpop.f32.mrf.mxu0
        %v3098 = vadd.f32 %v2453, %v3097
        %3099 = vmatprep.mubr.bf16.mxu0 %v2303
        %3100 = vmatmul.mubr.bf16.gmra.mxu0 %v2302
        %v3101 = vpop.f32.mrf.mxu0
        %v3102 = vadd.f32 %v2449, %v3101
        %v3103 = vpop.f32.mrf.mxu0
        %v3104 = vadd.f32 %v2453, %v3103
        %v3105 = vpop.f32.mrf.mxu0
        %v3106 = vadd.f32 %v2449, %v3105
        %v3107 = vpop.f32.mrf.mxu0
        %v3108 = vadd.f32 %v2453, %v3107
        %3109 = vmatprep.mubr.bf16.mxu0 %v2305
        %3110 = vmatmul.mubr.bf16.gmra.mxu0 %v2304
        %v3111 = vpop.f32.mrf.mxu0
        %v3112 = vadd.f32 %v2449, %v3111
        %v3113 = vpop.f32.mrf.mxu0
        %v3114 = vadd.f32 %v2453, %v3113
        %v3115 = vpop.f32.mrf.mxu0
        %v3116 = vadd.f32 %v2449, %v3115
        %v3117 = vpop.f32.mrf.mxu0
        %v3118 = vadd.f32 %v2453, %v3117
        %3119 = vmatprep.mubr.bf16.mxu0 %v2307
        %3120 = vmatmul.mubr.bf16.gmra.mxu0 %v2306
        %v3121 = vpop.f32.mrf.mxu0
        %v3122 = vadd.f32 %v2449, %v3121
        %v3123 = vpop.f32.mrf.mxu0
        %v3124 = vadd.f32 %v2453, %v3123
        %v3125 = vpop.f32.mrf.mxu0
        %v3126 = vadd.f32 %v2449, %v3125
        %v3127 = vpop.f32.mrf.mxu0
        %v3128 = vadd.f32 %v2453, %v3127
        %3129 = vmatprep.mubr.bf16.mxu0 %v2309
        %3130 = vmatmul.mubr.bf16.gmra.mxu0 %v2308
        %v3131 = vpop.f32.mrf.mxu0
        %v3132 = vadd.f32 %v2449, %v3131
        %v3133 = vpop.f32.mrf.mxu0
        %v3134 = vadd.f32 %v2453, %v3133
        %v3135 = vpop.f32.mrf.mxu0
        %v3136 = vadd.f32 %v2449, %v3135
        %v3137 = vpop.f32.mrf.mxu0
        %v3138 = vadd.f32 %v2453, %v3137
        %3139 = vmatprep.mubr.bf16.mxu0 %v2311
        %3140 = vmatmul.mubr.bf16.gmra.mxu0 %v2310
        %v3141 = vpop.f32.mrf.mxu0
        %v3142 = vadd.f32 %v2449, %v3141
        %v3143 = vpop.f32.mrf.mxu0
        %v3144 = vadd.f32 %v2453, %v3143
        %v3145 = vpop.f32.mrf.mxu0
        %v3146 = vadd.f32 %v2449, %v3145
        %v3147 = vpop.f32.mrf.mxu0
        %v3148 = vadd.f32 %v2453, %v3147
        %3149 = vmatprep.mubr.bf16.mxu0 %v2313
        %3150 = vmatmul.mubr.bf16.gmra.mxu0 %v2312
        %v3151 = vpop.f32.mrf.mxu0
        %v3152 = vadd.f32 %v2449, %v3151
        %v3153 = vpop.f32.mrf.mxu0
        %v3154 = vadd.f32 %v2453, %v3153
        %v3155 = vpop.f32.mrf.mxu0
        %v3156 = vadd.f32 %v2449, %v3155
        %v3157 = vpop.f32.mrf.mxu0
        %v3158 = vadd.f32 %v2453, %v3157
        %3159 = vmatprep.mubr.bf16.mxu0 %v2315
        %3160 = vmatmul.mubr.bf16.gmra.mxu0 %v2314
        %v3161 = vpop.f32.mrf.mxu0
        %v3162 = vadd.f32 %v2449, %v3161
        %v3163 = vpop.f32.mrf.mxu0
        %v3164 = vadd.f32 %v2453, %v3163
        %v3165 = vpop.f32.mrf.mxu0
        %v3166 = vadd.f32 %v2449, %v3165
        %v3167 = vpop.f32.mrf.mxu0
        %v3168 = vadd.f32 %v2453, %v3167
        %3169 = vdwg.mxu0
        %3170 = vmatprep.subr.bf16.mxu0 %v2885
        %3171 = vmatpush1.bf16.msra.mxu0 %v2884
        %3172 = vmatprep.subr.bf16.mxu0 %v2878
        %3173 = vmatpush1.bf16.msra.mxu0 %v2877
        %3174 = vmatprep.subr.bf16.mxu0 %v2871
        %3175 = vmatpush1.bf16.msra.mxu0 %v2870
        %3176 = vmatprep.subr.bf16.mxu0 %v2864
        %3177 = vmatpush1.bf16.msra.mxu0 %v2863
        %3178 = vmatprep.subr.bf16.mxu0 %v2857
        %3179 = vmatpush1.bf16.msra.mxu0 %v2856
        %3180 = vmatprep.subr.bf16.mxu0 %v2850
        %3181 = vmatpush1.bf16.msra.mxu0 %v2849
        %3182 = vmatprep.subr.bf16.mxu0 %v2843
        %3183 = vmatpush1.bf16.msra.mxu0 %v2842
        %3184 = vmatprep.subr.bf16.mxu0 %v2836
        %3185 = vmatpush1.bf16.msra.mxu0 %v2835
        %3186 = vmatprep.subr.bf16.mxu0 %v2941
        %3187 = vmatpush2.bf16.msra.mxu0 %v2940
        %3188 = vmatprep.subr.bf16.mxu0 %v2934
        %3189 = vmatpush2.bf16.msra.mxu0 %v2933
        %3190 = vmatprep.subr.bf16.mxu0 %v2927
        %3191 = vmatpush2.bf16.msra.mxu0 %v2926
        %3192 = vmatprep.subr.bf16.mxu0 %v2920
        %3193 = vmatpush2.bf16.msra.mxu0 %v2919
        %3194 = vmatprep.subr.bf16.mxu0 %v2913
        %3195 = vmatpush2.bf16.msra.mxu0 %v2912
        %3196 = vmatprep.subr.bf16.mxu0 %v2906
        %3197 = vmatpush2.bf16.msra.mxu0 %v2905
        %3198 = vmatprep.subr.bf16.mxu0 %v2899
        %3199 = vmatpush2.bf16.msra.mxu0 %v2898
        %3200 = vmatprep.subr.bf16.mxu0 %v2892
        %3201 = vmatpush2.bf16.msra.mxu0 %v2891
        %3202 = vmatprep.mubr.bf16.mxu0 %v2301
        %3203 = vmatmul.mubr.bf16.gmra.mxu0 %v2300
        %v3204 = vpop.f32.mrf.mxu0
        %v3205 = vadd.f32 %v2457, %v3204
        %v3206 = vpop.f32.mrf.mxu0
        %v3207 = vadd.f32 %v2461, %v3206
        %v3208 = vpop.f32.mrf.mxu0
        %v3209 = vadd.f32 %v2457, %v3208
        %v3210 = vpop.f32.mrf.mxu0
        %v3211 = vadd.f32 %v2461, %v3210
        %3212 = vmatprep.mubr.bf16.mxu0 %v2303
        %3213 = vmatmul.mubr.bf16.gmra.mxu0 %v2302
        %v3214 = vpop.f32.mrf.mxu0
        %v3215 = vadd.f32 %v2457, %v3214
        %v3216 = vpop.f32.mrf.mxu0
        %v3217 = vadd.f32 %v2461, %v3216
        %v3218 = vpop.f32.mrf.mxu0
        %v3219 = vadd.f32 %v2457, %v3218
        %v3220 = vpop.f32.mrf.mxu0
        %v3221 = vadd.f32 %v2461, %v3220
        %3222 = vmatprep.mubr.bf16.mxu0 %v2305
        %3223 = vmatmul.mubr.bf16.gmra.mxu0 %v2304
        %v3224 = vpop.f32.mrf.mxu0
        %v3225 = vadd.f32 %v2457, %v3224
        %v3226 = vpop.f32.mrf.mxu0
        %v3227 = vadd.f32 %v2461, %v3226
        %v3228 = vpop.f32.mrf.mxu0
        %v3229 = vadd.f32 %v2457, %v3228
        %v3230 = vpop.f32.mrf.mxu0
        %v3231 = vadd.f32 %v2461, %v3230
        %3232 = vmatprep.mubr.bf16.mxu0 %v2307
        %3233 = vmatmul.mubr.bf16.gmra.mxu0 %v2306
        %v3234 = vpop.f32.mrf.mxu0
        %v3235 = vadd.f32 %v2457, %v3234
        %v3236 = vpop.f32.mrf.mxu0
        %v3237 = vadd.f32 %v2461, %v3236
        %v3238 = vpop.f32.mrf.mxu0
        %v3239 = vadd.f32 %v2457, %v3238
        %v3240 = vpop.f32.mrf.mxu0
        %v3241 = vadd.f32 %v2461, %v3240
        %3242 = vmatprep.mubr.bf16.mxu0 %v2309
        %3243 = vmatmul.mubr.bf16.gmra.mxu0 %v2308
        %v3244 = vpop.f32.mrf.mxu0
        %v3245 = vadd.f32 %v2457, %v3244
        %v3246 = vpop.f32.mrf.mxu0
        %v3247 = vadd.f32 %v2461, %v3246
        %v3248 = vpop.f32.mrf.mxu0
        %v3249 = vadd.f32 %v2457, %v3248
        %v3250 = vpop.f32.mrf.mxu0
        %v3251 = vadd.f32 %v2461, %v3250
        %3252 = vmatprep.mubr.bf16.mxu0 %v2311
        %3253 = vmatmul.mubr.bf16.gmra.mxu0 %v2310
        %v3254 = vpop.f32.mrf.mxu0
        %v3255 = vadd.f32 %v2457, %v3254
        %v3256 = vpop.f32.mrf.mxu0
        %v3257 = vadd.f32 %v2461, %v3256
        %v3258 = vpop.f32.mrf.mxu0
        %v3259 = vadd.f32 %v2457, %v3258
        %v3260 = vpop.f32.mrf.mxu0
        %v3261 = vadd.f32 %v2461, %v3260
        %3262 = vmatprep.mubr.bf16.mxu0 %v2313
        %3263 = vmatmul.mubr.bf16.gmra.mxu0 %v2312
        %v3264 = vpop.f32.mrf.mxu0
        %v3265 = vadd.f32 %v2457, %v3264
        %v3266 = vpop.f32.mrf.mxu0
        %v3267 = vadd.f32 %v2461, %v3266
        %v3268 = vpop.f32.mrf.mxu0
        %v3269 = vadd.f32 %v2457, %v3268
        %v3270 = vpop.f32.mrf.mxu0
        %v3271 = vadd.f32 %v2461, %v3270
        %3272 = vmatprep.mubr.bf16.mxu0 %v2315
        %3273 = vmatmul.mubr.bf16.gmra.mxu0 %v2314
        %v3274 = vpop.f32.mrf.mxu0
        %v3275 = vadd.f32 %v2457, %v3274
        %v3276 = vpop.f32.mrf.mxu0
        %v3277 = vadd.f32 %v2461, %v3276
        %v3278 = vpop.f32.mrf.mxu0
        %v3279 = vadd.f32 %v2457, %v3278
        %v3280 = vpop.f32.mrf.mxu0
        %v3281 = vadd.f32 %v2461, %v3280
        %3282 = vdwg.mxu0
        %3283 = vmatprep.subr.bf16.mxu0 %v2887
        %3284 = vmatpush1.bf16.msra.mxu0 %v2886
        %3285 = vmatprep.subr.bf16.mxu0 %v2880
        %3286 = vmatpush1.bf16.msra.mxu0 %v2879
        %3287 = vmatprep.subr.bf16.mxu0 %v2873
        %3288 = vmatpush1.bf16.msra.mxu0 %v2872
        %3289 = vmatprep.subr.bf16.mxu0 %v2866
        %3290 = vmatpush1.bf16.msra.mxu0 %v2865
        %3291 = vmatprep.subr.bf16.mxu0 %v2859
        %3292 = vmatpush1.bf16.msra.mxu0 %v2858
        %3293 = vmatprep.subr.bf16.mxu0 %v2852
        %3294 = vmatpush1.bf16.msra.mxu0 %v2851
        %3295 = vmatprep.subr.bf16.mxu0 %v2845
        %3296 = vmatpush1.bf16.msra.mxu0 %v2844
        %3297 = vmatprep.subr.bf16.mxu0 %v2838
        %3298 = vmatpush1.bf16.msra.mxu0 %v2837
        %3299 = vmatprep.subr.bf16.mxu0 %v2943
        %3300 = vmatpush2.bf16.msra.mxu0 %v2942
        %3301 = vmatprep.subr.bf16.mxu0 %v2936
        %3302 = vmatpush2.bf16.msra.mxu0 %v2935
        %3303 = vmatprep.subr.bf16.mxu0 %v2929
        %3304 = vmatpush2.bf16.msra.mxu0 %v2928
        %3305 = vmatprep.subr.bf16.mxu0 %v2922
        %3306 = vmatpush2.bf16.msra.mxu0 %v2921
        %3307 = vmatprep.subr.bf16.mxu0 %v2915
        %3308 = vmatpush2.bf16.msra.mxu0 %v2914
        %3309 = vmatprep.subr.bf16.mxu0 %v2908
        %3310 = vmatpush2.bf16.msra.mxu0 %v2907
        %3311 = vmatprep.subr.bf16.mxu0 %v2901
        %3312 = vmatpush2.bf16.msra.mxu0 %v2900
        %3313 = vmatprep.subr.bf16.mxu0 %v2894
        %3314 = vmatpush2.bf16.msra.mxu0 %v2893
        %3315 = vmatprep.mubr.bf16.mxu0 %v2301
        %3316 = vmatmul.mubr.bf16.gmra.mxu0 %v2300
        %v3317 = vpop.f32.mrf.mxu0
        %v3318 = vadd.f32 %v2465, %v3317
        %v3319 = vpop.f32.mrf.mxu0
        %v3320 = vadd.f32 %v2469, %v3319
        %v3321 = vpop.f32.mrf.mxu0
        %v3322 = vadd.f32 %v2465, %v3321
        %v3323 = vpop.f32.mrf.mxu0
        %v3324 = vadd.f32 %v2469, %v3323
        %3325 = vmatprep.mubr.bf16.mxu0 %v2303
        %3326 = vmatmul.mubr.bf16.gmra.mxu0 %v2302
        %v3327 = vpop.f32.mrf.mxu0
        %v3328 = vadd.f32 %v2465, %v3327
        %v3329 = vpop.f32.mrf.mxu0
        %v3330 = vadd.f32 %v2469, %v3329
        %v3331 = vpop.f32.mrf.mxu0
        %v3332 = vadd.f32 %v2465, %v3331
        %v3333 = vpop.f32.mrf.mxu0
        %v3334 = vadd.f32 %v2469, %v3333
        %3335 = vmatprep.mubr.bf16.mxu0 %v2305
        %3336 = vmatmul.mubr.bf16.gmra.mxu0 %v2304
        %v3337 = vpop.f32.mrf.mxu0
        %v3338 = vadd.f32 %v2465, %v3337
        %v3339 = vpop.f32.mrf.mxu0
        %v3340 = vadd.f32 %v2469, %v3339
        %v3341 = vpop.f32.mrf.mxu0
        %v3342 = vadd.f32 %v2465, %v3341
        %v3343 = vpop.f32.mrf.mxu0
        %v3344 = vadd.f32 %v2469, %v3343
        %3345 = vmatprep.mubr.bf16.mxu0 %v2307
        %3346 = vmatmul.mubr.bf16.gmra.mxu0 %v2306
        %v3347 = vpop.f32.mrf.mxu0
        %v3348 = vadd.f32 %v2465, %v3347
        %v3349 = vpop.f32.mrf.mxu0
        %v3350 = vadd.f32 %v2469, %v3349
        %v3351 = vpop.f32.mrf.mxu0
        %v3352 = vadd.f32 %v2465, %v3351
        %v3353 = vpop.f32.mrf.mxu0
        %v3354 = vadd.f32 %v2469, %v3353
        %3355 = vmatprep.mubr.bf16.mxu0 %v2309
        %3356 = vmatmul.mubr.bf16.gmra.mxu0 %v2308
        %v3357 = vpop.f32.mrf.mxu0
        %v3358 = vadd.f32 %v2465, %v3357
        %v3359 = vpop.f32.mrf.mxu0
        %v3360 = vadd.f32 %v2469, %v3359
        %v3361 = vpop.f32.mrf.mxu0
        %v3362 = vadd.f32 %v2465, %v3361
        %v3363 = vpop.f32.mrf.mxu0
        %v3364 = vadd.f32 %v2469, %v3363
        %3365 = vmatprep.mubr.bf16.mxu0 %v2311
        %3366 = vmatmul.mubr.bf16.gmra.mxu0 %v2310
        %v3367 = vpop.f32.mrf.mxu0
        %v3368 = vadd.f32 %v2465, %v3367
        %v3369 = vpop.f32.mrf.mxu0
        %v3370 = vadd.f32 %v2469, %v3369
        %v3371 = vpop.f32.mrf.mxu0
        %v3372 = vadd.f32 %v2465, %v3371
        %v3373 = vpop.f32.mrf.mxu0
        %v3374 = vadd.f32 %v2469, %v3373
        %3375 = vmatprep.mubr.bf16.mxu0 %v2313
        %3376 = vmatmul.mubr.bf16.gmra.mxu0 %v2312
        %v3377 = vpop.f32.mrf.mxu0
        %v3378 = vadd.f32 %v2465, %v3377
        %v3379 = vpop.f32.mrf.mxu0
        %v3380 = vadd.f32 %v2469, %v3379
        %v3381 = vpop.f32.mrf.mxu0
        %v3382 = vadd.f32 %v2465, %v3381
        %v3383 = vpop.f32.mrf.mxu0
        %v3384 = vadd.f32 %v2469, %v3383
        %3385 = vmatprep.mubr.bf16.mxu0 %v2315
        %3386 = vmatmul.mubr.bf16.gmra.mxu0 %v2314
        %v3387 = vpop.f32.mrf.mxu0
        %v3388 = vadd.f32 %v2465, %v3387
        %v3389 = vpop.f32.mrf.mxu0
        %v3390 = vadd.f32 %v2469, %v3389
        %v3391 = vpop.f32.mrf.mxu0
        %v3392 = vadd.f32 %v2465, %v3391
        %v3393 = vpop.f32.mrf.mxu0
        %v3394 = vadd.f32 %v2469, %v3393
        %3395 = vdwg.mxu0
        %3396 = vmatprep.subr.bf16.mxu0 0
        %3397 = vmatpush1.bf16.msra.mxu0 %v2888
        %3398 = vmatprep.subr.bf16.mxu0 0
        %3399 = vmatpush1.bf16.msra.mxu0 %v2881
        %3400 = vmatprep.subr.bf16.mxu0 0
        %3401 = vmatpush1.bf16.msra.mxu0 %v2874
        %3402 = vmatprep.subr.bf16.mxu0 0
        %3403 = vmatpush1.bf16.msra.mxu0 %v2867
        %3404 = vmatprep.subr.bf16.mxu0 0
        %3405 = vmatpush1.bf16.msra.mxu0 %v2860
        %3406 = vmatprep.subr.bf16.mxu0 0
        %3407 = vmatpush1.bf16.msra.mxu0 %v2853
        %3408 = vmatprep.subr.bf16.mxu0 0
        %3409 = vmatpush1.bf16.msra.mxu0 %v2846
        %3410 = vmatprep.subr.bf16.mxu0 0
        %3411 = vmatpush1.bf16.msra.mxu0 %v2839
        %3412 = vmatprep.subr.bf16.mxu0 0
        %3413 = vmatpush2.bf16.msra.mxu0 %v2944
        %3414 = vmatprep.subr.bf16.mxu0 0
        %3415 = vmatpush2.bf16.msra.mxu0 %v2937
        %3416 = vmatprep.subr.bf16.mxu0 0
        %3417 = vmatpush2.bf16.msra.mxu0 %v2930
        %3418 = vmatprep.subr.bf16.mxu0 0
        %3419 = vmatpush2.bf16.msra.mxu0 %v2923
        %3420 = vmatprep.subr.bf16.mxu0 0
        %3421 = vmatpush2.bf16.msra.mxu0 %v2916
        %3422 = vmatprep.subr.bf16.mxu0 0
        %3423 = vmatpush2.bf16.msra.mxu0 %v2909
        %3424 = vmatprep.subr.bf16.mxu0 0
        %3425 = vmatpush2.bf16.msra.mxu0 %v2902
        %3426 = vmatprep.subr.bf16.mxu0 0
        %3427 = vmatpush2.bf16.msra.mxu0 %v2895
        %3428 = vmatprep.mubr.bf16.mxu0 %v2301
        %3429 = vmatmul.mubr.bf16.gmra.mxu0 %v2300
        %v3430 = vpop.f32.mrf.mxu0
        %v3431 = vadd.f32 %v2473, %v3430
        %v3432 = vpop.f32.mrf.mxu0
        %v3433 = vpop.f32.mrf.mxu0
        %v3434 = vadd.f32 %v2473, %v3433
        %v3435 = vpop.f32.mrf.mxu0
        %3436 = vmatprep.mubr.bf16.mxu0 %v2303
        %3437 = vmatmul.mubr.bf16.gmra.mxu0 %v2302
        %v3438 = vpop.f32.mrf.mxu0
        %v3439 = vadd.f32 %v2473, %v3438
        %v3440 = vpop.f32.mrf.mxu0
        %v3441 = vpop.f32.mrf.mxu0
        %v3442 = vadd.f32 %v2473, %v3441
        %v3443 = vpop.f32.mrf.mxu0
        %3444 = vmatprep.mubr.bf16.mxu0 %v2305
        %3445 = vmatmul.mubr.bf16.gmra.mxu0 %v2304
        %v3446 = vpop.f32.mrf.mxu0
        %v3447 = vadd.f32 %v2473, %v3446
        %v3448 = vpop.f32.mrf.mxu0
        %v3449 = vpop.f32.mrf.mxu0
        %v3450 = vadd.f32 %v2473, %v3449
        %v3451 = vpop.f32.mrf.mxu0
        %3452 = vmatprep.mubr.bf16.mxu0 %v2307
        %3453 = vmatmul.mubr.bf16.gmra.mxu0 %v2306
        %v3454 = vpop.f32.mrf.mxu0
        %v3455 = vadd.f32 %v2473, %v3454
        %v3456 = vpop.f32.mrf.mxu0
        %v3457 = vpop.f32.mrf.mxu0
        %v3458 = vadd.f32 %v2473, %v3457
        %v3459 = vpop.f32.mrf.mxu0
        %3460 = vmatprep.mubr.bf16.mxu0 %v2309
        %3461 = vmatmul.mubr.bf16.gmra.mxu0 %v2308
        %v3462 = vpop.f32.mrf.mxu0
        %v3463 = vadd.f32 %v2473, %v3462
        %v3464 = vpop.f32.mrf.mxu0
        %v3465 = vpop.f32.mrf.mxu0
        %v3466 = vadd.f32 %v2473, %v3465
        %v3467 = vpop.f32.mrf.mxu0
        %3468 = vmatprep.mubr.bf16.mxu0 %v2311
        %3469 = vmatmul.mubr.bf16.gmra.mxu0 %v2310
        %v3470 = vpop.f32.mrf.mxu0
        %v3471 = vadd.f32 %v2473, %v3470
        %v3472 = vpop.f32.mrf.mxu0
        %v3473 = vpop.f32.mrf.mxu0
        %v3474 = vadd.f32 %v2473, %v3473
        %v3475 = vpop.f32.mrf.mxu0
        %3476 = vmatprep.mubr.bf16.mxu0 %v2313
        %3477 = vmatmul.mubr.bf16.gmra.mxu0 %v2312
        %v3478 = vpop.f32.mrf.mxu0
        %v3479 = vadd.f32 %v2473, %v3478
        %v3480 = vpop.f32.mrf.mxu0
        %v3481 = vpop.f32.mrf.mxu0
        %v3482 = vadd.f32 %v2473, %v3481
        %v3483 = vpop.f32.mrf.mxu0
        %3484 = vmatprep.mubr.bf16.mxu0 %v2315
        %3485 = vmatmul.mubr.bf16.gmra.mxu0 %v2314
        %v3486 = vpop.f32.mrf.mxu0
        %v3487 = vadd.f32 %v2473, %v3486
        %v3488 = vpop.f32.mrf.mxu0
        %v3489 = vpop.f32.mrf.mxu0
        %v3490 = vadd.f32 %v2473, %v3489
        %v3491 = vpop.f32.mrf.mxu0
        %3492 = vdwg.mxu0
        %v3493 = vmax.f32 %v3092, 0.0
        %v3494 = vmax.f32 %v3094, 0.0
        %v3495 = vmax.f32 %v3205, 0.0
        %v3496 = vmax.f32 %v3207, 0.0
        %v3497 = vmax.f32 %v3318, 0.0
        %v3498 = vmax.f32 %v3320, 0.0
        %v3499 = vmax.f32 %v3431, 0.0
        %v3500 = vmax.f32 %v3096, 0.0
        %v3501 = vmax.f32 %v3098, 0.0
        %v3502 = vmax.f32 %v3209, 0.0
        %v3503 = vmax.f32 %v3211, 0.0
        %v3504 = vmax.f32 %v3322, 0.0
        %v3505 = vmax.f32 %v3324, 0.0
        %v3506 = vmax.f32 %v3434, 0.0
        %v3507 = vmax.f32 %v3102, 0.0
        %v3508 = vmax.f32 %v3104, 0.0
        %v3509 = vmax.f32 %v3215, 0.0
        %v3510 = vmax.f32 %v3217, 0.0
        %v3511 = vmax.f32 %v3328, 0.0
        %v3512 = vmax.f32 %v3330, 0.0
        %v3513 = vmax.f32 %v3439, 0.0
        %v3514 = vmax.f32 %v3106, 0.0
        %v3515 = vmax.f32 %v3108, 0.0
        %v3516 = vmax.f32 %v3219, 0.0
        %v3517 = vmax.f32 %v3221, 0.0
        %v3518 = vmax.f32 %v3332, 0.0
        %v3519 = vmax.f32 %v3334, 0.0
        %v3520 = vmax.f32 %v3442, 0.0
        %v3521 = vmax.f32 %v3112, 0.0
        %v3522 = vmax.f32 %v3114, 0.0
        %v3523 = vmax.f32 %v3225, 0.0
        %v3524 = vmax.f32 %v3227, 0.0
        %v3525 = vmax.f32 %v3338, 0.0
        %v3526 = vmax.f32 %v3340, 0.0
        %v3527 = vmax.f32 %v3447, 0.0
        %v3528 = vmax.f32 %v3116, 0.0
        %v3529 = vmax.f32 %v3118, 0.0
        %v3530 = vmax.f32 %v3229, 0.0
        %v3531 = vmax.f32 %v3231, 0.0
        %v3532 = vmax.f32 %v3342, 0.0
        %v3533 = vmax.f32 %v3344, 0.0
        %v3534 = vmax.f32 %v3450, 0.0
        %v3535 = vmax.f32 %v3122, 0.0
        %v3536 = vmax.f32 %v3124, 0.0
        %v3537 = vmax.f32 %v3235, 0.0
        %v3538 = vmax.f32 %v3237, 0.0
        %v3539 = vmax.f32 %v3348, 0.0
        %v3540 = vmax.f32 %v3350, 0.0
        %v3541 = vmax.f32 %v3455, 0.0
        %v3542 = vmax.f32 %v3126, 0.0
        %v3543 = vmax.f32 %v3128, 0.0
        %v3544 = vmax.f32 %v3239, 0.0
        %v3545 = vmax.f32 %v3241, 0.0
        %v3546 = vmax.f32 %v3352, 0.0
        %v3547 = vmax.f32 %v3354, 0.0
        %v3548 = vmax.f32 %v3458, 0.0
        %v3549 = vmax.f32 %v3132, 0.0
        %v3550 = vmax.f32 %v3134, 0.0
        %v3551 = vmax.f32 %v3245, 0.0
        %v3552 = vmax.f32 %v3247, 0.0
        %v3553 = vmax.f32 %v3358, 0.0
        %v3554 = vmax.f32 %v3360, 0.0
        %v3555 = vmax.f32 %v3463, 0.0
        %v3556 = vmax.f32 %v3136, 0.0
        %v3557 = vmax.f32 %v3138, 0.0
        %v3558 = vmax.f32 %v3249, 0.0
        %v3559 = vmax.f32 %v3251, 0.0
        %v3560 = vmax.f32 %v3362, 0.0
        %v3561 = vmax.f32 %v3364, 0.0
        %v3562 = vmax.f32 %v3466, 0.0
        %v3563 = vmax.f32 %v3142, 0.0
        %v3564 = vmax.f32 %v3144, 0.0
        %v3565 = vmax.f32 %v3255, 0.0
        %v3566 = vmax.f32 %v3257, 0.0
        %v3567 = vmax.f32 %v3368, 0.0
        %v3568 = vmax.f32 %v3370, 0.0
        %v3569 = vmax.f32 %v3471, 0.0
        %v3570 = vmax.f32 %v3146, 0.0
        %v3571 = vmax.f32 %v3148, 0.0
        %v3572 = vmax.f32 %v3259, 0.0
        %v3573 = vmax.f32 %v3261, 0.0
        %v3574 = vmax.f32 %v3372, 0.0
        %v3575 = vmax.f32 %v3374, 0.0
        %v3576 = vmax.f32 %v3474, 0.0
        %v3577 = vmax.f32 %v3152, 0.0
        %v3578 = vmax.f32 %v3154, 0.0
        %v3579 = vmax.f32 %v3265, 0.0
        %v3580 = vmax.f32 %v3267, 0.0
        %v3581 = vmax.f32 %v3378, 0.0
        %v3582 = vmax.f32 %v3380, 0.0
        %v3583 = vmax.f32 %v3479, 0.0
        %v3584 = vmax.f32 %v3156, 0.0
        %v3585 = vmax.f32 %v3158, 0.0
        %v3586 = vmax.f32 %v3269, 0.0
        %v3587 = vmax.f32 %v3271, 0.0
        %v3588 = vmax.f32 %v3382, 0.0
        %v3589 = vmax.f32 %v3384, 0.0
        %v3590 = vmax.f32 %v3482, 0.0
        %v3591 = vmax.f32 %v3162, 0.0
        %v3592 = vmax.f32 %v3164, 0.0
        %v3593 = vmax.f32 %v3275, 0.0
        %v3594 = vmax.f32 %v3277, 0.0
        %v3595 = vmax.f32 %v3388, 0.0
        %v3596 = vmax.f32 %v3390, 0.0
        %v3597 = vmax.f32 %v3487, 0.0
        %v3598 = vmax.f32 %v3166, 0.0
        %v3599 = vmax.f32 %v3168, 0.0
        %v3600 = vmax.f32 %v3279, 0.0
        %v3601 = vmax.f32 %v3281, 0.0
        %v3602 = vmax.f32 %v3392, 0.0
        %v3603 = vmax.f32 %v3394, 0.0
        %v3604 = vmax.f32 %v3490, 0.0
        %v3605 = vmul.f32 %v3092, %v385
        %v3606 = vmul.f32 %v3094, %v386
        %v3607 = vmul.f32 %v3205, %v387
        %v3608 = vmul.f32 %v3207, %v388
        %v3609 = vmul.f32 %v3318, %v389
        %v3610 = vmul.f32 %v3320, %v390
        %v3611 = vmul.f32 %v3431, %v391
        %v3612 = vmul.f32 %v3096, %v392
        %v3613 = vmul.f32 %v3098, %v393
        %v3614 = vmul.f32 %v3209, %v394
        %v3615 = vmul.f32 %v3211, %v395
        %v3616 = vmul.f32 %v3322, %v396
        %v3617 = vmul.f32 %v3324, %v397
        %v3618 = vmul.f32 %v3434, %v398
        %v3619 = vmul.f32 %v3102, %v399
        %v3620 = vmul.f32 %v3104, %v400
        %v3621 = vmul.f32 %v3215, %v401
        %v3622 = vmul.f32 %v3217, %v402
        %v3623 = vmul.f32 %v3328, %v403
        %v3624 = vmul.f32 %v3330, %v404
        %v3625 = vmul.f32 %v3439, %v405
        %v3626 = vmul.f32 %v3106, %v406
        %v3627 = vmul.f32 %v3108, %v407
        %v3628 = vmul.f32 %v3219, %v408
        %v3629 = vmul.f32 %v3221, %v409
        %v3630 = vmul.f32 %v3332, %v410
        %v3631 = vmul.f32 %v3334, %v411
        %v3632 = vmul.f32 %v3442, %v412
        %v3633 = vmul.f32 %v3112, %v413
        %v3634 = vmul.f32 %v3114, %v414
        %v3635 = vmul.f32 %v3225, %v415
        %v3636 = vmul.f32 %v3227, %v416
        %v3637 = vmul.f32 %v3338, %v417
        %v3638 = vmul.f32 %v3340, %v418
        %v3639 = vmul.f32 %v3447, %v419
        %v3640 = vmul.f32 %v3116, %v420
        %v3641 = vmul.f32 %v3118, %v421
        %v3642 = vmul.f32 %v3229, %v422
        %v3643 = vmul.f32 %v3231, %v423
        %v3644 = vmul.f32 %v3342, %v424
        %v3645 = vmul.f32 %v3344, %v425
        %v3646 = vmul.f32 %v3450, %v426
        %v3647 = vmul.f32 %v3122, %v427
        %v3648 = vmul.f32 %v3124, %v428
        %v3649 = vmul.f32 %v3235, %v429
        %v3650 = vmul.f32 %v3237, %v430
        %v3651 = vmul.f32 %v3348, %v431
        %v3652 = vmul.f32 %v3350, %v432
        %v3653 = vmul.f32 %v3455, %v433
        %v3654 = vmul.f32 %v3126, %v434
        %v3655 = vmul.f32 %v3128, %v435
        %v3656 = vmul.f32 %v3239, %v436
        %v3657 = vmul.f32 %v3241, %v437
        %v3658 = vmul.f32 %v3352, %v438
        %v3659 = vmul.f32 %v3354, %v439
        %v3660 = vmul.f32 %v3458, %v440
        %v3661 = vmul.f32 %v3132, %v441
        %v3662 = vmul.f32 %v3134, %v442
        %v3663 = vmul.f32 %v3245, %v443
        %v3664 = vmul.f32 %v3247, %v444
        %v3665 = vmul.f32 %v3358, %v445
        %v3666 = vmul.f32 %v3360, %v446
        %v3667 = vmul.f32 %v3463, %v447
        %v3668 = vmul.f32 %v3136, %v448
        %v3669 = vmul.f32 %v3138, %v449
        %v3670 = vmul.f32 %v3249, %v450
        %v3671 = vmul.f32 %v3251, %v451
        %v3672 = vmul.f32 %v3362, %v452
        %v3673 = vmul.f32 %v3364, %v453
        %v3674 = vmul.f32 %v3466, %v454
        %v3675 = vmul.f32 %v3142, %v455
        %v3676 = vmul.f32 %v3144, %v456
        %v3677 = vmul.f32 %v3255, %v457
        %v3678 = vmul.f32 %v3257, %v458
        %v3679 = vmul.f32 %v3368, %v459
        %v3680 = vmul.f32 %v3370, %v460
        %v3681 = vmul.f32 %v3471, %v461
        %v3682 = vmul.f32 %v3146, %v462
        %v3683 = vmul.f32 %v3148, %v463
        %v3684 = vmul.f32 %v3259, %v464
        %v3685 = vmul.f32 %v3261, %v465
        %v3686 = vmul.f32 %v3372, %v466
        %v3687 = vmul.f32 %v3374, %v467
        %v3688 = vmul.f32 %v3474, %v468
        %v3689 = vmul.f32 %v3152, %v469
        %v3690 = vmul.f32 %v3154, %v470
        %v3691 = vmul.f32 %v3265, %v471
        %v3692 = vmul.f32 %v3267, %v472
        %v3693 = vmul.f32 %v3378, %v473
        %v3694 = vmul.f32 %v3380, %v474
        %v3695 = vmul.f32 %v3479, %v475
        %v3696 = vmul.f32 %v3156, %v476
        %v3697 = vmul.f32 %v3158, %v477
        %v3698 = vmul.f32 %v3269, %v478
        %v3699 = vmul.f32 %v3271, %v479
        %v3700 = vmul.f32 %v3382, %v480
        %v3701 = vmul.f32 %v3384, %v481
        %v3702 = vmul.f32 %v3482, %v482
        %v3703 = vmul.f32 %v3162, %v483
        %v3704 = vmul.f32 %v3164, %v484
        %v3705 = vmul.f32 %v3275, %v485
        %v3706 = vmul.f32 %v3277, %v486
        %v3707 = vmul.f32 %v3388, %v487
        %v3708 = vmul.f32 %v3390, %v488
        %v3709 = vmul.f32 %v3487, %v489
        %v3710 = vmul.f32 %v3166, %v490
        %v3711 = vmul.f32 %v3168, %v491
        %v3712 = vmul.f32 %v3279, %v492
        %v3713 = vmul.f32 %v3281, %v493
        %v3714 = vmul.f32 %v3392, %v494
        %v3715 = vmul.f32 %v3394, %v495
        %v3716 = vmul.f32 %v3490, %v496
        %v3717 = vsub.f32 %v3493, %v3605
        %v3718 = vsub.f32 %v3494, %v3606
        %v3719 = vsub.f32 %v3495, %v3607
        %v3720 = vsub.f32 %v3496, %v3608
        %v3721 = vsub.f32 %v3497, %v3609
        %v3722 = vsub.f32 %v3498, %v3610
        %v3723 = vsub.f32 %v3499, %v3611
        %v3724 = vsub.f32 %v3500, %v3612
        %v3725 = vsub.f32 %v3501, %v3613
        %v3726 = vsub.f32 %v3502, %v3614
        %v3727 = vsub.f32 %v3503, %v3615
        %v3728 = vsub.f32 %v3504, %v3616
        %v3729 = vsub.f32 %v3505, %v3617
        %v3730 = vsub.f32 %v3506, %v3618
        %v3731 = vsub.f32 %v3507, %v3619
        %v3732 = vsub.f32 %v3508, %v3620
        %v3733 = vsub.f32 %v3509, %v3621
        %v3734 = vsub.f32 %v3510, %v3622
        %v3735 = vsub.f32 %v3511, %v3623
        %v3736 = vsub.f32 %v3512, %v3624
        %v3737 = vsub.f32 %v3513, %v3625
        %v3738 = vsub.f32 %v3514, %v3626
        %v3739 = vsub.f32 %v3515, %v3627
        %v3740 = vsub.f32 %v3516, %v3628
        %v3741 = vsub.f32 %v3517, %v3629
        %v3742 = vsub.f32 %v3518, %v3630
        %v3743 = vsub.f32 %v3519, %v3631
        %v3744 = vsub.f32 %v3520, %v3632
        %v3745 = vsub.f32 %v3521, %v3633
        %v3746 = vsub.f32 %v3522, %v3634
        %v3747 = vsub.f32 %v3523, %v3635
        %v3748 = vsub.f32 %v3524, %v3636
        %v3749 = vsub.f32 %v3525, %v3637
        %v3750 = vsub.f32 %v3526, %v3638
        %v3751 = vsub.f32 %v3527, %v3639
        %v3752 = vsub.f32 %v3528, %v3640
        %v3753 = vsub.f32 %v3529, %v3641
        %v3754 = vsub.f32 %v3530, %v3642
        %v3755 = vsub.f32 %v3531, %v3643
        %v3756 = vsub.f32 %v3532, %v3644
        %v3757 = vsub.f32 %v3533, %v3645
        %v3758 = vsub.f32 %v3534, %v3646
        %v3759 = vsub.f32 %v3535, %v3647
        %v3760 = vsub.f32 %v3536, %v3648
        %v3761 = vsub.f32 %v3537, %v3649
        %v3762 = vsub.f32 %v3538, %v3650
        %v3763 = vsub.f32 %v3539, %v3651
        %v3764 = vsub.f32 %v3540, %v3652
        %v3765 = vsub.f32 %v3541, %v3653
        %v3766 = vsub.f32 %v3542, %v3654
        %v3767 = vsub.f32 %v3543, %v3655
        %v3768 = vsub.f32 %v3544, %v3656
        %v3769 = vsub.f32 %v3545, %v3657
        %v3770 = vsub.f32 %v3546, %v3658
        %v3771 = vsub.f32 %v3547, %v3659
        %v3772 = vsub.f32 %v3548, %v3660
        %v3773 = vsub.f32 %v3549, %v3661
        %v3774 = vsub.f32 %v3550, %v3662
        %v3775 = vsub.f32 %v3551, %v3663
        %v3776 = vsub.f32 %v3552, %v3664
        %v3777 = vsub.f32 %v3553, %v3665
        %v3778 = vsub.f32 %v3554, %v3666
        %v3779 = vsub.f32 %v3555, %v3667
        %v3780 = vsub.f32 %v3556, %v3668
        %v3781 = vsub.f32 %v3557, %v3669
        %v3782 = vsub.f32 %v3558, %v3670
        %v3783 = vsub.f32 %v3559, %v3671
        %v3784 = vsub.f32 %v3560, %v3672
        %v3785 = vsub.f32 %v3561, %v3673
        %v3786 = vsub.f32 %v3562, %v3674
        %v3787 = vsub.f32 %v3563, %v3675
        %v3788 = vsub.f32 %v3564, %v3676
        %v3789 = vsub.f32 %v3565, %v3677
        %v3790 = vsub.f32 %v3566, %v3678
        %v3791 = vsub.f32 %v3567, %v3679
        %v3792 = vsub.f32 %v3568, %v3680
        %v3793 = vsub.f32 %v3569, %v3681
        %v3794 = vsub.f32 %v3570, %v3682
        %v3795 = vsub.f32 %v3571, %v3683
        %v3796 = vsub.f32 %v3572, %v3684
        %v3797 = vsub.f32 %v3573, %v3685
        %v3798 = vsub.f32 %v3574, %v3686
        %v3799 = vsub.f32 %v3575, %v3687
        %v3800 = vsub.f32 %v3576, %v3688
        %v3801 = vsub.f32 %v3577, %v3689
        %v3802 = vsub.f32 %v3578, %v3690
        %v3803 = vsub.f32 %v3579, %v3691
        %v3804 = vsub.f32 %v3580, %v3692
        %v3805 = vsub.f32 %v3581, %v3693
        %v3806 = vsub.f32 %v3582, %v3694
        %v3807 = vsub.f32 %v3583, %v3695
        %v3808 = vsub.f32 %v3584, %v3696
        %v3809 = vsub.f32 %v3585, %v3697
        %v3810 = vsub.f32 %v3586, %v3698
        %v3811 = vsub.f32 %v3587, %v3699
        %v3812 = vsub.f32 %v3588, %v3700
        %v3813 = vsub.f32 %v3589, %v3701
        %v3814 = vsub.f32 %v3590, %v3702
        %v3815 = vsub.f32 %v3591, %v3703
        %v3816 = vsub.f32 %v3592, %v3704
        %v3817 = vsub.f32 %v3593, %v3705
        %v3818 = vsub.f32 %v3594, %v3706
        %v3819 = vsub.f32 %v3595, %v3707
        %v3820 = vsub.f32 %v3596, %v3708
        %v3821 = vsub.f32 %v3597, %v3709
        %v3822 = vsub.f32 %v3598, %v3710
        %v3823 = vsub.f32 %v3599, %v3711
        %v3824 = vsub.f32 %v3600, %v3712
        %v3825 = vsub.f32 %v3601, %v3713
        %v3826 = vsub.f32 %v3602, %v3714
        %v3827 = vsub.f32 %v3603, %v3715
        %v3828 = vsub.f32 %v3604, %v3716
        %v3829 = vand.u32 2147483647, %v3092
        %v3830 = vand.u32 2147483647, %v3094
        %v3831 = vand.u32 2147483647, %v3205
        %v3832 = vand.u32 2147483647, %v3207
        %v3833 = vand.u32 2147483647, %v3318
        %v3834 = vand.u32 2147483647, %v3320
        %v3835 = vand.u32 2147483647, %v3431
        %v3836 = vand.u32 2147483647, %v3096
        %v3837 = vand.u32 2147483647, %v3098
        %v3838 = vand.u32 2147483647, %v3209
        %v3839 = vand.u32 2147483647, %v3211
        %v3840 = vand.u32 2147483647, %v3322
        %v3841 = vand.u32 2147483647, %v3324
        %v3842 = vand.u32 2147483647, %v3434
        %v3843 = vand.u32 2147483647, %v3102
        %v3844 = vand.u32 2147483647, %v3104
        %v3845 = vand.u32 2147483647, %v3215
        %v3846 = vand.u32 2147483647, %v3217
        %v3847 = vand.u32 2147483647, %v3328
        %v3848 = vand.u32 2147483647, %v3330
        %v3849 = vand.u32 2147483647, %v3439
        %v3850 = vand.u32 2147483647, %v3106
        %v3851 = vand.u32 2147483647, %v3108
        %v3852 = vand.u32 2147483647, %v3219
        %v3853 = vand.u32 2147483647, %v3221
        %v3854 = vand.u32 2147483647, %v3332
        %v3855 = vand.u32 2147483647, %v3334
        %v3856 = vand.u32 2147483647, %v3442
        %v3857 = vand.u32 2147483647, %v3112
        %v3858 = vand.u32 2147483647, %v3114
        %v3859 = vand.u32 2147483647, %v3225
        %v3860 = vand.u32 2147483647, %v3227
        %v3861 = vand.u32 2147483647, %v3338
        %v3862 = vand.u32 2147483647, %v3340
        %v3863 = vand.u32 2147483647, %v3447
        %v3864 = vand.u32 2147483647, %v3116
        %v3865 = vand.u32 2147483647, %v3118
        %v3866 = vand.u32 2147483647, %v3229
        %v3867 = vand.u32 2147483647, %v3231
        %v3868 = vand.u32 2147483647, %v3342
        %v3869 = vand.u32 2147483647, %v3344
        %v3870 = vand.u32 2147483647, %v3450
        %v3871 = vand.u32 2147483647, %v3122
        %v3872 = vand.u32 2147483647, %v3124
        %v3873 = vand.u32 2147483647, %v3235
        %v3874 = vand.u32 2147483647, %v3237
        %v3875 = vand.u32 2147483647, %v3348
        %v3876 = vand.u32 2147483647, %v3350
        %v3877 = vand.u32 2147483647, %v3455
        %v3878 = vand.u32 2147483647, %v3126
        %v3879 = vand.u32 2147483647, %v3128
        %v3880 = vand.u32 2147483647, %v3239
        %v3881 = vand.u32 2147483647, %v3241
        %v3882 = vand.u32 2147483647, %v3352
        %v3883 = vand.u32 2147483647, %v3354
        %v3884 = vand.u32 2147483647, %v3458
        %v3885 = vand.u32 2147483647, %v3132
        %v3886 = vand.u32 2147483647, %v3134
        %v3887 = vand.u32 2147483647, %v3245
        %v3888 = vand.u32 2147483647, %v3247
        %v3889 = vand.u32 2147483647, %v3358
        %v3890 = vand.u32 2147483647, %v3360
        %v3891 = vand.u32 2147483647, %v3463
        %v3892 = vand.u32 2147483647, %v3136
        %v3893 = vand.u32 2147483647, %v3138
        %v3894 = vand.u32 2147483647, %v3249
        %v3895 = vand.u32 2147483647, %v3251
        %v3896 = vand.u32 2147483647, %v3362
        %v3897 = vand.u32 2147483647, %v3364
        %v3898 = vand.u32 2147483647, %v3466
        %v3899 = vand.u32 2147483647, %v3142
        %v3900 = vand.u32 2147483647, %v3144
        %v3901 = vand.u32 2147483647, %v3255
        %v3902 = vand.u32 2147483647, %v3257
        %v3903 = vand.u32 2147483647, %v3368
        %v3904 = vand.u32 2147483647, %v3370
        %v3905 = vand.u32 2147483647, %v3471
        %v3906 = vand.u32 2147483647, %v3146
        %v3907 = vand.u32 2147483647, %v3148
        %v3908 = vand.u32 2147483647, %v3259
        %v3909 = vand.u32 2147483647, %v3261
        %v3910 = vand.u32 2147483647, %v3372
        %v3911 = vand.u32 2147483647, %v3374
        %v3912 = vand.u32 2147483647, %v3474
        %v3913 = vand.u32 2147483647, %v3152
        %v3914 = vand.u32 2147483647, %v3154
        %v3915 = vand.u32 2147483647, %v3265
        %v3916 = vand.u32 2147483647, %v3267
        %v3917 = vand.u32 2147483647, %v3378
        %v3918 = vand.u32 2147483647, %v3380
        %v3919 = vand.u32 2147483647, %v3479
        %v3920 = vand.u32 2147483647, %v3156
        %v3921 = vand.u32 2147483647, %v3158
        %v3922 = vand.u32 2147483647, %v3269
        %v3923 = vand.u32 2147483647, %v3271
        %v3924 = vand.u32 2147483647, %v3382
        %v3925 = vand.u32 2147483647, %v3384
        %v3926 = vand.u32 2147483647, %v3482
        %v3927 = vand.u32 2147483647, %v3162
        %v3928 = vand.u32 2147483647, %v3164
        %v3929 = vand.u32 2147483647, %v3275
        %v3930 = vand.u32 2147483647, %v3277
        %v3931 = vand.u32 2147483647, %v3388
        %v3932 = vand.u32 2147483647, %v3390
        %v3933 = vand.u32 2147483647, %v3487
        %v3934 = vand.u32 2147483647, %v3166
        %v3935 = vand.u32 2147483647, %v3168
        %v3936 = vand.u32 2147483647, %v3279
        %v3937 = vand.u32 2147483647, %v3281
        %v3938 = vand.u32 2147483647, %v3392
        %v3939 = vand.u32 2147483647, %v3394
        %v3940 = vand.u32 2147483647, %v3490
        %v3941 = vsub.f32 0.0, %v3829
        %v3942 = vsub.f32 0.0, %v3830
        %v3943 = vsub.f32 0.0, %v3831
        %v3944 = vsub.f32 0.0, %v3832
        %v3945 = vsub.f32 0.0, %v3833
        %v3946 = vsub.f32 0.0, %v3834
        %v3947 = vsub.f32 0.0, %v3835
        %v3948 = vsub.f32 0.0, %v3836
        %v3949 = vsub.f32 0.0, %v3837
        %v3950 = vsub.f32 0.0, %v3838
        %v3951 = vsub.f32 0.0, %v3839
        %v3952 = vsub.f32 0.0, %v3840
        %v3953 = vsub.f32 0.0, %v3841
        %v3954 = vsub.f32 0.0, %v3842
        %v3955 = vsub.f32 0.0, %v3843
        %v3956 = vsub.f32 0.0, %v3844
        %v3957 = vsub.f32 0.0, %v3845
        %v3958 = vsub.f32 0.0, %v3846
        %v3959 = vsub.f32 0.0, %v3847
        %v3960 = vsub.f32 0.0, %v3848
        %v3961 = vsub.f32 0.0, %v3849
        %v3962 = vsub.f32 0.0, %v3850
        %v3963 = vsub.f32 0.0, %v3851
        %v3964 = vsub.f32 0.0, %v3852
        %v3965 = vsub.f32 0.0, %v3853
        %v3966 = vsub.f32 0.0, %v3854
        %v3967 = vsub.f32 0.0, %v3855
        %v3968 = vsub.f32 0.0, %v3856
        %v3969 = vsub.f32 0.0, %v3857
        %v3970 = vsub.f32 0.0, %v3858
        %v3971 = vsub.f32 0.0, %v3859
        %v3972 = vsub.f32 0.0, %v3860
        %v3973 = vsub.f32 0.0, %v3861
        %v3974 = vsub.f32 0.0, %v3862
        %v3975 = vsub.f32 0.0, %v3863
        %v3976 = vsub.f32 0.0, %v3864
        %v3977 = vsub.f32 0.0, %v3865
        %v3978 = vsub.f32 0.0, %v3866
        %v3979 = vsub.f32 0.0, %v3867
        %v3980 = vsub.f32 0.0, %v3868
        %v3981 = vsub.f32 0.0, %v3869
        %v3982 = vsub.f32 0.0, %v3870
        %v3983 = vsub.f32 0.0, %v3871
        %v3984 = vsub.f32 0.0, %v3872
        %v3985 = vsub.f32 0.0, %v3873
        %v3986 = vsub.f32 0.0, %v3874
        %v3987 = vsub.f32 0.0, %v3875
        %v3988 = vsub.f32 0.0, %v3876
        %v3989 = vsub.f32 0.0, %v3877
        %v3990 = vsub.f32 0.0, %v3878
        %v3991 = vsub.f32 0.0, %v3879
        %v3992 = vsub.f32 0.0, %v3880
        %v3993 = vsub.f32 0.0, %v3881
        %v3994 = vsub.f32 0.0, %v3882
        %v3995 = vsub.f32 0.0, %v3883
        %v3996 = vsub.f32 0.0, %v3884
        %v3997 = vsub.f32 0.0, %v3885
        %v3998 = vsub.f32 0.0, %v3886
        %v3999 = vsub.f32 0.0, %v3887
        %v4000 = vsub.f32 0.0, %v3888
        %v4001 = vsub.f32 0.0, %v3889
        %v4002 = vsub.f32 0.0, %v3890
        %v4003 = vsub.f32 0.0, %v3891
        %v4004 = vsub.f32 0.0, %v3892
        %v4005 = vsub.f32 0.0, %v3893
        %v4006 = vsub.f32 0.0, %v3894
        %v4007 = vsub.f32 0.0, %v3895
        %v4008 = vsub.f32 0.0, %v3896
        %v4009 = vsub.f32 0.0, %v3897
        %v4010 = vsub.f32 0.0, %v3898
        %v4011 = vsub.f32 0.0, %v3899
        %v4012 = vsub.f32 0.0, %v3900
        %v4013 = vsub.f32 0.0, %v3901
        %v4014 = vsub.f32 0.0, %v3902
        %v4015 = vsub.f32 0.0, %v3903
        %v4016 = vsub.f32 0.0, %v3904
        %v4017 = vsub.f32 0.0, %v3905
        %v4018 = vsub.f32 0.0, %v3906
        %v4019 = vsub.f32 0.0, %v3907
        %v4020 = vsub.f32 0.0, %v3908
        %v4021 = vsub.f32 0.0, %v3909
        %v4022 = vsub.f32 0.0, %v3910
        %v4023 = vsub.f32 0.0, %v3911
        %v4024 = vsub.f32 0.0, %v3912
        %v4025 = vsub.f32 0.0, %v3913
        %v4026 = vsub.f32 0.0, %v3914
        %v4027 = vsub.f32 0.0, %v3915
        %v4028 = vsub.f32 0.0, %v3916
        %v4029 = vsub.f32 0.0, %v3917
        %v4030 = vsub.f32 0.0, %v3918
        %v4031 = vsub.f32 0.0, %v3919
        %v4032 = vsub.f32 0.0, %v3920
        %v4033 = vsub.f32 0.0, %v3921
        %v4034 = vsub.f32 0.0, %v3922
        %v4035 = vsub.f32 0.0, %v3923
        %v4036 = vsub.f32 0.0, %v3924
        %v4037 = vsub.f32 0.0, %v3925
        %v4038 = vsub.f32 0.0, %v3926
        %v4039 = vsub.f32 0.0, %v3927
        %v4040 = vsub.f32 0.0, %v3928
        %v4041 = vsub.f32 0.0, %v3929
        %v4042 = vsub.f32 0.0, %v3930
        %v4043 = vsub.f32 0.0, %v3931
        %v4044 = vsub.f32 0.0, %v3932
        %v4045 = vsub.f32 0.0, %v3933
        %v4046 = vsub.f32 0.0, %v3934
        %v4047 = vsub.f32 0.0, %v3935
        %v4048 = vsub.f32 0.0, %v3936
        %v4049 = vsub.f32 0.0, %v3937
        %v4050 = vsub.f32 0.0, %v3938
        %v4051 = vsub.f32 0.0, %v3939
        %v4052 = vsub.f32 0.0, %v3940
        %v4053 = vmul.f32 %v3941, 1.442695
        %v4054 = vpow.pop %v4053
        %v4055 = vmul.f32 %v3942, 1.442695
        %v4056 = vpow.pop %v4055
        %v4057 = vmul.f32 %v3943, 1.442695
        %v4058 = vpow.pop %v4057
        %v4059 = vmul.f32 %v3944, 1.442695
        %v4060 = vpow.pop %v4059
        %v4061 = vmul.f32 %v3945, 1.442695
        %v4062 = vpow.pop %v4061
        %v4063 = vmul.f32 %v3946, 1.442695
        %v4064 = vpow.pop %v4063
        %v4065 = vmul.f32 %v3947, 1.442695
        %v4066 = vpow.pop %v4065
        %v4067 = vmul.f32 %v3948, 1.442695
        %v4068 = vpow.pop %v4067
        %v4069 = vmul.f32 %v3949, 1.442695
        %v4070 = vpow.pop %v4069
        %v4071 = vmul.f32 %v3950, 1.442695
        %v4072 = vpow.pop %v4071
        %v4073 = vmul.f32 %v3951, 1.442695
        %v4074 = vpow.pop %v4073
        %v4075 = vmul.f32 %v3952, 1.442695
        %v4076 = vpow.pop %v4075
        %v4077 = vmul.f32 %v3953, 1.442695
        %v4078 = vpow.pop %v4077
        %v4079 = vmul.f32 %v3954, 1.442695
        %v4080 = vpow.pop %v4079
        %v4081 = vmul.f32 %v3955, 1.442695
        %v4082 = vpow.pop %v4081
        %v4083 = vmul.f32 %v3956, 1.442695
        %v4084 = vpow.pop %v4083
        %v4085 = vmul.f32 %v3957, 1.442695
        %v4086 = vpow.pop %v4085
        %v4087 = vmul.f32 %v3958, 1.442695
        %v4088 = vpow.pop %v4087
        %v4089 = vmul.f32 %v3959, 1.442695
        %v4090 = vpow.pop %v4089
        %v4091 = vmul.f32 %v3960, 1.442695
        %v4092 = vpow.pop %v4091
        %v4093 = vmul.f32 %v3961, 1.442695
        %v4094 = vpow.pop %v4093
        %v4095 = vmul.f32 %v3962, 1.442695
        %v4096 = vpow.pop %v4095
        %v4097 = vmul.f32 %v3963, 1.442695
        %v4098 = vpow.pop %v4097
        %v4099 = vmul.f32 %v3964, 1.442695
        %v4100 = vpow.pop %v4099
        %v4101 = vmul.f32 %v3965, 1.442695
        %v4102 = vpow.pop %v4101
        %v4103 = vmul.f32 %v3966, 1.442695
        %v4104 = vpow.pop %v4103
        %v4105 = vmul.f32 %v3967, 1.442695
        %v4106 = vpow.pop %v4105
        %v4107 = vmul.f32 %v3968, 1.442695
        %v4108 = vpow.pop %v4107
        %v4109 = vmul.f32 %v3969, 1.442695
        %v4110 = vpow.pop %v4109
        %v4111 = vmul.f32 %v3970, 1.442695
        %v4112 = vpow.pop %v4111
        %v4113 = vmul.f32 %v3971, 1.442695
        %v4114 = vpow.pop %v4113
        %v4115 = vmul.f32 %v3972, 1.442695
        %v4116 = vpow.pop %v4115
        %v4117 = vmul.f32 %v3973, 1.442695
        %v4118 = vpow.pop %v4117
        %v4119 = vmul.f32 %v3974, 1.442695
        %v4120 = vpow.pop %v4119
        %v4121 = vmul.f32 %v3975, 1.442695
        %v4122 = vpow.pop %v4121
        %v4123 = vmul.f32 %v3976, 1.442695
        %v4124 = vpow.pop %v4123
        %v4125 = vmul.f32 %v3977, 1.442695
        %v4126 = vpow.pop %v4125
        %v4127 = vmul.f32 %v3978, 1.442695
        %v4128 = vpow.pop %v4127
        %v4129 = vmul.f32 %v3979, 1.442695
        %v4130 = vpow.pop %v4129
        %v4131 = vmul.f32 %v3980, 1.442695
        %v4132 = vpow.pop %v4131
        %v4133 = vmul.f32 %v3981, 1.442695
        %v4134 = vpow.pop %v4133
        %v4135 = vmul.f32 %v3982, 1.442695
        %v4136 = vpow.pop %v4135
        %v4137 = vmul.f32 %v3983, 1.442695
        %v4138 = vpow.pop %v4137
        %v4139 = vmul.f32 %v3984, 1.442695
        %v4140 = vpow.pop %v4139
        %v4141 = vmul.f32 %v3985, 1.442695
        %v4142 = vpow.pop %v4141
        %v4143 = vmul.f32 %v3986, 1.442695
        %v4144 = vpow.pop %v4143
        %v4145 = vmul.f32 %v3987, 1.442695
        %v4146 = vpow.pop %v4145
        %v4147 = vmul.f32 %v3988, 1.442695
        %v4148 = vpow.pop %v4147
        %v4149 = vmul.f32 %v3989, 1.442695
        %v4150 = vpow.pop %v4149
        %v4151 = vmul.f32 %v3990, 1.442695
        %v4152 = vpow.pop %v4151
        %v4153 = vmul.f32 %v3991, 1.442695
        %v4154 = vpow.pop %v4153
        %v4155 = vmul.f32 %v3992, 1.442695
        %v4156 = vpow.pop %v4155
        %v4157 = vmul.f32 %v3993, 1.442695
        %v4158 = vpow.pop %v4157
        %v4159 = vmul.f32 %v3994, 1.442695
        %v4160 = vpow.pop %v4159
        %v4161 = vmul.f32 %v3995, 1.442695
        %v4162 = vpow.pop %v4161
        %v4163 = vmul.f32 %v3996, 1.442695
        %v4164 = vpow.pop %v4163
        %v4165 = vmul.f32 %v3997, 1.442695
        %v4166 = vpow.pop %v4165
        %v4167 = vmul.f32 %v3998, 1.442695
        %v4168 = vpow.pop %v4167
        %v4169 = vmul.f32 %v3999, 1.442695
        %v4170 = vpow.pop %v4169
        %v4171 = vmul.f32 %v4000, 1.442695
        %v4172 = vpow.pop %v4171
        %v4173 = vmul.f32 %v4001, 1.442695
        %v4174 = vpow.pop %v4173
        %v4175 = vmul.f32 %v4002, 1.442695
        %v4176 = vpow.pop %v4175
        %v4177 = vmul.f32 %v4003, 1.442695
        %v4178 = vpow.pop %v4177
        %v4179 = vmul.f32 %v4004, 1.442695
        %v4180 = vpow.pop %v4179
        %v4181 = vmul.f32 %v4005, 1.442695
        %v4182 = vpow.pop %v4181
        %v4183 = vmul.f32 %v4006, 1.442695
        %v4184 = vpow.pop %v4183
        %v4185 = vmul.f32 %v4007, 1.442695
        %v4186 = vpow.pop %v4185
        %v4187 = vmul.f32 %v4008, 1.442695
        %v4188 = vpow.pop %v4187
        %v4189 = vmul.f32 %v4009, 1.442695
        %v4190 = vpow.pop %v4189
        %v4191 = vmul.f32 %v4010, 1.442695
        %v4192 = vpow.pop %v4191
        %v4193 = vmul.f32 %v4011, 1.442695
        %v4194 = vpow.pop %v4193
        %v4195 = vmul.f32 %v4012, 1.442695
        %v4196 = vpow.pop %v4195
        %v4197 = vmul.f32 %v4013, 1.442695
        %v4198 = vpow.pop %v4197
        %v4199 = vmul.f32 %v4014, 1.442695
        %v4200 = vpow.pop %v4199
        %v4201 = vmul.f32 %v4015, 1.442695
        %v4202 = vpow.pop %v4201
        %v4203 = vmul.f32 %v4016, 1.442695
        %v4204 = vpow.pop %v4203
        %v4205 = vmul.f32 %v4017, 1.442695
        %v4206 = vpow.pop %v4205
        %v4207 = vmul.f32 %v4018, 1.442695
        %v4208 = vpow.pop %v4207
        %v4209 = vmul.f32 %v4019, 1.442695
        %v4210 = vpow.pop %v4209
        %v4211 = vmul.f32 %v4020, 1.442695
        %v4212 = vpow.pop %v4211
        %v4213 = vmul.f32 %v4021, 1.442695
        %v4214 = vpow.pop %v4213
        %v4215 = vmul.f32 %v4022, 1.442695
        %v4216 = vpow.pop %v4215
        %v4217 = vmul.f32 %v4023, 1.442695
        %v4218 = vpow.pop %v4217
        %v4219 = vmul.f32 %v4024, 1.442695
        %v4220 = vpow.pop %v4219
        %v4221 = vmul.f32 %v4025, 1.442695
        %v4222 = vpow.pop %v4221
        %v4223 = vmul.f32 %v4026, 1.442695
        %v4224 = vpow.pop %v4223
        %v4225 = vmul.f32 %v4027, 1.442695
        %v4226 = vpow.pop %v4225
        %v4227 = vmul.f32 %v4028, 1.442695
        %v4228 = vpow.pop %v4227
        %v4229 = vmul.f32 %v4029, 1.442695
        %v4230 = vpow.pop %v4229
        %v4231 = vmul.f32 %v4030, 1.442695
        %v4232 = vpow.pop %v4231
        %v4233 = vmul.f32 %v4031, 1.442695
        %v4234 = vpow.pop %v4233
        %v4235 = vmul.f32 %v4032, 1.442695
        %v4236 = vpow.pop %v4235
        %v4237 = vmul.f32 %v4033, 1.442695
        %v4238 = vpow.pop %v4237
        %v4239 = vmul.f32 %v4034, 1.442695
        %v4240 = vpow.pop %v4239
        %v4241 = vmul.f32 %v4035, 1.442695
        %v4242 = vpow.pop %v4241
        %v4243 = vmul.f32 %v4036, 1.442695
        %v4244 = vpow.pop %v4243
        %v4245 = vmul.f32 %v4037, 1.442695
        %v4246 = vpow.pop %v4245
        %v4247 = vmul.f32 %v4038, 1.442695
        %v4248 = vpow.pop %v4247
        %v4249 = vmul.f32 %v4039, 1.442695
        %v4250 = vpow.pop %v4249
        %v4251 = vmul.f32 %v4040, 1.442695
        %v4252 = vpow.pop %v4251
        %v4253 = vmul.f32 %v4041, 1.442695
        %v4254 = vpow.pop %v4253
        %v4255 = vmul.f32 %v4042, 1.442695
        %v4256 = vpow.pop %v4255
        %v4257 = vmul.f32 %v4043, 1.442695
        %v4258 = vpow.pop %v4257
        %v4259 = vmul.f32 %v4044, 1.442695
        %v4260 = vpow.pop %v4259
        %v4261 = vmul.f32 %v4045, 1.442695
        %v4262 = vpow.pop %v4261
        %v4263 = vmul.f32 %v4046, 1.442695
        %v4264 = vpow.pop %v4263
        %v4265 = vmul.f32 %v4047, 1.442695
        %v4266 = vpow.pop %v4265
        %v4267 = vmul.f32 %v4048, 1.442695
        %v4268 = vpow.pop %v4267
        %v4269 = vmul.f32 %v4049, 1.442695
        %v4270 = vpow.pop %v4269
        %v4271 = vmul.f32 %v4050, 1.442695
        %v4272 = vpow.pop %v4271
        %v4273 = vmul.f32 %v4051, 1.442695
        %v4274 = vpow.pop %v4273
        %v4275 = vmul.f32 %v4052, 1.442695
        %v4276 = vpow.pop %v4275
        %v4277 = vadd.f32 %v4054, 1.0
        %v4278 = vlog2.pop %v4277
        %v4279 = vmul.f32 %v4278, 0.6931472
        %v4280 = vmul.f32 -0.5, %v4054
        %v4281 = vadd.f32 %v4280, 1.0
        %v4282 = vmul.f32 %v4281, %v4054
        %v4283 = vand.u32 2147483647, %v4054
        %vm4284 = vcmp.lt.f32.partialorder %v4283, 0.0004427343
        %v4285 = vsel %vm4284, %v4282, %v4279
        %v4286 = vadd.f32 %v4056, 1.0
        %v4287 = vlog2.pop %v4286
        %v4288 = vmul.f32 %v4287, 0.6931472
        %v4289 = vmul.f32 -0.5, %v4056
        %v4290 = vadd.f32 %v4289, 1.0
        %v4291 = vmul.f32 %v4290, %v4056
        %v4292 = vand.u32 2147483647, %v4056
        %vm4293 = vcmp.lt.f32.partialorder %v4292, 0.0004427343
        %v4294 = vsel %vm4293, %v4291, %v4288
        %v4295 = vadd.f32 %v4058, 1.0
        %v4296 = vlog2.pop %v4295
        %v4297 = vmul.f32 %v4296, 0.6931472
        %v4298 = vmul.f32 -0.5, %v4058
        %v4299 = vadd.f32 %v4298, 1.0
        %v4300 = vmul.f32 %v4299, %v4058
        %v4301 = vand.u32 2147483647, %v4058
        %vm4302 = vcmp.lt.f32.partialorder %v4301, 0.0004427343
        %v4303 = vsel %vm4302, %v4300, %v4297
        %v4304 = vadd.f32 %v4060, 1.0
        %v4305 = vlog2.pop %v4304
        %v4306 = vmul.f32 %v4305, 0.6931472
        %v4307 = vmul.f32 -0.5, %v4060
        %v4308 = vadd.f32 %v4307, 1.0
        %v4309 = vmul.f32 %v4308, %v4060
        %v4310 = vand.u32 2147483647, %v4060
        %vm4311 = vcmp.lt.f32.partialorder %v4310, 0.0004427343
        %v4312 = vsel %vm4311, %v4309, %v4306
        %v4313 = vadd.f32 %v4062, 1.0
        %v4314 = vlog2.pop %v4313
        %v4315 = vmul.f32 %v4314, 0.6931472
        %v4316 = vmul.f32 -0.5, %v4062
        %v4317 = vadd.f32 %v4316, 1.0
        %v4318 = vmul.f32 %v4317, %v4062
        %v4319 = vand.u32 2147483647, %v4062
        %vm4320 = vcmp.lt.f32.partialorder %v4319, 0.0004427343
        %v4321 = vsel %vm4320, %v4318, %v4315
        %v4322 = vadd.f32 %v4064, 1.0
        %v4323 = vlog2.pop %v4322
        %v4324 = vmul.f32 %v4323, 0.6931472
        %v4325 = vmul.f32 -0.5, %v4064
        %v4326 = vadd.f32 %v4325, 1.0
        %v4327 = vmul.f32 %v4326, %v4064
        %v4328 = vand.u32 2147483647, %v4064
        %vm4329 = vcmp.lt.f32.partialorder %v4328, 0.0004427343
        %v4330 = vsel %vm4329, %v4327, %v4324
        %v4331 = vadd.f32 %v4066, 1.0
        %v4332 = vlog2.pop %v4331
        %v4333 = vmul.f32 %v4332, 0.6931472
        %v4334 = vmul.f32 -0.5, %v4066
        %v4335 = vadd.f32 %v4334, 1.0
        %v4336 = vmul.f32 %v4335, %v4066
        %v4337 = vand.u32 2147483647, %v4066
        %vm4338 = vcmp.lt.f32.partialorder %v4337, 0.0004427343
        %v4339 = vsel %vm4338, %v4336, %v4333
        %v4340 = vadd.f32 %v4068, 1.0
        %v4341 = vlog2.pop %v4340
        %v4342 = vmul.f32 %v4341, 0.6931472
        %v4343 = vmul.f32 -0.5, %v4068
        %v4344 = vadd.f32 %v4343, 1.0
        %v4345 = vmul.f32 %v4344, %v4068
        %v4346 = vand.u32 2147483647, %v4068
        %vm4347 = vcmp.lt.f32.partialorder %v4346, 0.0004427343
        %v4348 = vsel %vm4347, %v4345, %v4342
        %v4349 = vadd.f32 %v4070, 1.0
        %v4350 = vlog2.pop %v4349
        %v4351 = vmul.f32 %v4350, 0.6931472
        %v4352 = vmul.f32 -0.5, %v4070
        %v4353 = vadd.f32 %v4352, 1.0
        %v4354 = vmul.f32 %v4353, %v4070
        %v4355 = vand.u32 2147483647, %v4070
        %vm4356 = vcmp.lt.f32.partialorder %v4355, 0.0004427343
        %v4357 = vsel %vm4356, %v4354, %v4351
        %v4358 = vadd.f32 %v4072, 1.0
        %v4359 = vlog2.pop %v4358
        %v4360 = vmul.f32 %v4359, 0.6931472
        %v4361 = vmul.f32 -0.5, %v4072
        %v4362 = vadd.f32 %v4361, 1.0
        %v4363 = vmul.f32 %v4362, %v4072
        %v4364 = vand.u32 2147483647, %v4072
        %vm4365 = vcmp.lt.f32.partialorder %v4364, 0.0004427343
        %v4366 = vsel %vm4365, %v4363, %v4360
        %v4367 = vadd.f32 %v4074, 1.0
        %v4368 = vlog2.pop %v4367
        %v4369 = vmul.f32 %v4368, 0.6931472
        %v4370 = vmul.f32 -0.5, %v4074
        %v4371 = vadd.f32 %v4370, 1.0
        %v4372 = vmul.f32 %v4371, %v4074
        %v4373 = vand.u32 2147483647, %v4074
        %vm4374 = vcmp.lt.f32.partialorder %v4373, 0.0004427343
        %v4375 = vsel %vm4374, %v4372, %v4369
        %v4376 = vadd.f32 %v4076, 1.0
        %v4377 = vlog2.pop %v4376
        %v4378 = vmul.f32 %v4377, 0.6931472
        %v4379 = vmul.f32 -0.5, %v4076
        %v4380 = vadd.f32 %v4379, 1.0
        %v4381 = vmul.f32 %v4380, %v4076
        %v4382 = vand.u32 2147483647, %v4076
        %vm4383 = vcmp.lt.f32.partialorder %v4382, 0.0004427343
        %v4384 = vsel %vm4383, %v4381, %v4378
        %v4385 = vadd.f32 %v4078, 1.0
        %v4386 = vlog2.pop %v4385
        %v4387 = vmul.f32 %v4386, 0.6931472
        %v4388 = vmul.f32 -0.5, %v4078
        %v4389 = vadd.f32 %v4388, 1.0
        %v4390 = vmul.f32 %v4389, %v4078
        %v4391 = vand.u32 2147483647, %v4078
        %vm4392 = vcmp.lt.f32.partialorder %v4391, 0.0004427343
        %v4393 = vsel %vm4392, %v4390, %v4387
        %v4394 = vadd.f32 %v4080, 1.0
        %v4395 = vlog2.pop %v4394
        %v4396 = vmul.f32 %v4395, 0.6931472
        %v4397 = vmul.f32 -0.5, %v4080
        %v4398 = vadd.f32 %v4397, 1.0
        %v4399 = vmul.f32 %v4398, %v4080
        %v4400 = vand.u32 2147483647, %v4080
        %vm4401 = vcmp.lt.f32.partialorder %v4400, 0.0004427343
        %v4402 = vsel %vm4401, %v4399, %v4396
        %v4403 = vadd.f32 %v4082, 1.0
        %v4404 = vlog2.pop %v4403
        %v4405 = vmul.f32 %v4404, 0.6931472
        %v4406 = vmul.f32 -0.5, %v4082
        %v4407 = vadd.f32 %v4406, 1.0
        %v4408 = vmul.f32 %v4407, %v4082
        %v4409 = vand.u32 2147483647, %v4082
        %vm4410 = vcmp.lt.f32.partialorder %v4409, 0.0004427343
        %v4411 = vsel %vm4410, %v4408, %v4405
        %v4412 = vadd.f32 %v4084, 1.0
        %v4413 = vlog2.pop %v4412
        %v4414 = vmul.f32 %v4413, 0.6931472
        %v4415 = vmul.f32 -0.5, %v4084
        %v4416 = vadd.f32 %v4415, 1.0
        %v4417 = vmul.f32 %v4416, %v4084
        %v4418 = vand.u32 2147483647, %v4084
        %vm4419 = vcmp.lt.f32.partialorder %v4418, 0.0004427343
        %v4420 = vsel %vm4419, %v4417, %v4414
        %v4421 = vadd.f32 %v4086, 1.0
        %v4422 = vlog2.pop %v4421
        %v4423 = vmul.f32 %v4422, 0.6931472
        %v4424 = vmul.f32 -0.5, %v4086
        %v4425 = vadd.f32 %v4424, 1.0
        %v4426 = vmul.f32 %v4425, %v4086
        %v4427 = vand.u32 2147483647, %v4086
        %vm4428 = vcmp.lt.f32.partialorder %v4427, 0.0004427343
        %v4429 = vsel %vm4428, %v4426, %v4423
        %v4430 = vadd.f32 %v4088, 1.0
        %v4431 = vlog2.pop %v4430
        %v4432 = vmul.f32 %v4431, 0.6931472
        %v4433 = vmul.f32 -0.5, %v4088
        %v4434 = vadd.f32 %v4433, 1.0
        %v4435 = vmul.f32 %v4434, %v4088
        %v4436 = vand.u32 2147483647, %v4088
        %vm4437 = vcmp.lt.f32.partialorder %v4436, 0.0004427343
        %v4438 = vsel %vm4437, %v4435, %v4432
        %v4439 = vadd.f32 %v4090, 1.0
        %v4440 = vlog2.pop %v4439
        %v4441 = vmul.f32 %v4440, 0.6931472
        %v4442 = vmul.f32 -0.5, %v4090
        %v4443 = vadd.f32 %v4442, 1.0
        %v4444 = vmul.f32 %v4443, %v4090
        %v4445 = vand.u32 2147483647, %v4090
        %vm4446 = vcmp.lt.f32.partialorder %v4445, 0.0004427343
        %v4447 = vsel %vm4446, %v4444, %v4441
        %v4448 = vadd.f32 %v4092, 1.0
        %v4449 = vlog2.pop %v4448
        %v4450 = vmul.f32 %v4449, 0.6931472
        %v4451 = vmul.f32 -0.5, %v4092
        %v4452 = vadd.f32 %v4451, 1.0
        %v4453 = vmul.f32 %v4452, %v4092
        %v4454 = vand.u32 2147483647, %v4092
        %vm4455 = vcmp.lt.f32.partialorder %v4454, 0.0004427343
        %v4456 = vsel %vm4455, %v4453, %v4450
        %v4457 = vadd.f32 %v4094, 1.0
        %v4458 = vlog2.pop %v4457
        %v4459 = vmul.f32 %v4458, 0.6931472
        %v4460 = vmul.f32 -0.5, %v4094
        %v4461 = vadd.f32 %v4460, 1.0
        %v4462 = vmul.f32 %v4461, %v4094
        %v4463 = vand.u32 2147483647, %v4094
        %vm4464 = vcmp.lt.f32.partialorder %v4463, 0.0004427343
        %v4465 = vsel %vm4464, %v4462, %v4459
        %v4466 = vadd.f32 %v4096, 1.0
        %v4467 = vlog2.pop %v4466
        %v4468 = vmul.f32 %v4467, 0.6931472
        %v4469 = vmul.f32 -0.5, %v4096
        %v4470 = vadd.f32 %v4469, 1.0
        %v4471 = vmul.f32 %v4470, %v4096
        %v4472 = vand.u32 2147483647, %v4096
        %vm4473 = vcmp.lt.f32.partialorder %v4472, 0.0004427343
        %v4474 = vsel %vm4473, %v4471, %v4468
        %v4475 = vadd.f32 %v4098, 1.0
        %v4476 = vlog2.pop %v4475
        %v4477 = vmul.f32 %v4476, 0.6931472
        %v4478 = vmul.f32 -0.5, %v4098
        %v4479 = vadd.f32 %v4478, 1.0
        %v4480 = vmul.f32 %v4479, %v4098
        %v4481 = vand.u32 2147483647, %v4098
        %vm4482 = vcmp.lt.f32.partialorder %v4481, 0.0004427343
        %v4483 = vsel %vm4482, %v4480, %v4477
        %v4484 = vadd.f32 %v4100, 1.0
        %v4485 = vlog2.pop %v4484
        %v4486 = vmul.f32 %v4485, 0.6931472
        %v4487 = vmul.f32 -0.5, %v4100
        %v4488 = vadd.f32 %v4487, 1.0
        %v4489 = vmul.f32 %v4488, %v4100
        %v4490 = vand.u32 2147483647, %v4100
        %vm4491 = vcmp.lt.f32.partialorder %v4490, 0.0004427343
        %v4492 = vsel %vm4491, %v4489, %v4486
        %v4493 = vadd.f32 %v4102, 1.0
        %v4494 = vlog2.pop %v4493
        %v4495 = vmul.f32 %v4494, 0.6931472
        %v4496 = vmul.f32 -0.5, %v4102
        %v4497 = vadd.f32 %v4496, 1.0
        %v4498 = vmul.f32 %v4497, %v4102
        %v4499 = vand.u32 2147483647, %v4102
        %vm4500 = vcmp.lt.f32.partialorder %v4499, 0.0004427343
        %v4501 = vsel %vm4500, %v4498, %v4495
        %v4502 = vadd.f32 %v4104, 1.0
        %v4503 = vlog2.pop %v4502
        %v4504 = vmul.f32 %v4503, 0.6931472
        %v4505 = vmul.f32 -0.5, %v4104
        %v4506 = vadd.f32 %v4505, 1.0
        %v4507 = vmul.f32 %v4506, %v4104
        %v4508 = vand.u32 2147483647, %v4104
        %vm4509 = vcmp.lt.f32.partialorder %v4508, 0.0004427343
        %v4510 = vsel %vm4509, %v4507, %v4504
        %v4511 = vadd.f32 %v4106, 1.0
        %v4512 = vlog2.pop %v4511
        %v4513 = vmul.f32 %v4512, 0.6931472
        %v4514 = vmul.f32 -0.5, %v4106
        %v4515 = vadd.f32 %v4514, 1.0
        %v4516 = vmul.f32 %v4515, %v4106
        %v4517 = vand.u32 2147483647, %v4106
        %vm4518 = vcmp.lt.f32.partialorder %v4517, 0.0004427343
        %v4519 = vsel %vm4518, %v4516, %v4513
        %v4520 = vadd.f32 %v4108, 1.0
        %v4521 = vlog2.pop %v4520
        %v4522 = vmul.f32 %v4521, 0.6931472
        %v4523 = vmul.f32 -0.5, %v4108
        %v4524 = vadd.f32 %v4523, 1.0
        %v4525 = vmul.f32 %v4524, %v4108
        %v4526 = vand.u32 2147483647, %v4108
        %vm4527 = vcmp.lt.f32.partialorder %v4526, 0.0004427343
        %v4528 = vsel %vm4527, %v4525, %v4522
        %v4529 = vadd.f32 %v4110, 1.0
        %v4530 = vlog2.pop %v4529
        %v4531 = vmul.f32 %v4530, 0.6931472
        %v4532 = vmul.f32 -0.5, %v4110
        %v4533 = vadd.f32 %v4532, 1.0
        %v4534 = vmul.f32 %v4533, %v4110
        %v4535 = vand.u32 2147483647, %v4110
        %vm4536 = vcmp.lt.f32.partialorder %v4535, 0.0004427343
        %v4537 = vsel %vm4536, %v4534, %v4531
        %v4538 = vadd.f32 %v4112, 1.0
        %v4539 = vlog2.pop %v4538
        %v4540 = vmul.f32 %v4539, 0.6931472
        %v4541 = vmul.f32 -0.5, %v4112
        %v4542 = vadd.f32 %v4541, 1.0
        %v4543 = vmul.f32 %v4542, %v4112
        %v4544 = vand.u32 2147483647, %v4112
        %vm4545 = vcmp.lt.f32.partialorder %v4544, 0.0004427343
        %v4546 = vsel %vm4545, %v4543, %v4540
        %v4547 = vadd.f32 %v4114, 1.0
        %v4548 = vlog2.pop %v4547
        %v4549 = vmul.f32 %v4548, 0.6931472
        %v4550 = vmul.f32 -0.5, %v4114
        %v4551 = vadd.f32 %v4550, 1.0
        %v4552 = vmul.f32 %v4551, %v4114
        %v4553 = vand.u32 2147483647, %v4114
        %vm4554 = vcmp.lt.f32.partialorder %v4553, 0.0004427343
        %v4555 = vsel %vm4554, %v4552, %v4549
        %v4556 = vadd.f32 %v4116, 1.0
        %v4557 = vlog2.pop %v4556
        %v4558 = vmul.f32 %v4557, 0.6931472
        %v4559 = vmul.f32 -0.5, %v4116
        %v4560 = vadd.f32 %v4559, 1.0
        %v4561 = vmul.f32 %v4560, %v4116
        %v4562 = vand.u32 2147483647, %v4116
        %vm4563 = vcmp.lt.f32.partialorder %v4562, 0.0004427343
        %v4564 = vsel %vm4563, %v4561, %v4558
        %v4565 = vadd.f32 %v4118, 1.0
        %v4566 = vlog2.pop %v4565
        %v4567 = vmul.f32 %v4566, 0.6931472
        %v4568 = vmul.f32 -0.5, %v4118
        %v4569 = vadd.f32 %v4568, 1.0
        %v4570 = vmul.f32 %v4569, %v4118
        %v4571 = vand.u32 2147483647, %v4118
        %vm4572 = vcmp.lt.f32.partialorder %v4571, 0.0004427343
        %v4573 = vsel %vm4572, %v4570, %v4567
        %v4574 = vadd.f32 %v4120, 1.0
        %v4575 = vlog2.pop %v4574
        %v4576 = vmul.f32 %v4575, 0.6931472
        %v4577 = vmul.f32 -0.5, %v4120
        %v4578 = vadd.f32 %v4577, 1.0
        %v4579 = vmul.f32 %v4578, %v4120
        %v4580 = vand.u32 2147483647, %v4120
        %vm4581 = vcmp.lt.f32.partialorder %v4580, 0.0004427343
        %v4582 = vsel %vm4581, %v4579, %v4576
        %v4583 = vadd.f32 %v4122, 1.0
        %v4584 = vlog2.pop %v4583
        %v4585 = vmul.f32 %v4584, 0.6931472
        %v4586 = vmul.f32 -0.5, %v4122
        %v4587 = vadd.f32 %v4586, 1.0
        %v4588 = vmul.f32 %v4587, %v4122
        %v4589 = vand.u32 2147483647, %v4122
        %vm4590 = vcmp.lt.f32.partialorder %v4589, 0.0004427343
        %v4591 = vsel %vm4590, %v4588, %v4585
        %v4592 = vadd.f32 %v4124, 1.0
        %v4593 = vlog2.pop %v4592
        %v4594 = vmul.f32 %v4593, 0.6931472
        %v4595 = vmul.f32 -0.5, %v4124
        %v4596 = vadd.f32 %v4595, 1.0
        %v4597 = vmul.f32 %v4596, %v4124
        %v4598 = vand.u32 2147483647, %v4124
        %vm4599 = vcmp.lt.f32.partialorder %v4598, 0.0004427343
        %v4600 = vsel %vm4599, %v4597, %v4594
        %v4601 = vadd.f32 %v4126, 1.0
        %v4602 = vlog2.pop %v4601
        %v4603 = vmul.f32 %v4602, 0.6931472
        %v4604 = vmul.f32 -0.5, %v4126
        %v4605 = vadd.f32 %v4604, 1.0
        %v4606 = vmul.f32 %v4605, %v4126
        %v4607 = vand.u32 2147483647, %v4126
        %vm4608 = vcmp.lt.f32.partialorder %v4607, 0.0004427343
        %v4609 = vsel %vm4608, %v4606, %v4603
        %v4610 = vadd.f32 %v4128, 1.0
        %v4611 = vlog2.pop %v4610
        %v4612 = vmul.f32 %v4611, 0.6931472
        %v4613 = vmul.f32 -0.5, %v4128
        %v4614 = vadd.f32 %v4613, 1.0
        %v4615 = vmul.f32 %v4614, %v4128
        %v4616 = vand.u32 2147483647, %v4128
        %vm4617 = vcmp.lt.f32.partialorder %v4616, 0.0004427343
        %v4618 = vsel %vm4617, %v4615, %v4612
        %v4619 = vadd.f32 %v4130, 1.0
        %v4620 = vlog2.pop %v4619
        %v4621 = vmul.f32 %v4620, 0.6931472
        %v4622 = vmul.f32 -0.5, %v4130
        %v4623 = vadd.f32 %v4622, 1.0
        %v4624 = vmul.f32 %v4623, %v4130
        %v4625 = vand.u32 2147483647, %v4130
        %vm4626 = vcmp.lt.f32.partialorder %v4625, 0.0004427343
        %v4627 = vsel %vm4626, %v4624, %v4621
        %v4628 = vadd.f32 %v4132, 1.0
        %v4629 = vlog2.pop %v4628
        %v4630 = vmul.f32 %v4629, 0.6931472
        %v4631 = vmul.f32 -0.5, %v4132
        %v4632 = vadd.f32 %v4631, 1.0
        %v4633 = vmul.f32 %v4632, %v4132
        %v4634 = vand.u32 2147483647, %v4132
        %vm4635 = vcmp.lt.f32.partialorder %v4634, 0.0004427343
        %v4636 = vsel %vm4635, %v4633, %v4630
        %v4637 = vadd.f32 %v4134, 1.0
        %v4638 = vlog2.pop %v4637
        %v4639 = vmul.f32 %v4638, 0.6931472
        %v4640 = vmul.f32 -0.5, %v4134
        %v4641 = vadd.f32 %v4640, 1.0
        %v4642 = vmul.f32 %v4641, %v4134
        %v4643 = vand.u32 2147483647, %v4134
        %vm4644 = vcmp.lt.f32.partialorder %v4643, 0.0004427343
        %v4645 = vsel %vm4644, %v4642, %v4639
        %v4646 = vadd.f32 %v4136, 1.0
        %v4647 = vlog2.pop %v4646
        %v4648 = vmul.f32 %v4647, 0.6931472
        %v4649 = vmul.f32 -0.5, %v4136
        %v4650 = vadd.f32 %v4649, 1.0
        %v4651 = vmul.f32 %v4650, %v4136
        %v4652 = vand.u32 2147483647, %v4136
        %vm4653 = vcmp.lt.f32.partialorder %v4652, 0.0004427343
        %v4654 = vsel %vm4653, %v4651, %v4648
        %v4655 = vadd.f32 %v4138, 1.0
        %v4656 = vlog2.pop %v4655
        %v4657 = vmul.f32 %v4656, 0.6931472
        %v4658 = vmul.f32 -0.5, %v4138
        %v4659 = vadd.f32 %v4658, 1.0
        %v4660 = vmul.f32 %v4659, %v4138
        %v4661 = vand.u32 2147483647, %v4138
        %vm4662 = vcmp.lt.f32.partialorder %v4661, 0.0004427343
        %v4663 = vsel %vm4662, %v4660, %v4657
        %v4664 = vadd.f32 %v4140, 1.0
        %v4665 = vlog2.pop %v4664
        %v4666 = vmul.f32 %v4665, 0.6931472
        %v4667 = vmul.f32 -0.5, %v4140
        %v4668 = vadd.f32 %v4667, 1.0
        %v4669 = vmul.f32 %v4668, %v4140
        %v4670 = vand.u32 2147483647, %v4140
        %vm4671 = vcmp.lt.f32.partialorder %v4670, 0.0004427343
        %v4672 = vsel %vm4671, %v4669, %v4666
        %v4673 = vadd.f32 %v4142, 1.0
        %v4674 = vlog2.pop %v4673
        %v4675 = vmul.f32 %v4674, 0.6931472
        %v4676 = vmul.f32 -0.5, %v4142
        %v4677 = vadd.f32 %v4676, 1.0
        %v4678 = vmul.f32 %v4677, %v4142
        %v4679 = vand.u32 2147483647, %v4142
        %vm4680 = vcmp.lt.f32.partialorder %v4679, 0.0004427343
        %v4681 = vsel %vm4680, %v4678, %v4675
        %v4682 = vadd.f32 %v4144, 1.0
        %v4683 = vlog2.pop %v4682
        %v4684 = vmul.f32 %v4683, 0.6931472
        %v4685 = vmul.f32 -0.5, %v4144
        %v4686 = vadd.f32 %v4685, 1.0
        %v4687 = vmul.f32 %v4686, %v4144
        %v4688 = vand.u32 2147483647, %v4144
        %vm4689 = vcmp.lt.f32.partialorder %v4688, 0.0004427343
        %v4690 = vsel %vm4689, %v4687, %v4684
        %v4691 = vadd.f32 %v4146, 1.0
        %v4692 = vlog2.pop %v4691
        %v4693 = vmul.f32 %v4692, 0.6931472
        %v4694 = vmul.f32 -0.5, %v4146
        %v4695 = vadd.f32 %v4694, 1.0
        %v4696 = vmul.f32 %v4695, %v4146
        %v4697 = vand.u32 2147483647, %v4146
        %vm4698 = vcmp.lt.f32.partialorder %v4697, 0.0004427343
        %v4699 = vsel %vm4698, %v4696, %v4693
        %v4700 = vadd.f32 %v4148, 1.0
        %v4701 = vlog2.pop %v4700
        %v4702 = vmul.f32 %v4701, 0.6931472
        %v4703 = vmul.f32 -0.5, %v4148
        %v4704 = vadd.f32 %v4703, 1.0
        %v4705 = vmul.f32 %v4704, %v4148
        %v4706 = vand.u32 2147483647, %v4148
        %vm4707 = vcmp.lt.f32.partialorder %v4706, 0.0004427343
        %v4708 = vsel %vm4707, %v4705, %v4702
        %v4709 = vadd.f32 %v4150, 1.0
        %v4710 = vlog2.pop %v4709
        %v4711 = vmul.f32 %v4710, 0.6931472
        %v4712 = vmul.f32 -0.5, %v4150
        %v4713 = vadd.f32 %v4712, 1.0
        %v4714 = vmul.f32 %v4713, %v4150
        %v4715 = vand.u32 2147483647, %v4150
        %vm4716 = vcmp.lt.f32.partialorder %v4715, 0.0004427343
        %v4717 = vsel %vm4716, %v4714, %v4711
        %v4718 = vadd.f32 %v4152, 1.0
        %v4719 = vlog2.pop %v4718
        %v4720 = vmul.f32 %v4719, 0.6931472
        %v4721 = vmul.f32 -0.5, %v4152
        %v4722 = vadd.f32 %v4721, 1.0
        %v4723 = vmul.f32 %v4722, %v4152
        %v4724 = vand.u32 2147483647, %v4152
        %vm4725 = vcmp.lt.f32.partialorder %v4724, 0.0004427343
        %v4726 = vsel %vm4725, %v4723, %v4720
        %v4727 = vadd.f32 %v4154, 1.0
        %v4728 = vlog2.pop %v4727
        %v4729 = vmul.f32 %v4728, 0.6931472
        %v4730 = vmul.f32 -0.5, %v4154
        %v4731 = vadd.f32 %v4730, 1.0
        %v4732 = vmul.f32 %v4731, %v4154
        %v4733 = vand.u32 2147483647, %v4154
        %vm4734 = vcmp.lt.f32.partialorder %v4733, 0.0004427343
        %v4735 = vsel %vm4734, %v4732, %v4729
        %v4736 = vadd.f32 %v4156, 1.0
        %v4737 = vlog2.pop %v4736
        %v4738 = vmul.f32 %v4737, 0.6931472
        %v4739 = vmul.f32 -0.5, %v4156
        %v4740 = vadd.f32 %v4739, 1.0
        %v4741 = vmul.f32 %v4740, %v4156
        %v4742 = vand.u32 2147483647, %v4156
        %vm4743 = vcmp.lt.f32.partialorder %v4742, 0.0004427343
        %v4744 = vsel %vm4743, %v4741, %v4738
        %v4745 = vadd.f32 %v4158, 1.0
        %v4746 = vlog2.pop %v4745
        %v4747 = vmul.f32 %v4746, 0.6931472
        %v4748 = vmul.f32 -0.5, %v4158
        %v4749 = vadd.f32 %v4748, 1.0
        %v4750 = vmul.f32 %v4749, %v4158
        %v4751 = vand.u32 2147483647, %v4158
        %vm4752 = vcmp.lt.f32.partialorder %v4751, 0.0004427343
        %v4753 = vsel %vm4752, %v4750, %v4747
        %v4754 = vadd.f32 %v4160, 1.0
        %v4755 = vlog2.pop %v4754
        %v4756 = vmul.f32 %v4755, 0.6931472
        %v4757 = vmul.f32 -0.5, %v4160
        %v4758 = vadd.f32 %v4757, 1.0
        %v4759 = vmul.f32 %v4758, %v4160
        %v4760 = vand.u32 2147483647, %v4160
        %vm4761 = vcmp.lt.f32.partialorder %v4760, 0.0004427343
        %v4762 = vsel %vm4761, %v4759, %v4756
        %v4763 = vadd.f32 %v4162, 1.0
        %v4764 = vlog2.pop %v4763
        %v4765 = vmul.f32 %v4764, 0.6931472
        %v4766 = vmul.f32 -0.5, %v4162
        %v4767 = vadd.f32 %v4766, 1.0
        %v4768 = vmul.f32 %v4767, %v4162
        %v4769 = vand.u32 2147483647, %v4162
        %vm4770 = vcmp.lt.f32.partialorder %v4769, 0.0004427343
        %v4771 = vsel %vm4770, %v4768, %v4765
        %v4772 = vadd.f32 %v4164, 1.0
        %v4773 = vlog2.pop %v4772
        %v4774 = vmul.f32 %v4773, 0.6931472
        %v4775 = vmul.f32 -0.5, %v4164
        %v4776 = vadd.f32 %v4775, 1.0
        %v4777 = vmul.f32 %v4776, %v4164
        %v4778 = vand.u32 2147483647, %v4164
        %vm4779 = vcmp.lt.f32.partialorder %v4778, 0.0004427343
        %v4780 = vsel %vm4779, %v4777, %v4774
        %v4781 = vadd.f32 %v4166, 1.0
        %v4782 = vlog2.pop %v4781
        %v4783 = vmul.f32 %v4782, 0.6931472
        %v4784 = vmul.f32 -0.5, %v4166
        %v4785 = vadd.f32 %v4784, 1.0
        %v4786 = vmul.f32 %v4785, %v4166
        %v4787 = vand.u32 2147483647, %v4166
        %vm4788 = vcmp.lt.f32.partialorder %v4787, 0.0004427343
        %v4789 = vsel %vm4788, %v4786, %v4783
        %v4790 = vadd.f32 %v4168, 1.0
        %v4791 = vlog2.pop %v4790
        %v4792 = vmul.f32 %v4791, 0.6931472
        %v4793 = vmul.f32 -0.5, %v4168
        %v4794 = vadd.f32 %v4793, 1.0
        %v4795 = vmul.f32 %v4794, %v4168
        %v4796 = vand.u32 2147483647, %v4168
        %vm4797 = vcmp.lt.f32.partialorder %v4796, 0.0004427343
        %v4798 = vsel %vm4797, %v4795, %v4792
        %v4799 = vadd.f32 %v4170, 1.0
        %v4800 = vlog2.pop %v4799
        %v4801 = vmul.f32 %v4800, 0.6931472
        %v4802 = vmul.f32 -0.5, %v4170
        %v4803 = vadd.f32 %v4802, 1.0
        %v4804 = vmul.f32 %v4803, %v4170
        %v4805 = vand.u32 2147483647, %v4170
        %vm4806 = vcmp.lt.f32.partialorder %v4805, 0.0004427343
        %v4807 = vsel %vm4806, %v4804, %v4801
        %v4808 = vadd.f32 %v4172, 1.0
        %v4809 = vlog2.pop %v4808
        %v4810 = vmul.f32 %v4809, 0.6931472
        %v4811 = vmul.f32 -0.5, %v4172
        %v4812 = vadd.f32 %v4811, 1.0
        %v4813 = vmul.f32 %v4812, %v4172
        %v4814 = vand.u32 2147483647, %v4172
        %vm4815 = vcmp.lt.f32.partialorder %v4814, 0.0004427343
        %v4816 = vsel %vm4815, %v4813, %v4810
        %v4817 = vadd.f32 %v4174, 1.0
        %v4818 = vlog2.pop %v4817
        %v4819 = vmul.f32 %v4818, 0.6931472
        %v4820 = vmul.f32 -0.5, %v4174
        %v4821 = vadd.f32 %v4820, 1.0
        %v4822 = vmul.f32 %v4821, %v4174
        %v4823 = vand.u32 2147483647, %v4174
        %vm4824 = vcmp.lt.f32.partialorder %v4823, 0.0004427343
        %v4825 = vsel %vm4824, %v4822, %v4819
        %v4826 = vadd.f32 %v4176, 1.0
        %v4827 = vlog2.pop %v4826
        %v4828 = vmul.f32 %v4827, 0.6931472
        %v4829 = vmul.f32 -0.5, %v4176
        %v4830 = vadd.f32 %v4829, 1.0
        %v4831 = vmul.f32 %v4830, %v4176
        %v4832 = vand.u32 2147483647, %v4176
        %vm4833 = vcmp.lt.f32.partialorder %v4832, 0.0004427343
        %v4834 = vsel %vm4833, %v4831, %v4828
        %v4835 = vadd.f32 %v4178, 1.0
        %v4836 = vlog2.pop %v4835
        %v4837 = vmul.f32 %v4836, 0.6931472
        %v4838 = vmul.f32 -0.5, %v4178
        %v4839 = vadd.f32 %v4838, 1.0
        %v4840 = vmul.f32 %v4839, %v4178
        %v4841 = vand.u32 2147483647, %v4178
        %vm4842 = vcmp.lt.f32.partialorder %v4841, 0.0004427343
        %v4843 = vsel %vm4842, %v4840, %v4837
        %v4844 = vadd.f32 %v4180, 1.0
        %v4845 = vlog2.pop %v4844
        %v4846 = vmul.f32 %v4845, 0.6931472
        %v4847 = vmul.f32 -0.5, %v4180
        %v4848 = vadd.f32 %v4847, 1.0
        %v4849 = vmul.f32 %v4848, %v4180
        %v4850 = vand.u32 2147483647, %v4180
        %vm4851 = vcmp.lt.f32.partialorder %v4850, 0.0004427343
        %v4852 = vsel %vm4851, %v4849, %v4846
        %v4853 = vadd.f32 %v4182, 1.0
        %v4854 = vlog2.pop %v4853
        %v4855 = vmul.f32 %v4854, 0.6931472
        %v4856 = vmul.f32 -0.5, %v4182
        %v4857 = vadd.f32 %v4856, 1.0
        %v4858 = vmul.f32 %v4857, %v4182
        %v4859 = vand.u32 2147483647, %v4182
        %vm4860 = vcmp.lt.f32.partialorder %v4859, 0.0004427343
        %v4861 = vsel %vm4860, %v4858, %v4855
        %v4862 = vadd.f32 %v4184, 1.0
        %v4863 = vlog2.pop %v4862
        %v4864 = vmul.f32 %v4863, 0.6931472
        %v4865 = vmul.f32 -0.5, %v4184
        %v4866 = vadd.f32 %v4865, 1.0
        %v4867 = vmul.f32 %v4866, %v4184
        %v4868 = vand.u32 2147483647, %v4184
        %vm4869 = vcmp.lt.f32.partialorder %v4868, 0.0004427343
        %v4870 = vsel %vm4869, %v4867, %v4864
        %v4871 = vadd.f32 %v4186, 1.0
        %v4872 = vlog2.pop %v4871
        %v4873 = vmul.f32 %v4872, 0.6931472
        %v4874 = vmul.f32 -0.5, %v4186
        %v4875 = vadd.f32 %v4874, 1.0
        %v4876 = vmul.f32 %v4875, %v4186
        %v4877 = vand.u32 2147483647, %v4186
        %vm4878 = vcmp.lt.f32.partialorder %v4877, 0.0004427343
        %v4879 = vsel %vm4878, %v4876, %v4873
        %v4880 = vadd.f32 %v4188, 1.0
        %v4881 = vlog2.pop %v4880
        %v4882 = vmul.f32 %v4881, 0.6931472
        %v4883 = vmul.f32 -0.5, %v4188
        %v4884 = vadd.f32 %v4883, 1.0
        %v4885 = vmul.f32 %v4884, %v4188
        %v4886 = vand.u32 2147483647, %v4188
        %vm4887 = vcmp.lt.f32.partialorder %v4886, 0.0004427343
        %v4888 = vsel %vm4887, %v4885, %v4882
        %v4889 = vadd.f32 %v4190, 1.0
        %v4890 = vlog2.pop %v4889
        %v4891 = vmul.f32 %v4890, 0.6931472
        %v4892 = vmul.f32 -0.5, %v4190
        %v4893 = vadd.f32 %v4892, 1.0
        %v4894 = vmul.f32 %v4893, %v4190
        %v4895 = vand.u32 2147483647, %v4190
        %vm4896 = vcmp.lt.f32.partialorder %v4895, 0.0004427343
        %v4897 = vsel %vm4896, %v4894, %v4891
        %v4898 = vadd.f32 %v4192, 1.0
        %v4899 = vlog2.pop %v4898
        %v4900 = vmul.f32 %v4899, 0.6931472
        %v4901 = vmul.f32 -0.5, %v4192
        %v4902 = vadd.f32 %v4901, 1.0
        %v4903 = vmul.f32 %v4902, %v4192
        %v4904 = vand.u32 2147483647, %v4192
        %vm4905 = vcmp.lt.f32.partialorder %v4904, 0.0004427343
        %v4906 = vsel %vm4905, %v4903, %v4900
        %v4907 = vadd.f32 %v4194, 1.0
        %v4908 = vlog2.pop %v4907
        %v4909 = vmul.f32 %v4908, 0.6931472
        %v4910 = vmul.f32 -0.5, %v4194
        %v4911 = vadd.f32 %v4910, 1.0
        %v4912 = vmul.f32 %v4911, %v4194
        %v4913 = vand.u32 2147483647, %v4194
        %vm4914 = vcmp.lt.f32.partialorder %v4913, 0.0004427343
        %v4915 = vsel %vm4914, %v4912, %v4909
        %v4916 = vadd.f32 %v4196, 1.0
        %v4917 = vlog2.pop %v4916
        %v4918 = vmul.f32 %v4917, 0.6931472
        %v4919 = vmul.f32 -0.5, %v4196
        %v4920 = vadd.f32 %v4919, 1.0
        %v4921 = vmul.f32 %v4920, %v4196
        %v4922 = vand.u32 2147483647, %v4196
        %vm4923 = vcmp.lt.f32.partialorder %v4922, 0.0004427343
        %v4924 = vsel %vm4923, %v4921, %v4918
        %v4925 = vadd.f32 %v4198, 1.0
        %v4926 = vlog2.pop %v4925
        %v4927 = vmul.f32 %v4926, 0.6931472
        %v4928 = vmul.f32 -0.5, %v4198
        %v4929 = vadd.f32 %v4928, 1.0
        %v4930 = vmul.f32 %v4929, %v4198
        %v4931 = vand.u32 2147483647, %v4198
        %vm4932 = vcmp.lt.f32.partialorder %v4931, 0.0004427343
        %v4933 = vsel %vm4932, %v4930, %v4927
        %v4934 = vadd.f32 %v4200, 1.0
        %v4935 = vlog2.pop %v4934
        %v4936 = vmul.f32 %v4935, 0.6931472
        %v4937 = vmul.f32 -0.5, %v4200
        %v4938 = vadd.f32 %v4937, 1.0
        %v4939 = vmul.f32 %v4938, %v4200
        %v4940 = vand.u32 2147483647, %v4200
        %vm4941 = vcmp.lt.f32.partialorder %v4940, 0.0004427343
        %v4942 = vsel %vm4941, %v4939, %v4936
        %v4943 = vadd.f32 %v4202, 1.0
        %v4944 = vlog2.pop %v4943
        %v4945 = vmul.f32 %v4944, 0.6931472
        %v4946 = vmul.f32 -0.5, %v4202
        %v4947 = vadd.f32 %v4946, 1.0
        %v4948 = vmul.f32 %v4947, %v4202
        %v4949 = vand.u32 2147483647, %v4202
        %vm4950 = vcmp.lt.f32.partialorder %v4949, 0.0004427343
        %v4951 = vsel %vm4950, %v4948, %v4945
        %v4952 = vadd.f32 %v4204, 1.0
        %v4953 = vlog2.pop %v4952
        %v4954 = vmul.f32 %v4953, 0.6931472
        %v4955 = vmul.f32 -0.5, %v4204
        %v4956 = vadd.f32 %v4955, 1.0
        %v4957 = vmul.f32 %v4956, %v4204
        %v4958 = vand.u32 2147483647, %v4204
        %vm4959 = vcmp.lt.f32.partialorder %v4958, 0.0004427343
        %v4960 = vsel %vm4959, %v4957, %v4954
        %v4961 = vadd.f32 %v4206, 1.0
        %v4962 = vlog2.pop %v4961
        %v4963 = vmul.f32 %v4962, 0.6931472
        %v4964 = vmul.f32 -0.5, %v4206
        %v4965 = vadd.f32 %v4964, 1.0
        %v4966 = vmul.f32 %v4965, %v4206
        %v4967 = vand.u32 2147483647, %v4206
        %vm4968 = vcmp.lt.f32.partialorder %v4967, 0.0004427343
        %v4969 = vsel %vm4968, %v4966, %v4963
        %v4970 = vadd.f32 %v4208, 1.0
        %v4971 = vlog2.pop %v4970
        %v4972 = vmul.f32 %v4971, 0.6931472
        %v4973 = vmul.f32 -0.5, %v4208
        %v4974 = vadd.f32 %v4973, 1.0
        %v4975 = vmul.f32 %v4974, %v4208
        %v4976 = vand.u32 2147483647, %v4208
        %vm4977 = vcmp.lt.f32.partialorder %v4976, 0.0004427343
        %v4978 = vsel %vm4977, %v4975, %v4972
        %v4979 = vadd.f32 %v4210, 1.0
        %v4980 = vlog2.pop %v4979
        %v4981 = vmul.f32 %v4980, 0.6931472
        %v4982 = vmul.f32 -0.5, %v4210
        %v4983 = vadd.f32 %v4982, 1.0
        %v4984 = vmul.f32 %v4983, %v4210
        %v4985 = vand.u32 2147483647, %v4210
        %vm4986 = vcmp.lt.f32.partialorder %v4985, 0.0004427343
        %v4987 = vsel %vm4986, %v4984, %v4981
        %v4988 = vadd.f32 %v4212, 1.0
        %v4989 = vlog2.pop %v4988
        %v4990 = vmul.f32 %v4989, 0.6931472
        %v4991 = vmul.f32 -0.5, %v4212
        %v4992 = vadd.f32 %v4991, 1.0
        %v4993 = vmul.f32 %v4992, %v4212
        %v4994 = vand.u32 2147483647, %v4212
        %vm4995 = vcmp.lt.f32.partialorder %v4994, 0.0004427343
        %v4996 = vsel %vm4995, %v4993, %v4990
        %v4997 = vadd.f32 %v4214, 1.0
        %v4998 = vlog2.pop %v4997
        %v4999 = vmul.f32 %v4998, 0.6931472
        %v5000 = vmul.f32 -0.5, %v4214
        %v5001 = vadd.f32 %v5000, 1.0
        %v5002 = vmul.f32 %v5001, %v4214
        %v5003 = vand.u32 2147483647, %v4214
        %vm5004 = vcmp.lt.f32.partialorder %v5003, 0.0004427343
        %v5005 = vsel %vm5004, %v5002, %v4999
        %v5006 = vadd.f32 %v4216, 1.0
        %v5007 = vlog2.pop %v5006
        %v5008 = vmul.f32 %v5007, 0.6931472
        %v5009 = vmul.f32 -0.5, %v4216
        %v5010 = vadd.f32 %v5009, 1.0
        %v5011 = vmul.f32 %v5010, %v4216
        %v5012 = vand.u32 2147483647, %v4216
        %vm5013 = vcmp.lt.f32.partialorder %v5012, 0.0004427343
        %v5014 = vsel %vm5013, %v5011, %v5008
        %v5015 = vadd.f32 %v4218, 1.0
        %v5016 = vlog2.pop %v5015
        %v5017 = vmul.f32 %v5016, 0.6931472
        %v5018 = vmul.f32 -0.5, %v4218
        %v5019 = vadd.f32 %v5018, 1.0
        %v5020 = vmul.f32 %v5019, %v4218
        %v5021 = vand.u32 2147483647, %v4218
        %vm5022 = vcmp.lt.f32.partialorder %v5021, 0.0004427343
        %v5023 = vsel %vm5022, %v5020, %v5017
        %v5024 = vadd.f32 %v4220, 1.0
        %v5025 = vlog2.pop %v5024
        %v5026 = vmul.f32 %v5025, 0.6931472
        %v5027 = vmul.f32 -0.5, %v4220
        %v5028 = vadd.f32 %v5027, 1.0
        %v5029 = vmul.f32 %v5028, %v4220
        %v5030 = vand.u32 2147483647, %v4220
        %vm5031 = vcmp.lt.f32.partialorder %v5030, 0.0004427343
        %v5032 = vsel %vm5031, %v5029, %v5026
        %v5033 = vadd.f32 %v4222, 1.0
        %v5034 = vlog2.pop %v5033
        %v5035 = vmul.f32 %v5034, 0.6931472
        %v5036 = vmul.f32 -0.5, %v4222
        %v5037 = vadd.f32 %v5036, 1.0
        %v5038 = vmul.f32 %v5037, %v4222
        %v5039 = vand.u32 2147483647, %v4222
        %vm5040 = vcmp.lt.f32.partialorder %v5039, 0.0004427343
        %v5041 = vsel %vm5040, %v5038, %v5035
        %v5042 = vadd.f32 %v4224, 1.0
        %v5043 = vlog2.pop %v5042
        %v5044 = vmul.f32 %v5043, 0.6931472
        %v5045 = vmul.f32 -0.5, %v4224
        %v5046 = vadd.f32 %v5045, 1.0
        %v5047 = vmul.f32 %v5046, %v4224
        %v5048 = vand.u32 2147483647, %v4224
        %vm5049 = vcmp.lt.f32.partialorder %v5048, 0.0004427343
        %v5050 = vsel %vm5049, %v5047, %v5044
        %v5051 = vadd.f32 %v4226, 1.0
        %v5052 = vlog2.pop %v5051
        %v5053 = vmul.f32 %v5052, 0.6931472
        %v5054 = vmul.f32 -0.5, %v4226
        %v5055 = vadd.f32 %v5054, 1.0
        %v5056 = vmul.f32 %v5055, %v4226
        %v5057 = vand.u32 2147483647, %v4226
        %vm5058 = vcmp.lt.f32.partialorder %v5057, 0.0004427343
        %v5059 = vsel %vm5058, %v5056, %v5053
        %v5060 = vadd.f32 %v4228, 1.0
        %v5061 = vlog2.pop %v5060
        %v5062 = vmul.f32 %v5061, 0.6931472
        %v5063 = vmul.f32 -0.5, %v4228
        %v5064 = vadd.f32 %v5063, 1.0
        %v5065 = vmul.f32 %v5064, %v4228
        %v5066 = vand.u32 2147483647, %v4228
        %vm5067 = vcmp.lt.f32.partialorder %v5066, 0.0004427343
        %v5068 = vsel %vm5067, %v5065, %v5062
        %v5069 = vadd.f32 %v4230, 1.0
        %v5070 = vlog2.pop %v5069
        %v5071 = vmul.f32 %v5070, 0.6931472
        %v5072 = vmul.f32 -0.5, %v4230
        %v5073 = vadd.f32 %v5072, 1.0
        %v5074 = vmul.f32 %v5073, %v4230
        %v5075 = vand.u32 2147483647, %v4230
        %vm5076 = vcmp.lt.f32.partialorder %v5075, 0.0004427343
        %v5077 = vsel %vm5076, %v5074, %v5071
        %v5078 = vadd.f32 %v4232, 1.0
        %v5079 = vlog2.pop %v5078
        %v5080 = vmul.f32 %v5079, 0.6931472
        %v5081 = vmul.f32 -0.5, %v4232
        %v5082 = vadd.f32 %v5081, 1.0
        %v5083 = vmul.f32 %v5082, %v4232
        %v5084 = vand.u32 2147483647, %v4232
        %vm5085 = vcmp.lt.f32.partialorder %v5084, 0.0004427343
        %v5086 = vsel %vm5085, %v5083, %v5080
        %v5087 = vadd.f32 %v4234, 1.0
        %v5088 = vlog2.pop %v5087
        %v5089 = vmul.f32 %v5088, 0.6931472
        %v5090 = vmul.f32 -0.5, %v4234
        %v5091 = vadd.f32 %v5090, 1.0
        %v5092 = vmul.f32 %v5091, %v4234
        %v5093 = vand.u32 2147483647, %v4234
        %vm5094 = vcmp.lt.f32.partialorder %v5093, 0.0004427343
        %v5095 = vsel %vm5094, %v5092, %v5089
        %v5096 = vadd.f32 %v4236, 1.0
        %v5097 = vlog2.pop %v5096
        %v5098 = vmul.f32 %v5097, 0.6931472
        %v5099 = vmul.f32 -0.5, %v4236
        %v5100 = vadd.f32 %v5099, 1.0
        %v5101 = vmul.f32 %v5100, %v4236
        %v5102 = vand.u32 2147483647, %v4236
        %vm5103 = vcmp.lt.f32.partialorder %v5102, 0.0004427343
        %v5104 = vsel %vm5103, %v5101, %v5098
        %v5105 = vadd.f32 %v4238, 1.0
        %v5106 = vlog2.pop %v5105
        %v5107 = vmul.f32 %v5106, 0.6931472
        %v5108 = vmul.f32 -0.5, %v4238
        %v5109 = vadd.f32 %v5108, 1.0
        %v5110 = vmul.f32 %v5109, %v4238
        %v5111 = vand.u32 2147483647, %v4238
        %vm5112 = vcmp.lt.f32.partialorder %v5111, 0.0004427343
        %v5113 = vsel %vm5112, %v5110, %v5107
        %v5114 = vadd.f32 %v4240, 1.0
        %v5115 = vlog2.pop %v5114
        %v5116 = vmul.f32 %v5115, 0.6931472
        %v5117 = vmul.f32 -0.5, %v4240
        %v5118 = vadd.f32 %v5117, 1.0
        %v5119 = vmul.f32 %v5118, %v4240
        %v5120 = vand.u32 2147483647, %v4240
        %vm5121 = vcmp.lt.f32.partialorder %v5120, 0.0004427343
        %v5122 = vsel %vm5121, %v5119, %v5116
        %v5123 = vadd.f32 %v4242, 1.0
        %v5124 = vlog2.pop %v5123
        %v5125 = vmul.f32 %v5124, 0.6931472
        %v5126 = vmul.f32 -0.5, %v4242
        %v5127 = vadd.f32 %v5126, 1.0
        %v5128 = vmul.f32 %v5127, %v4242
        %v5129 = vand.u32 2147483647, %v4242
        %vm5130 = vcmp.lt.f32.partialorder %v5129, 0.0004427343
        %v5131 = vsel %vm5130, %v5128, %v5125
        %v5132 = vadd.f32 %v4244, 1.0
        %v5133 = vlog2.pop %v5132
        %v5134 = vmul.f32 %v5133, 0.6931472
        %v5135 = vmul.f32 -0.5, %v4244
        %v5136 = vadd.f32 %v5135, 1.0
        %v5137 = vmul.f32 %v5136, %v4244
        %v5138 = vand.u32 2147483647, %v4244
        %vm5139 = vcmp.lt.f32.partialorder %v5138, 0.0004427343
        %v5140 = vsel %vm5139, %v5137, %v5134
        %v5141 = vadd.f32 %v4246, 1.0
        %v5142 = vlog2.pop %v5141
        %v5143 = vmul.f32 %v5142, 0.6931472
        %v5144 = vmul.f32 -0.5, %v4246
        %v5145 = vadd.f32 %v5144, 1.0
        %v5146 = vmul.f32 %v5145, %v4246
        %v5147 = vand.u32 2147483647, %v4246
        %vm5148 = vcmp.lt.f32.partialorder %v5147, 0.0004427343
        %v5149 = vsel %vm5148, %v5146, %v5143
        %v5150 = vadd.f32 %v4248, 1.0
        %v5151 = vlog2.pop %v5150
        %v5152 = vmul.f32 %v5151, 0.6931472
        %v5153 = vmul.f32 -0.5, %v4248
        %v5154 = vadd.f32 %v5153, 1.0
        %v5155 = vmul.f32 %v5154, %v4248
        %v5156 = vand.u32 2147483647, %v4248
        %vm5157 = vcmp.lt.f32.partialorder %v5156, 0.0004427343
        %v5158 = vsel %vm5157, %v5155, %v5152
        %v5159 = vadd.f32 %v4250, 1.0
        %v5160 = vlog2.pop %v5159
        %v5161 = vmul.f32 %v5160, 0.6931472
        %v5162 = vmul.f32 -0.5, %v4250
        %v5163 = vadd.f32 %v5162, 1.0
        %v5164 = vmul.f32 %v5163, %v4250
        %v5165 = vand.u32 2147483647, %v4250
        %vm5166 = vcmp.lt.f32.partialorder %v5165, 0.0004427343
        %v5167 = vsel %vm5166, %v5164, %v5161
        %v5168 = vadd.f32 %v4252, 1.0
        %v5169 = vlog2.pop %v5168
        %v5170 = vmul.f32 %v5169, 0.6931472
        %v5171 = vmul.f32 -0.5, %v4252
        %v5172 = vadd.f32 %v5171, 1.0
        %v5173 = vmul.f32 %v5172, %v4252
        %v5174 = vand.u32 2147483647, %v4252
        %vm5175 = vcmp.lt.f32.partialorder %v5174, 0.0004427343
        %v5176 = vsel %vm5175, %v5173, %v5170
        %v5177 = vadd.f32 %v4254, 1.0
        %v5178 = vlog2.pop %v5177
        %v5179 = vmul.f32 %v5178, 0.6931472
        %v5180 = vmul.f32 -0.5, %v4254
        %v5181 = vadd.f32 %v5180, 1.0
        %v5182 = vmul.f32 %v5181, %v4254
        %v5183 = vand.u32 2147483647, %v4254
        %vm5184 = vcmp.lt.f32.partialorder %v5183, 0.0004427343
        %v5185 = vsel %vm5184, %v5182, %v5179
        %v5186 = vadd.f32 %v4256, 1.0
        %v5187 = vlog2.pop %v5186
        %v5188 = vmul.f32 %v5187, 0.6931472
        %v5189 = vmul.f32 -0.5, %v4256
        %v5190 = vadd.f32 %v5189, 1.0
        %v5191 = vmul.f32 %v5190, %v4256
        %v5192 = vand.u32 2147483647, %v4256
        %vm5193 = vcmp.lt.f32.partialorder %v5192, 0.0004427343
        %v5194 = vsel %vm5193, %v5191, %v5188
        %v5195 = vadd.f32 %v4258, 1.0
        %v5196 = vlog2.pop %v5195
        %v5197 = vmul.f32 %v5196, 0.6931472
        %v5198 = vmul.f32 -0.5, %v4258
        %v5199 = vadd.f32 %v5198, 1.0
        %v5200 = vmul.f32 %v5199, %v4258
        %v5201 = vand.u32 2147483647, %v4258
        %vm5202 = vcmp.lt.f32.partialorder %v5201, 0.0004427343
        %v5203 = vsel %vm5202, %v5200, %v5197
        %v5204 = vadd.f32 %v4260, 1.0
        %v5205 = vlog2.pop %v5204
        %v5206 = vmul.f32 %v5205, 0.6931472
        %v5207 = vmul.f32 -0.5, %v4260
        %v5208 = vadd.f32 %v5207, 1.0
        %v5209 = vmul.f32 %v5208, %v4260
        %v5210 = vand.u32 2147483647, %v4260
        %vm5211 = vcmp.lt.f32.partialorder %v5210, 0.0004427343
        %v5212 = vsel %vm5211, %v5209, %v5206
        %v5213 = vadd.f32 %v4262, 1.0
        %v5214 = vlog2.pop %v5213
        %v5215 = vmul.f32 %v5214, 0.6931472
        %v5216 = vmul.f32 -0.5, %v4262
        %v5217 = vadd.f32 %v5216, 1.0
        %v5218 = vmul.f32 %v5217, %v4262
        %v5219 = vand.u32 2147483647, %v4262
        %vm5220 = vcmp.lt.f32.partialorder %v5219, 0.0004427343
        %v5221 = vsel %vm5220, %v5218, %v5215
        %v5222 = vadd.f32 %v4264, 1.0
        %v5223 = vlog2.pop %v5222
        %v5224 = vmul.f32 %v5223, 0.6931472
        %v5225 = vmul.f32 -0.5, %v4264
        %v5226 = vadd.f32 %v5225, 1.0
        %v5227 = vmul.f32 %v5226, %v4264
        %v5228 = vand.u32 2147483647, %v4264
        %vm5229 = vcmp.lt.f32.partialorder %v5228, 0.0004427343
        %v5230 = vsel %vm5229, %v5227, %v5224
        %v5231 = vadd.f32 %v4266, 1.0
        %v5232 = vlog2.pop %v5231
        %v5233 = vmul.f32 %v5232, 0.6931472
        %v5234 = vmul.f32 -0.5, %v4266
        %v5235 = vadd.f32 %v5234, 1.0
        %v5236 = vmul.f32 %v5235, %v4266
        %v5237 = vand.u32 2147483647, %v4266
        %vm5238 = vcmp.lt.f32.partialorder %v5237, 0.0004427343
        %v5239 = vsel %vm5238, %v5236, %v5233
        %v5240 = vadd.f32 %v4268, 1.0
        %v5241 = vlog2.pop %v5240
        %v5242 = vmul.f32 %v5241, 0.6931472
        %v5243 = vmul.f32 -0.5, %v4268
        %v5244 = vadd.f32 %v5243, 1.0
        %v5245 = vmul.f32 %v5244, %v4268
        %v5246 = vand.u32 2147483647, %v4268
        %vm5247 = vcmp.lt.f32.partialorder %v5246, 0.0004427343
        %v5248 = vsel %vm5247, %v5245, %v5242
        %v5249 = vadd.f32 %v4270, 1.0
        %v5250 = vlog2.pop %v5249
        %v5251 = vmul.f32 %v5250, 0.6931472
        %v5252 = vmul.f32 -0.5, %v4270
        %v5253 = vadd.f32 %v5252, 1.0
        %v5254 = vmul.f32 %v5253, %v4270
        %v5255 = vand.u32 2147483647, %v4270
        %vm5256 = vcmp.lt.f32.partialorder %v5255, 0.0004427343
        %v5257 = vsel %vm5256, %v5254, %v5251
        %v5258 = vadd.f32 %v4272, 1.0
        %v5259 = vlog2.pop %v5258
        %v5260 = vmul.f32 %v5259, 0.6931472
        %v5261 = vmul.f32 -0.5, %v4272
        %v5262 = vadd.f32 %v5261, 1.0
        %v5263 = vmul.f32 %v5262, %v4272
        %v5264 = vand.u32 2147483647, %v4272
        %vm5265 = vcmp.lt.f32.partialorder %v5264, 0.0004427343
        %v5266 = vsel %vm5265, %v5263, %v5260
        %v5267 = vadd.f32 %v4274, 1.0
        %v5268 = vlog2.pop %v5267
        %v5269 = vmul.f32 %v5268, 0.6931472
        %v5270 = vmul.f32 -0.5, %v4274
        %v5271 = vadd.f32 %v5270, 1.0
        %v5272 = vmul.f32 %v5271, %v4274
        %v5273 = vand.u32 2147483647, %v4274
        %vm5274 = vcmp.lt.f32.partialorder %v5273, 0.0004427343
        %v5275 = vsel %vm5274, %v5272, %v5269
        %v5276 = vadd.f32 %v4276, 1.0
        %v5277 = vlog2.pop %v5276
        %v5278 = vmul.f32 %v5277, 0.6931472
        %v5279 = vmul.f32 -0.5, %v4276
        %v5280 = vadd.f32 %v5279, 1.0
        %v5281 = vmul.f32 %v5280, %v4276
        %v5282 = vand.u32 2147483647, %v4276
        %vm5283 = vcmp.lt.f32.partialorder %v5282, 0.0004427343
        %v5284 = vsel %vm5283, %v5281, %v5278
        %v5285 = vadd.f32 %v3717, %v4285
        %v5286 = vadd.f32 %v3718, %v4294
        %v5287 = vadd.f32 %v3719, %v4303
        %v5288 = vadd.f32 %v3720, %v4312
        %v5289 = vadd.f32 %v3721, %v4321
        %v5290 = vadd.f32 %v3722, %v4330
        %v5291 = vadd.f32 %v3723, %v4339
        %v5292 = vadd.f32 %v3724, %v4348
        %v5293 = vadd.f32 %v3725, %v4357
        %v5294 = vadd.f32 %v3726, %v4366
        %v5295 = vadd.f32 %v3727, %v4375
        %v5296 = vadd.f32 %v3728, %v4384
        %v5297 = vadd.f32 %v3729, %v4393
        %v5298 = vadd.f32 %v3730, %v4402
        %v5299 = vadd.f32 %v3731, %v4411
        %v5300 = vadd.f32 %v3732, %v4420
        %v5301 = vadd.f32 %v3733, %v4429
        %v5302 = vadd.f32 %v3734, %v4438
        %v5303 = vadd.f32 %v3735, %v4447
        %v5304 = vadd.f32 %v3736, %v4456
        %v5305 = vadd.f32 %v3737, %v4465
        %v5306 = vadd.f32 %v3738, %v4474
        %v5307 = vadd.f32 %v3739, %v4483
        %v5308 = vadd.f32 %v3740, %v4492
        %v5309 = vadd.f32 %v3741, %v4501
        %v5310 = vadd.f32 %v3742, %v4510
        %v5311 = vadd.f32 %v3743, %v4519
        %v5312 = vadd.f32 %v3744, %v4528
        %v5313 = vadd.f32 %v3745, %v4537
        %v5314 = vadd.f32 %v3746, %v4546
        %v5315 = vadd.f32 %v3747, %v4555
        %v5316 = vadd.f32 %v3748, %v4564
        %v5317 = vadd.f32 %v3749, %v4573
        %v5318 = vadd.f32 %v3750, %v4582
        %v5319 = vadd.f32 %v3751, %v4591
        %v5320 = vadd.f32 %v3752, %v4600
        %v5321 = vadd.f32 %v3753, %v4609
        %v5322 = vadd.f32 %v3754, %v4618
        %v5323 = vadd.f32 %v3755, %v4627
        %v5324 = vadd.f32 %v3756, %v4636
        %v5325 = vadd.f32 %v3757, %v4645
        %v5326 = vadd.f32 %v3758, %v4654
        %v5327 = vadd.f32 %v3759, %v4663
        %v5328 = vadd.f32 %v3760, %v4672
        %v5329 = vadd.f32 %v3761, %v4681
        %v5330 = vadd.f32 %v3762, %v4690
        %v5331 = vadd.f32 %v3763, %v4699
        %v5332 = vadd.f32 %v3764, %v4708
        %v5333 = vadd.f32 %v3765, %v4717
        %v5334 = vadd.f32 %v3766, %v4726
        %v5335 = vadd.f32 %v3767, %v4735
        %v5336 = vadd.f32 %v3768, %v4744
        %v5337 = vadd.f32 %v3769, %v4753
        %v5338 = vadd.f32 %v3770, %v4762
        %v5339 = vadd.f32 %v3771, %v4771
        %v5340 = vadd.f32 %v3772, %v4780
        %v5341 = vadd.f32 %v3773, %v4789
        %v5342 = vadd.f32 %v3774, %v4798
        %v5343 = vadd.f32 %v3775, %v4807
        %v5344 = vadd.f32 %v3776, %v4816
        %v5345 = vadd.f32 %v3777, %v4825
        %v5346 = vadd.f32 %v3778, %v4834
        %v5347 = vadd.f32 %v3779, %v4843
        %v5348 = vadd.f32 %v3780, %v4852
        %v5349 = vadd.f32 %v3781, %v4861
        %v5350 = vadd.f32 %v3782, %v4870
        %v5351 = vadd.f32 %v3783, %v4879
        %v5352 = vadd.f32 %v3784, %v4888
        %v5353 = vadd.f32 %v3785, %v4897
        %v5354 = vadd.f32 %v3786, %v4906
        %v5355 = vadd.f32 %v3787, %v4915
        %v5356 = vadd.f32 %v3788, %v4924
        %v5357 = vadd.f32 %v3789, %v4933
        %v5358 = vadd.f32 %v3790, %v4942
        %v5359 = vadd.f32 %v3791, %v4951
        %v5360 = vadd.f32 %v3792, %v4960
        %v5361 = vadd.f32 %v3793, %v4969
        %v5362 = vadd.f32 %v3794, %v4978
        %v5363 = vadd.f32 %v3795, %v4987
        %v5364 = vadd.f32 %v3796, %v4996
        %v5365 = vadd.f32 %v3797, %v5005
        %v5366 = vadd.f32 %v3798, %v5014
        %v5367 = vadd.f32 %v3799, %v5023
        %v5368 = vadd.f32 %v3800, %v5032
        %v5369 = vadd.f32 %v3801, %v5041
        %v5370 = vadd.f32 %v3802, %v5050
        %v5371 = vadd.f32 %v3803, %v5059
        %v5372 = vadd.f32 %v3804, %v5068
        %v5373 = vadd.f32 %v3805, %v5077
        %v5374 = vadd.f32 %v3806, %v5086
        %v5375 = vadd.f32 %v3807, %v5095
        %v5376 = vadd.f32 %v3808, %v5104
        %v5377 = vadd.f32 %v3809, %v5113
        %v5378 = vadd.f32 %v3810, %v5122
        %v5379 = vadd.f32 %v3811, %v5131
        %v5380 = vadd.f32 %v3812, %v5140
        %v5381 = vadd.f32 %v3813, %v5149
        %v5382 = vadd.f32 %v3814, %v5158
        %v5383 = vadd.f32 %v3815, %v5167
        %v5384 = vadd.f32 %v3816, %v5176
        %v5385 = vadd.f32 %v3817, %v5185
        %v5386 = vadd.f32 %v3818, %v5194
        %v5387 = vadd.f32 %v3819, %v5203
        %v5388 = vadd.f32 %v3820, %v5212
        %v5389 = vadd.f32 %v3821, %v5221
        %v5390 = vadd.f32 %v3822, %v5230
        %v5391 = vadd.f32 %v3823, %v5239
        %v5392 = vadd.f32 %v3824, %v5248
        %v5393 = vadd.f32 %v3825, %v5257
        %v5394 = vadd.f32 %v3826, %v5266
        %v5395 = vadd.f32 %v3827, %v5275
        %v5396 = vadd.f32 %v3828, %v5284
        %v5397 = vadd.f32 %v5285, %v5286
        %v5398 = vadd.f32 %v5397, %v5287
        %v5399 = vadd.f32 %v5398, %v5288
        %v5400 = vadd.f32 %v5399, %v5289
        %v5401 = vadd.f32 %v5400, %v5290
        %v5402 = vsel %vm1153, %v5291, 0.0
        %v5403 = vadd.f32 %v5401, %v5402
        %5404 = vadd.xlane.f32.xlu0 %v5403
        %v5405 = vpop.xlane.xlu0 %5404
        %v5406 = vadd.f32 %v5292, %v5293
        %v5407 = vadd.f32 %v5406, %v5294
        %v5408 = vadd.f32 %v5407, %v5295
        %v5409 = vadd.f32 %v5408, %v5296
        %v5410 = vadd.f32 %v5409, %v5297
        %v5411 = vsel %vm1153, %v5298, 0.0
        %v5412 = vadd.f32 %v5410, %v5411
        %5413 = vadd.xlane.f32.xlu0 %v5412
        %v5414 = vpop.xlane.xlu0 %5413
        %v5415 = vadd.f32 %v5299, %v5300
        %v5416 = vadd.f32 %v5415, %v5301
        %v5417 = vadd.f32 %v5416, %v5302
        %v5418 = vadd.f32 %v5417, %v5303
        %v5419 = vadd.f32 %v5418, %v5304
        %v5420 = vsel %vm1153, %v5305, 0.0
        %v5421 = vadd.f32 %v5419, %v5420
        %5422 = vadd.xlane.f32.xlu0 %v5421
        %v5423 = vpop.xlane.xlu0 %5422
        %v5424 = vadd.f32 %v5306, %v5307
        %v5425 = vadd.f32 %v5424, %v5308
        %v5426 = vadd.f32 %v5425, %v5309
        %v5427 = vadd.f32 %v5426, %v5310
        %v5428 = vadd.f32 %v5427, %v5311
        %v5429 = vsel %vm1153, %v5312, 0.0
        %v5430 = vadd.f32 %v5428, %v5429
        %5431 = vadd.xlane.f32.xlu0 %v5430
        %v5432 = vpop.xlane.xlu0 %5431
        %v5433 = vadd.f32 %v5313, %v5314
        %v5434 = vadd.f32 %v5433, %v5315
        %v5435 = vadd.f32 %v5434, %v5316
        %v5436 = vadd.f32 %v5435, %v5317
        %v5437 = vadd.f32 %v5436, %v5318
        %v5438 = vsel %vm1153, %v5319, 0.0
        %v5439 = vadd.f32 %v5437, %v5438
        %5440 = vadd.xlane.f32.xlu0 %v5439
        %v5441 = vpop.xlane.xlu0 %5440
        %v5442 = vadd.f32 %v5320, %v5321
        %v5443 = vadd.f32 %v5442, %v5322
        %v5444 = vadd.f32 %v5443, %v5323
        %v5445 = vadd.f32 %v5444, %v5324
        %v5446 = vadd.f32 %v5445, %v5325
        %v5447 = vsel %vm1153, %v5326, 0.0
        %v5448 = vadd.f32 %v5446, %v5447
        %5449 = vadd.xlane.f32.xlu0 %v5448
        %v5450 = vpop.xlane.xlu0 %5449
        %v5451 = vadd.f32 %v5327, %v5328
        %v5452 = vadd.f32 %v5451, %v5329
        %v5453 = vadd.f32 %v5452, %v5330
        %v5454 = vadd.f32 %v5453, %v5331
        %v5455 = vadd.f32 %v5454, %v5332
        %v5456 = vsel %vm1153, %v5333, 0.0
        %v5457 = vadd.f32 %v5455, %v5456
        %5458 = vadd.xlane.f32.xlu0 %v5457
        %v5459 = vpop.xlane.xlu0 %5458
        %v5460 = vadd.f32 %v5334, %v5335
        %v5461 = vadd.f32 %v5460, %v5336
        %v5462 = vadd.f32 %v5461, %v5337
        %v5463 = vadd.f32 %v5462, %v5338
        %v5464 = vadd.f32 %v5463, %v5339
        %v5465 = vsel %vm1153, %v5340, 0.0
        %v5466 = vadd.f32 %v5464, %v5465
        %5467 = vadd.xlane.f32.xlu0 %v5466
        %v5468 = vpop.xlane.xlu0 %5467
        %v5469 = vadd.f32 %v5341, %v5342
        %v5470 = vadd.f32 %v5469, %v5343
        %v5471 = vadd.f32 %v5470, %v5344
        %v5472 = vadd.f32 %v5471, %v5345
        %v5473 = vadd.f32 %v5472, %v5346
        %v5474 = vsel %vm1153, %v5347, 0.0
        %v5475 = vadd.f32 %v5473, %v5474
        %5476 = vadd.xlane.f32.xlu0 %v5475
        %v5477 = vpop.xlane.xlu0 %5476
        %v5478 = vadd.f32 %v5348, %v5349
        %v5479 = vadd.f32 %v5478, %v5350
        %v5480 = vadd.f32 %v5479, %v5351
        %v5481 = vadd.f32 %v5480, %v5352
        %v5482 = vadd.f32 %v5481, %v5353
        %v5483 = vsel %vm1153, %v5354, 0.0
        %v5484 = vadd.f32 %v5482, %v5483
        %5485 = vadd.xlane.f32.xlu0 %v5484
        %v5486 = vpop.xlane.xlu0 %5485
        %v5487 = vadd.f32 %v5355, %v5356
        %v5488 = vadd.f32 %v5487, %v5357
        %v5489 = vadd.f32 %v5488, %v5358
        %v5490 = vadd.f32 %v5489, %v5359
        %v5491 = vadd.f32 %v5490, %v5360
        %v5492 = vsel %vm1153, %v5361, 0.0
        %v5493 = vadd.f32 %v5491, %v5492
        %5494 = vadd.xlane.f32.xlu0 %v5493
        %v5495 = vpop.xlane.xlu0 %5494
        %v5496 = vadd.f32 %v5362, %v5363
        %v5497 = vadd.f32 %v5496, %v5364
        %v5498 = vadd.f32 %v5497, %v5365
        %v5499 = vadd.f32 %v5498, %v5366
        %v5500 = vadd.f32 %v5499, %v5367
        %v5501 = vsel %vm1153, %v5368, 0.0
        %v5502 = vadd.f32 %v5500, %v5501
        %5503 = vadd.xlane.f32.xlu0 %v5502
        %v5504 = vpop.xlane.xlu0 %5503
        %v5505 = vadd.f32 %v5369, %v5370
        %v5506 = vadd.f32 %v5505, %v5371
        %v5507 = vadd.f32 %v5506, %v5372
        %v5508 = vadd.f32 %v5507, %v5373
        %v5509 = vadd.f32 %v5508, %v5374
        %v5510 = vsel %vm1153, %v5375, 0.0
        %v5511 = vadd.f32 %v5509, %v5510
        %5512 = vadd.xlane.f32.xlu0 %v5511
        %v5513 = vpop.xlane.xlu0 %5512
        %v5514 = vadd.f32 %v5376, %v5377
        %v5515 = vadd.f32 %v5514, %v5378
        %v5516 = vadd.f32 %v5515, %v5379
        %v5517 = vadd.f32 %v5516, %v5380
        %v5518 = vadd.f32 %v5517, %v5381
        %v5519 = vsel %vm1153, %v5382, 0.0
        %v5520 = vadd.f32 %v5518, %v5519
        %5521 = vadd.xlane.f32.xlu0 %v5520
        %v5522 = vpop.xlane.xlu0 %5521
        %v5523 = vadd.f32 %v5383, %v5384
        %v5524 = vadd.f32 %v5523, %v5385
        %v5525 = vadd.f32 %v5524, %v5386
        %v5526 = vadd.f32 %v5525, %v5387
        %v5527 = vadd.f32 %v5526, %v5388
        %v5528 = vsel %vm1153, %v5389, 0.0
        %v5529 = vadd.f32 %v5527, %v5528
        %5530 = vadd.xlane.f32.xlu0 %v5529
        %v5531 = vpop.xlane.xlu0 %5530
        %v5532 = vadd.f32 %v5390, %v5391
        %v5533 = vadd.f32 %v5532, %v5392
        %v5534 = vadd.f32 %v5533, %v5393
        %v5535 = vadd.f32 %v5534, %v5394
        %v5536 = vadd.f32 %v5535, %v5395
        %v5537 = vsel %vm1153, %v5396, 0.0
        %v5538 = vadd.f32 %v5536, %v5537
        %5539 = vadd.xlane.f32.xlu0 %v5538
        %v5540 = vpop.xlane.xlu0 %5539
        %v5541 = vmul.f32 %v1848, %v1848
        %v5542 = vmul.f32 %v1851, %v1851
        %v5543 = vmul.f32 %v1856, %v1856
        %v5544 = vmul.f32 %v1859, %v1859
        %v5545 = vmul.f32 %v1864, %v1864
        %v5546 = vmul.f32 %v1867, %v1867
        %v5547 = vmul.f32 %v1872, %v1872
        %v5548 = vmul.f32 %v1875, %v1875
        %v5549 = vmul.f32 %v1880, %v1880
        %v5550 = vmul.f32 %v1883, %v1883
        %v5551 = vmul.f32 %v1888, %v1888
        %v5552 = vmul.f32 %v1891, %v1891
        %v5553 = vmul.f32 %v1896, %v1896
        %v5554 = vmul.f32 %v1899, %v1899
        %v5555 = vmul.f32 %v1904, %v1904
        %v5556 = vmul.f32 %v1907, %v1907
        %5573 = vrot.lane.b32.xlu0 %v5541, 32
        %v5574 = vpop.permute.xlu0 %5573
        %5575 = vrot.lane.b32.xlu0 %v5542, 32
        %v5576 = vpop.permute.xlu0 %5575
        %5577 = vrot.lane.b32.xlu0 %v5543, 32
        %v5578 = vpop.permute.xlu0 %5577
        %5579 = vrot.lane.b32.xlu0 %v5544, 32
        %v5580 = vpop.permute.xlu0 %5579
        %5581 = vrot.lane.b32.xlu0 %v5545, 32
        %v5582 = vpop.permute.xlu0 %5581
        %5583 = vrot.lane.b32.xlu0 %v5546, 32
        %v5584 = vpop.permute.xlu0 %5583
        %5585 = vrot.lane.b32.xlu0 %v5547, 32
        %v5586 = vpop.permute.xlu0 %5585
        %5587 = vrot.lane.b32.xlu0 %v5548, 32
        %v5588 = vpop.permute.xlu0 %5587
        %5589 = vrot.lane.b32.xlu0 %v5549, 32
        %v5590 = vpop.permute.xlu0 %5589
        %5591 = vrot.lane.b32.xlu0 %v5550, 32
        %v5592 = vpop.permute.xlu0 %5591
        %5593 = vrot.lane.b32.xlu0 %v5551, 32
        %v5594 = vpop.permute.xlu0 %5593
        %5595 = vrot.lane.b32.xlu0 %v5552, 32
        %v5596 = vpop.permute.xlu0 %5595
        %5597 = vrot.lane.b32.xlu0 %v5553, 32
        %v5598 = vpop.permute.xlu0 %5597
        %5599 = vrot.lane.b32.xlu0 %v5554, 32
        %v5600 = vpop.permute.xlu0 %5599
        %5601 = vrot.lane.b32.xlu0 %v5555, 32
        %v5602 = vpop.permute.xlu0 %5601
        %5603 = vrot.lane.b32.xlu0 %v5556, 32
        %v5604 = vpop.permute.xlu0 %5603
        %v5621 = vadd.f32 %v1958, %v5574
        %v5622 = vadd.f32 %v1959, %v5576
        %v5623 = vadd.f32 %v1960, %v5578
        %v5624 = vadd.f32 %v1961, %v5580
        %v5625 = vadd.f32 %v1962, %v5582
        %v5626 = vadd.f32 %v1963, %v5584
        %v5627 = vadd.f32 %v1964, %v5586
        %v5628 = vadd.f32 %v1965, %v5588
        %v5629 = vadd.f32 %v1966, %v5590
        %v5630 = vadd.f32 %v1967, %v5592
        %v5631 = vadd.f32 %v1968, %v5594
        %v5632 = vadd.f32 %v1969, %v5596
        %v5633 = vadd.f32 %v1970, %v5598
        %v5634 = vadd.f32 %v1971, %v5600
        %v5635 = vadd.f32 %v1972, %v5602
        %v5636 = vadd.f32 %v1973, %v5604
        %v5637 = vsub.f32 %v5621, %v1848
        %v5638 = vsub.f32 %v5622, %v1851
        %v5639 = vsub.f32 %v5623, %v1856
        %v5640 = vsub.f32 %v5624, %v1859
        %v5641 = vsub.f32 %v5625, %v1864
        %v5642 = vsub.f32 %v5626, %v1867
        %v5643 = vsub.f32 %v5627, %v1872
        %v5644 = vsub.f32 %v5628, %v1875
        %v5645 = vsub.f32 %v5629, %v1880
        %v5646 = vsub.f32 %v5630, %v1883
        %v5647 = vsub.f32 %v5631, %v1888
        %v5648 = vsub.f32 %v5632, %v1891
        %v5649 = vsub.f32 %v5633, %v1896
        %v5650 = vsub.f32 %v5634, %v1899
        %v5651 = vsub.f32 %v5635, %v1904
        %v5652 = vsub.f32 %v5636, %v1907
        %v5653 = vsub.f32 %v5637, 1.0
        %v5654 = vsub.f32 %v5638, 1.0
        %v5655 = vsub.f32 %v5639, 1.0
        %v5656 = vsub.f32 %v5640, 1.0
        %v5657 = vsub.f32 %v5641, 1.0
        %v5658 = vsub.f32 %v5642, 1.0
        %v5659 = vsub.f32 %v5643, 1.0
        %v5660 = vsub.f32 %v5644, 1.0
        %v5661 = vsub.f32 %v5645, 1.0
        %v5662 = vsub.f32 %v5646, 1.0
        %v5663 = vsub.f32 %v5647, 1.0
        %v5664 = vsub.f32 %v5648, 1.0
        %v5665 = vsub.f32 %v5649, 1.0
        %v5666 = vsub.f32 %v5650, 1.0
        %v5667 = vsub.f32 %v5651, 1.0
        %v5668 = vsub.f32 %v5652, 1.0
        %5685 = vrot.lane.b32.xlu0 %v5653, 96
        %v5686 = vpop.permute.xlu0 %5685
        %5687 = vrot.lane.b32.xlu0 %v5654, 96
        %v5688 = vpop.permute.xlu0 %5687
        %5689 = vrot.lane.b32.xlu0 %v5655, 96
        %v5690 = vpop.permute.xlu0 %5689
        %5691 = vrot.lane.b32.xlu0 %v5656, 96
        %v5692 = vpop.permute.xlu0 %5691
        %5693 = vrot.lane.b32.xlu0 %v5657, 96
        %v5694 = vpop.permute.xlu0 %5693
        %5695 = vrot.lane.b32.xlu0 %v5658, 96
        %v5696 = vpop.permute.xlu0 %5695
        %5697 = vrot.lane.b32.xlu0 %v5659, 96
        %v5698 = vpop.permute.xlu0 %5697
        %5699 = vrot.lane.b32.xlu0 %v5660, 96
        %v5700 = vpop.permute.xlu0 %5699
        %5701 = vrot.lane.b32.xlu0 %v5661, 96
        %v5702 = vpop.permute.xlu0 %5701
        %5703 = vrot.lane.b32.xlu0 %v5662, 96
        %v5704 = vpop.permute.xlu0 %5703
        %5705 = vrot.lane.b32.xlu0 %v5663, 96
        %v5706 = vpop.permute.xlu0 %5705
        %5707 = vrot.lane.b32.xlu0 %v5664, 96
        %v5708 = vpop.permute.xlu0 %5707
        %5709 = vrot.lane.b32.xlu0 %v5665, 96
        %v5710 = vpop.permute.xlu0 %5709
        %5711 = vrot.lane.b32.xlu0 %v5666, 96
        %v5712 = vpop.permute.xlu0 %5711
        %5713 = vrot.lane.b32.xlu0 %v5667, 96
        %v5714 = vpop.permute.xlu0 %5713
        %5715 = vrot.lane.b32.xlu0 %v5668, 96
        %v5716 = vpop.permute.xlu0 %5715
        %v5733 = vsel %vm2130, %v5686, 0.0
        %5734 = vadd.xlane.f32.xlu0 %v5733
        %v5735 = vpop.xlane.xlu0 %5734
        %v5736 = vsel %vm2130, %v5688, 0.0
        %5737 = vadd.xlane.f32.xlu0 %v5736
        %v5738 = vpop.xlane.xlu0 %5737
        %v5739 = vsel %vm2130, %v5690, 0.0
        %5740 = vadd.xlane.f32.xlu0 %v5739
        %v5741 = vpop.xlane.xlu0 %5740
        %v5742 = vsel %vm2130, %v5692, 0.0
        %5743 = vadd.xlane.f32.xlu0 %v5742
        %v5744 = vpop.xlane.xlu0 %5743
        %v5745 = vsel %vm2130, %v5694, 0.0
        %5746 = vadd.xlane.f32.xlu0 %v5745
        %v5747 = vpop.xlane.xlu0 %5746
        %v5748 = vsel %vm2130, %v5696, 0.0
        %5749 = vadd.xlane.f32.xlu0 %v5748
        %v5750 = vpop.xlane.xlu0 %5749
        %v5751 = vsel %vm2130, %v5698, 0.0
        %5752 = vadd.xlane.f32.xlu0 %v5751
        %v5753 = vpop.xlane.xlu0 %5752
        %v5754 = vsel %vm2130, %v5700, 0.0
        %5755 = vadd.xlane.f32.xlu0 %v5754
        %v5756 = vpop.xlane.xlu0 %5755
        %v5757 = vsel %vm2130, %v5702, 0.0
        %5758 = vadd.xlane.f32.xlu0 %v5757
        %v5759 = vpop.xlane.xlu0 %5758
        %v5760 = vsel %vm2130, %v5704, 0.0
        %5761 = vadd.xlane.f32.xlu0 %v5760
        %v5762 = vpop.xlane.xlu0 %5761
        %v5763 = vsel %vm2130, %v5706, 0.0
        %5764 = vadd.xlane.f32.xlu0 %v5763
        %v5765 = vpop.xlane.xlu0 %5764
        %v5766 = vsel %vm2130, %v5708, 0.0
        %5767 = vadd.xlane.f32.xlu0 %v5766
        %v5768 = vpop.xlane.xlu0 %5767
        %v5769 = vsel %vm2130, %v5710, 0.0
        %5770 = vadd.xlane.f32.xlu0 %v5769
        %v5771 = vpop.xlane.xlu0 %5770
        %v5772 = vsel %vm2130, %v5712, 0.0
        %5773 = vadd.xlane.f32.xlu0 %v5772
        %v5774 = vpop.xlane.xlu0 %5773
        %v5775 = vsel %vm2130, %v5714, 0.0
        %5776 = vadd.xlane.f32.xlu0 %v5775
        %v5777 = vpop.xlane.xlu0 %5776
        %v5778 = vsel %vm2130, %v5716, 0.0
        %5779 = vadd.xlane.f32.xlu0 %v5778
        %v5780 = vpop.xlane.xlu0 %5779
        %v5781 = vmul.f32 %v5735, 0.5
        %v5782 = vmul.f32 %v5738, 0.5
        %v5783 = vmul.f32 %v5741, 0.5
        %v5784 = vmul.f32 %v5744, 0.5
        %v5785 = vmul.f32 %v5747, 0.5
        %v5786 = vmul.f32 %v5750, 0.5
        %v5787 = vmul.f32 %v5753, 0.5
        %v5788 = vmul.f32 %v5756, 0.5
        %v5789 = vmul.f32 %v5759, 0.5
        %v5790 = vmul.f32 %v5762, 0.5
        %v5791 = vmul.f32 %v5765, 0.5
        %v5792 = vmul.f32 %v5768, 0.5
        %v5793 = vmul.f32 %v5771, 0.5
        %v5794 = vmul.f32 %v5774, 0.5
        %v5795 = vmul.f32 %v5777, 0.5
        %v5796 = vmul.f32 %v5780, 0.5
        %v5797 = vadd.f32 %v5405, %v5781
        %v5798 = vadd.f32 %v5414, %v5782
        %v5799 = vadd.f32 %v5423, %v5783
        %v5800 = vadd.f32 %v5432, %v5784
        %v5801 = vadd.f32 %v5441, %v5785
        %v5802 = vadd.f32 %v5450, %v5786
        %v5803 = vadd.f32 %v5459, %v5787
        %v5804 = vadd.f32 %v5468, %v5788
        %v5805 = vadd.f32 %v5477, %v5789
        %v5806 = vadd.f32 %v5486, %v5790
        %v5807 = vadd.f32 %v5495, %v5791
        %v5808 = vadd.f32 %v5504, %v5792
        %v5809 = vadd.f32 %v5513, %v5793
        %v5810 = vadd.f32 %v5522, %v5794
        %v5811 = vadd.f32 %v5531, %v5795
        %v5812 = vadd.f32 %v5540, %v5796
        %v5829 = vlaneseq
        %v5830 = vand.u32 %v5829, 127
        %v5831 = vlaneseq
        %v5832 = vshrl.u32 %v5831, 7
        %v5833 = vsub.s32 %v5830, %v5832
        %v5834 = vrot.slane %v5797, %v5833
        %v5835 = vadd.s32 %v5830, 4294967288
        %v5836 = vlaneseq
        %v5837 = vshrl.u32 %v5836, 7
        %v5838 = vsub.s32 %v5835, %v5837
        %v5839 = vrot.slane %v5798, %v5838
        %vm5840 = vcmask 130112
        %v5841 = vsel %vm5840, %v5839, %v5834
        %v5842 = vadd.s32 %v5830, 4294967280
        %v5843 = vlaneseq
        %v5844 = vshrl.u32 %v5843, 7
        %v5845 = vsub.s32 %v5842, %v5844
        %v5846 = vrot.slane %v5799, %v5845
        %vm5847 = vcmask 195712
        %v5848 = vsel %vm5847, %v5846, %v5841
        %v5849 = vadd.s32 %v5830, 4294967272
        %v5850 = vlaneseq
        %v5851 = vshrl.u32 %v5850, 7
        %v5852 = vsub.s32 %v5849, %v5851
        %v5853 = vrot.slane %v5800, %v5852
        %vm5854 = vcmask 261312
        %v5855 = vsel %vm5854, %v5853, %v5848
        %v5856 = vadd.s32 %v5830, 4294967264
        %v5857 = vlaneseq
        %v5858 = vshrl.u32 %v5857, 7
        %v5859 = vsub.s32 %v5856, %v5858
        %v5860 = vrot.slane %v5801, %v5859
        %vm5861 = vcmask 326912
        %v5862 = vsel %vm5861, %v5860, %v5855
        %v5863 = vadd.s32 %v5830, 4294967256
        %v5864 = vlaneseq
        %v5865 = vshrl.u32 %v5864, 7
        %v5866 = vsub.s32 %v5863, %v5865
        %v5867 = vrot.slane %v5802, %v5866
        %vm5868 = vcmask 392512
        %v5869 = vsel %vm5868, %v5867, %v5862
        %v5870 = vadd.s32 %v5830, 4294967248
        %v5871 = vlaneseq
        %v5872 = vshrl.u32 %v5871, 7
        %v5873 = vsub.s32 %v5870, %v5872
        %v5874 = vrot.slane %v5803, %v5873
        %vm5875 = vcmask 458112
        %v5876 = vsel %vm5875, %v5874, %v5869
        %v5877 = vadd.s32 %v5830, 4294967240
        %v5878 = vlaneseq
        %v5879 = vshrl.u32 %v5878, 7
        %v5880 = vsub.s32 %v5877, %v5879
        %v5881 = vrot.slane %v5804, %v5880
        %vm5882 = vcmask 523712
        %v5883 = vsel %vm5882, %v5881, %v5876
        %v5884 = vadd.s32 %v5830, 4294967232
        %v5885 = vlaneseq
        %v5886 = vshrl.u32 %v5885, 7
        %v5887 = vsub.s32 %v5884, %v5886
        %v5888 = vrot.slane %v5805, %v5887
        %vm5889 = vcmask 589312
        %v5890 = vsel %vm5889, %v5888, %v5883
        %v5891 = vadd.s32 %v5830, 4294967224
        %v5892 = vlaneseq
        %v5893 = vshrl.u32 %v5892, 7
        %v5894 = vsub.s32 %v5891, %v5893
        %v5895 = vrot.slane %v5806, %v5894
        %vm5896 = vcmask 654912
        %v5897 = vsel %vm5896, %v5895, %v5890
        %v5898 = vadd.s32 %v5830, 4294967216
        %v5899 = vlaneseq
        %v5900 = vshrl.u32 %v5899, 7
        %v5901 = vsub.s32 %v5898, %v5900
        %v5902 = vrot.slane %v5807, %v5901
        %vm5903 = vcmask 720512
        %v5904 = vsel %vm5903, %v5902, %v5897
        %v5905 = vadd.s32 %v5830, 4294967208
        %v5906 = vlaneseq
        %v5907 = vshrl.u32 %v5906, 7
        %v5908 = vsub.s32 %v5905, %v5907
        %v5909 = vrot.slane %v5808, %v5908
        %vm5910 = vcmask 786112
        %v5911 = vsel %vm5910, %v5909, %v5904
        %v5912 = vadd.s32 %v5830, 4294967200
        %v5913 = vlaneseq
        %v5914 = vshrl.u32 %v5913, 7
        %v5915 = vsub.s32 %v5912, %v5914
        %v5916 = vrot.slane %v5809, %v5915
        %vm5917 = vcmask 851712
        %v5918 = vsel %vm5917, %v5916, %v5911
        %v5919 = vadd.s32 %v5830, 4294967192
        %v5920 = vlaneseq
        %v5921 = vshrl.u32 %v5920, 7
        %v5922 = vsub.s32 %v5919, %v5921
        %v5923 = vrot.slane %v5810, %v5922
        %vm5924 = vcmask 917312
        %v5925 = vsel %vm5924, %v5923, %v5918
        %v5926 = vadd.s32 %v5830, 4294967184
        %v5927 = vlaneseq
        %v5928 = vshrl.u32 %v5927, 7
        %v5929 = vsub.s32 %v5926, %v5928
        %v5930 = vrot.slane %v5811, %v5929
        %vm5931 = vcmask 982912
        %v5932 = vsel %vm5931, %v5930, %v5925
        %v5933 = vadd.s32 %v5830, 4294967176
        %v5934 = vlaneseq
        %v5935 = vshrl.u32 %v5934, 7
        %v5936 = vsub.s32 %v5933, %v5935
        %v5937 = vrot.slane %v5812, %v5936
        %vm5938 = vcmask 1048512
        %v5939 = vsel %vm5938, %v5937, %v5932
        %5941 = vst [vmem:[%s370] sm:$0x1] %v5939
        %s5942 = sand.u32 %s252, 1
        %s5943 = scalar_lea.sflag [#allocation3], %s5942
        %s5944 = sand.u32 %s252, 1
        %s5945 = scalar_lea.vmem [#allocation2], %s5944
        // Predicated region
        $region61: #{tpu_custom_call.1} parent=59 // pred_check
          %p5946 = pneg %p262
        $region62: #{tpu_custom_call.1} parent=59 // pred_check_branch
          %5948 = sbr.rel (%p5946) target = $region64
        $region63: #{tpu_custom_call.1} parent=59 // pred_region
          %s5950 = ssub.s32 16, 16
          %5951 = vsyncadd %s5943, %s5950
          %s5952 = smul.addr %s24, 16
          %s5953 = scalar_lea.hbm %s10, %s5952
          %s5955 = sshll.u32 %s5945, 4
          %s5956 = int_to_ptr.vmem [resolvable:$true] %s5955
          %5958 = dma.vmem_to_hbm [thread:$0]  %s5956, 16, %s5953, %s5943
        $region64: #{tpu_custom_call.1} parent=59 // pred_fallthru
          _
      $region60: #{tpu_custom_call.1} parent=5 // pred_fallthru
        _
      %p5959 = scmp.le.s32.totalorder 2, %s19
      // Predicated region
      $region65: #{tpu_custom_call.1} parent=5 // pred_check
        %p5960 = pneg %p5959
      $region66: #{tpu_custom_call.1} parent=5 // pred_check_branch
        %5962 = sbr.rel (%p5960) target = $region68
      $region67: #{tpu_custom_call.1} parent=5 // pred_region
        %s5963 = ssub.s32 %s19, 2
        // Predicated region
        $region69: #{tpu_custom_call.1} parent=67 // pred_check
          %p5964 = pneg %p268
        $region70: #{tpu_custom_call.1} parent=67 // pred_check_branch
          %5966 = sbr.rel (%p5964) target = $region72
        $region71: #{tpu_custom_call.1} parent=67 // pred_region
          %s5967 = sand.u32 %s253, 1
          %s5968 = scalar_lea.sflag [#allocation3], %s5967
          %s5969 = sand.u32 %s253, 1
          %s5970 = scalar_lea.vmem [#allocation2], %s5969
          %5971 = dma.done %s5968, 16
        $region72: #{tpu_custom_call.1} parent=67 // pred_fallthru
          _
      $region68: #{tpu_custom_call.1} parent=5 // pred_fallthru
        _
    $region6: #{tpu_custom_call.1} parent=1 // loop_footer
      %s23 = sadd.s32 1, %s19
    $region7: #{tpu_custom_call.1} parent=1 // loop_footer_branch
      %18 = sbr.rel target = $region3
    $region8: #{tpu_custom_call.1} parent=1 // loop_exit
      _
    %5972 = vsyncpa [#allocation3], 1
    %s5973 = scalar_lea.sflag [#allocation3], 1
    %5974 = vsyncpa %s5973, 1

</llo_original>
